<compile_context>
chip_gen: v5e
topology: v5e:2x2
jax: 0.10.0
libtpu: 0.0.40
codegen_flags: <defaults>
</compile_context>

<pallas_src>
import jax
import jax.numpy as jnp
from jax.experimental import pallas as pl
from jax.experimental.pallas import tpu as pltpu


def _pick_tile(dim, pref):
    """Use the preferred tile if it divides the dim, else fall back to full dim."""
    return pref if dim % pref == 0 else dim


# ---------------------------------------------------------------------------
# Reusable tiled matmul kernel:  out = X @ W^T + b
#   X : (M, K) activations (f32 or bf16; cast to bf16 at the MXU operand)
#   W : (N, K) weights in natural PyTorch layout (bf16) -> no HBM transpose
#   b : (1, N) bias (f32)
# Used for (a) the hoisted LSTM input projection over ALL timesteps and
# (b) the tied output projection x @ E^T + b_out.
# ---------------------------------------------------------------------------
def _matmul_nt_kernel(x_ref, w_ref, b_ref, o_ref, acc_ref):
    @pl.when(pl.program_id(2) == 0)
    def _():
        acc_ref[...] = jnp.zeros_like(acc_ref)

    x = x_ref[...].astype(jnp.bfloat16)                    # MXU operands in bf16
    acc_ref[...] += jax.lax.dot_general(
        x, w_ref[...],
        dimension_numbers=(((1,), (1,)), ((), ())),        # contract K of both: X @ W^T
        preferred_element_type=jnp.float32)                # f32 accumulation

    @pl.when(pl.program_id(2) == pl.num_programs(2) - 1)
    def _():
        o_ref[...] = acc_ref[...] + b_ref[...]


def matmul_nt(x, w, b, *, tm=128, tn=128, tk=128):
    M, K = x.shape
    N, K2 = w.shape
    assert K == K2
    tm = _pick_tile(M, tm)
    tn = _pick_tile(N, tn)
    tk = _pick_tile(K, tk)
    grid = (M // tm, N // tn, K // tk)
    return pl.pallas_call(
        _matmul_nt_kernel,
        out_shape=jax.ShapeDtypeStruct((M, N), jnp.float32),
        grid_spec=pltpu.PrefetchScalarGridSpec(
            num_scalar_prefetch=0,
            grid=grid,
            in_specs=[
                pl.BlockSpec((tm, tk), lambda i, j, k: (i, k)),   # X tile
                pl.BlockSpec((tn, tk), lambda i, j, k: (j, k)),   # W rows tile
                pl.BlockSpec((1, tn), lambda i, j, k: (0, j)),    # bias tile
            ],
            out_specs=pl.BlockSpec((tm, tn), lambda i, j, k: (i, j)),
            scratch_shapes=[pltpu.VMEM((tm, tn), jnp.float32)],
        ),
        compiler_params=pltpu.CompilerParams(
            dimension_semantics=("parallel", "parallel", "arbitrary"),
            vmem_limit_bytes=32 * 1024 * 1024),
    )(x, w, b.reshape(1, N))


# ---------------------------------------------------------------------------
# LSTM recurrence kernel.  Grid = (batch_tiles [parallel], time_blocks [arbitrary]).
# Inputs:
#   xg   : (S, B, 4D) f32  precomputed x @ W_ih^T + b (bias already folded in)
#   h0,c0: (B, D)     f32  initial states
#   W_hh^T: (D, 4D)   bf16 stays in HBM; DMA'd once into VMEM scratch
# Outputs: output sequence (S, B, D) f32, final h and c (B, D) f32.
# PyTorch gate order: i, f, g, o.
# ---------------------------------------------------------------------------
def _lstm_recurrence_kernel(xg_ref, h0_ref, c0_ref, whh_hbm_ref,
                            out_ref, hN_ref, cN_ref,
                            h_sc, c_sc, w_sc, w_sem):
    s = pl.program_id(1)                   # time-block index (inner, 'arbitrary')
    T = xg_ref.shape[0]                    # timesteps per grid step (static)
    D = h_sc.shape[-1]

    @pl.when(s == 0)
    def _():
        # One-time (per batch tile) weight fetch: W_hh^T single-buffered in VMEM.
        cp = pltpu.make_async_copy(whh_hbm_ref, w_sc, w_sem)
        cp.start()
        cp.wait()
        h_sc[...] = h0_ref[...]
        c_sc[...] = c0_ref[...]

    def step(t, carry):
        h, c = carry
        # Input projection was hoisted out of the recurrence; only the hidden
        # projection remains on the serialized path (bf16 MXU, f32 accumulate).
        gates = xg_ref[t] + jnp.dot(h.astype(jnp.bfloat16), w_sc[...],
                                    preferred_element_type=jnp.float32)
        i_g = jax.nn.sigmoid(gates[:, 0 * D:1 * D])      # gate order i, f, g, o
        f_g = jax.nn.sigmoid(gates[:, 1 * D:2 * D])
        g_g = jnp.tanh(gates[:, 2 * D:3 * D])
        o_g = jax.nn.sigmoid(gates[:, 3 * D:4 * D])
        c_new = f_g * c + i_g * g_g                      # elementwise math in f32
        h_new = o_g * jnp.tanh(c_new)
        out_ref[t] = h_new
        return h_new, c_new

    h, c = jax.lax.fori_loop(0, T, step, (h_sc[...], c_sc[...]), unroll=True)
    h_sc[...] = h
    c_sc[...] = c

    @pl.when(s == pl.num_programs(1) - 1)                # gate final-state stores
    def _():
        hN_ref[...] = h
        cN_ref[...] = c


def lstm_layer(xg_seq, h0, c0, whh_t, *, t_block=8):
    S, B, G = xg_seq.shape
    D = G // 4
    assert whh_t.shape == (D, 4 * D)
    T = _pick_tile(S, t_block)             # amortize per-grid-step overhead
    # Expose a leading 'parallel' batch-tile axis (uses v7x's 2nd TensorCore).
    n_btiles = 2 if (B % 16 == 0) else 1
    tb = B // n_btiles
    grid = (n_btiles, S // T)
    return pl.pallas_call(
        _lstm_recurrence_kernel,
        out_shape=(jax.ShapeDtypeStruct((S, B, D), jnp.float32),
                   jax.ShapeDtypeStruct((B, D), jnp.float32),
                   jax.ShapeDtypeStruct((B, D), jnp.float32)),
        grid_spec=pltpu.PrefetchScalarGridSpec(
            num_scalar_prefetch=0,
            grid=grid,
            in_specs=[
                pl.BlockSpec((T, tb, G), lambda b, s: (s, b, 0)),  # precomputed gates
                pl.BlockSpec((tb, D), lambda b, s: (b, 0)),        # h0 tile
                pl.BlockSpec((tb, D), lambda b, s: (b, 0)),        # c0 tile
                pl.BlockSpec(memory_space=pl.ANY),                 # W_hh^T stays in HBM
            ],
            out_specs=(
                pl.BlockSpec((T, tb, D), lambda b, s: (s, b, 0)),  # output sequence
                pl.BlockSpec((tb, D), lambda b, s: (b, 0)),        # h_final
                pl.BlockSpec((tb, D), lambda b, s: (b, 0)),        # c_final
            ),
            scratch_shapes=[
                pltpu.VMEM((tb, D), jnp.float32),                  # h carry
                pltpu.VMEM((tb, D), jnp.float32),                  # c carry
                pltpu.VMEM((D, 4 * D), whh_t.dtype),               # single weight copy
                pltpu.SemaphoreType.DMA,                           # weight-fetch sem
            ],
        ),
        compiler_params=pltpu.CompilerParams(
            dimension_semantics=("parallel", "arbitrary"),         # time stays serial
            vmem_limit_bytes=32 * 1024 * 1024),
    )(xg_seq, h0, c0, whh_t)


# ---------------------------------------------------------------------------
# Model wrapper (plain-JAX glue: embedding gather, layer loop, reshapes)
# ---------------------------------------------------------------------------
def init_params(key, n_V, d, depth):
    """Mirrors Model.init_weights: uniform(+-sqrt(3/d)) for dim>1 params, zeros
    for biases. Weights stored bf16 (MXU operands); biases stay f32."""
    val_range = (3.0 / d) ** 0.5
    keys = jax.random.split(key, 1 + 2 * depth)
    emb_weight = jax.random.uniform(keys[0], (n_V, d), jnp.float32,
                                    -val_range, val_range).astype(jnp.bfloat16)
    layers = []
    for l in range(depth):
        w_ih = jax.random.uniform(keys[1 + 2 * l], (4 * d, d), jnp.float32,
                                  -val_range, val_range).astype(jnp.bfloat16)
        w_hh = jax.random.uniform(keys[2 + 2 * l], (4 * d, d), jnp.float32,
                                  -val_range, val_range).astype(jnp.bfloat16)
        b = jnp.zeros((4 * d,), jnp.float32)       # b_ih + b_hh, zeroed by init
        # W_hh transposed ONCE at init (not per forward) for the recurrent dot.
        layers.append((w_ih, w_hh.T, b))
    b_out = jnp.zeros((n_V,), jnp.float32)         # output bias zeroed
    return emb_weight, layers, b_out


def model_forward(x_tokens, hidden, params):
    """x_tokens: (seq, batch) int32; hidden: (h0, c0) each (depth, batch, d)."""
    emb_weight, layers, b_out = params
    h0_all, c0_all = hidden
    S, B = x_tokens.shape
    D = emb_weight.shape[1]

    # Embedding lookup (XLA gather glue); nn.Dropout == identity here.
    emb = jnp.take(emb_weight, x_tokens, axis=0)            # (S, B, D) bf16

    layer_in_flat = emb.reshape(S * B, D)
    outputs = None
    h_finals, c_finals = [], []
    for l, (w_ih, w_hh_t, b) in enumerate(layers):
        # Hoisted input projection: one lane-dense (S*B, D) @ (D, 4D) matmul
        # for all timesteps instead of a tiny matmul inside the recurrence.
        xg = matmul_nt(layer_in_flat, w_ih, b).reshape(S, B, 4 * D)
        out_seq, hN, cN = lstm_layer(xg, h0_all[l], c0_all[l], w_hh_t)
        h_finals.append(hN)
        c_finals.append(cN)
        outputs = out_seq                                    # rnn_dropout == identity
        layer_in_flat = out_seq.reshape(S * B, D)

    # Tied output projection: outputs.view(-1, d) @ E^T + b_out, contracting
    # dim 1 of the embedding table directly (no E.T materialized in HBM).
    # NOTE: projects the full output sequence (same semantics as the previously
    # accepted version; the spec's outputs[-1] + .size(2) is inconsistent for
    # the LSTM branch).
    logits = matmul_nt(layer_in_flat, emb_weight, b_out)
    hidden_out = (jnp.stack(h_finals, axis=0), jnp.stack(c_finals, axis=0))
    return outputs, logits, hidden_out


if __name__ == "__main__":
    # small but lane-aligned shapes: vocab=256, d=128, depth=2, seq=16, batch=16
    n_V, d, depth, seq, batch = 256, 128, 2, 16, 16

    key = jax.random.PRNGKey(0)
    k_params, k_tokens = jax.random.split(key)

    params = init_params(k_params, n_V, d, depth)
    x_tokens = jax.random.randint(k_tokens, (seq, batch), 0, n_V, dtype=jnp.int32)

    # init_hidden: zeros (depth, batch, d) for both h and c (LSTM path)
    h0 = jnp.zeros((depth, batch, d), jnp.float32)
    c0 = jnp.zeros((depth, batch, d), jnp.float32)

    fwd = jax.jit(model_forward)
    outputs, logits, hidden = fwd(x_tokens, (h0, c0), params)
    jax.block_until_ready((outputs, logits, hidden))

    assert outputs.shape == (seq, batch, d)
    assert logits.shape == (seq * batch, n_V)
    assert hidden[0].shape == (depth, batch, d)
    assert hidden[1].shape == (depth, batch, d)
    assert bool(jnp.all(jnp.isfinite(logits)))
    print("KERNEL_OK")
</pallas_src>

<mosaic_0001>
module attributes {stable_mosaic.version = 11 : i64} {
  func.func @_matmul_nt_kernel(%arg0: i32, %arg1: i32, %arg2: i32, %arg3: memref<128x128xbf16, #tpu.memory_space<vmem>>, %arg4: memref<128x128xbf16, #tpu.memory_space<vmem>>, %arg5: memref<1x128xf32, #tpu.memory_space<vmem>>, %arg6: memref<128x128xf32, #tpu.memory_space<vmem>>, %arg7: memref<128x128xf32, #tpu.memory_space<vmem>>) attributes {dimension_semantics = [#tpu.dimension_semantics<parallel>, #tpu.dimension_semantics<parallel>, #tpu.dimension_semantics<arbitrary>], iteration_bounds = array<i64: 2, 4, 1>, scalar_prefetch = 0 : i64, scratch_operands = 1 : i64, tpu.core_type = #tpu.core_type<tc>, window_params = [{transform_indices = @transform_0, window_bounds = array<i64: 128, 128>}, {transform_indices = @transform_1, window_bounds = array<i64: 128, 128>}, {transform_indices = @transform_2, window_bounds = array<i64: 1, 128>}, {transform_indices = @transform_3, window_bounds = array<i64: 128, 128>}]} {
    %c0_i32 = arith.constant 0 : i32
    %0 = arith.cmpi eq, %arg2, %c0_i32 : i32
    %1 = arith.extui %0 : i1 to i32
    %c0_i32_0 = arith.constant 0 : i32
    %2 = arith.cmpi ne, %1, %c0_i32_0 : i32
    scf.if %2 {
      %cst_10 = arith.constant 0.000000e+00 : f32
      %12 = vector.broadcast %cst_10 : f32 to vector<128x128xf32>
      %c0_11 = arith.constant 0 : index
      %c0_12 = arith.constant 0 : index
      %13 = vector.load %arg7[%c0_11, %c0_12] : memref<128x128xf32, #tpu.memory_space<vmem>>, vector<128x128xf32>
      tpu.vector_store %arg7[%c0_11, %c0_12], %12 {strides = array<i32>} : memref<128x128xf32, #tpu.memory_space<vmem>>, vector<128x128xf32>,
    } else {
    }
    %c0 = arith.constant 0 : index
    %c0_1 = arith.constant 0 : index
    %3 = vector.load %arg3[%c0, %c0_1] : memref<128x128xbf16, #tpu.memory_space<vmem>>, vector<128x128xbf16>
    %c0_2 = arith.constant 0 : index
    %c0_3 = arith.constant 0 : index
    %4 = vector.load %arg7[%c0_2, %c0_3] : memref<128x128xf32, #tpu.memory_space<vmem>>, vector<128x128xf32>
    %c0_4 = arith.constant 0 : index
    %c0_5 = arith.constant 0 : index
    %5 = vector.load %arg4[%c0_4, %c0_5] : memref<128x128xbf16, #tpu.memory_space<vmem>>, vector<128x128xbf16>
    %cst = arith.constant dense<0.000000e+00> : vector<128x128xf32>
    %6 = tpu.matmul %3, %5, %cst {dimension_numbers = #tpu.dot_dimension_numbers<[1], [1], [0], [0], [0, 0, 1, 0], [], []>} : vector<128x128xbf16>, vector<128x128xbf16>, vector<128x128xf32> -> vector<128x128xf32>
    %7 = arith.addf %4, %6 : vector<128x128xf32>
    %c0_6 = arith.constant 0 : index
    %c0_7 = arith.constant 0 : index
    %8 = vector.load %arg7[%c0_6, %c0_7] : memref<128x128xf32, #tpu.memory_space<vmem>>, vector<128x128xf32>
    tpu.vector_store %arg7[%c0_6, %c0_7], %7 {strides = array<i32>} : memref<128x128xf32, #tpu.memory_space<vmem>>, vector<128x128xf32>,
    %c0_i32_8 = arith.constant 0 : i32
    %9 = arith.cmpi eq, %arg2, %c0_i32_8 : i32
    %10 = arith.extui %9 : i1 to i32
    %c0_i32_9 = arith.constant 0 : i32
    %11 = arith.cmpi ne, %10, %c0_i32_9 : i32
    scf.if %11 {
      %c0_10 = arith.constant 0 : index
      %c0_11 = arith.constant 0 : index
      %12 = vector.load %arg7[%c0_10, %c0_11] : memref<128x128xf32, #tpu.memory_space<vmem>>, vector<128x128xf32>
      %c0_12 = arith.constant 0 : index
      %c0_13 = arith.constant 0 : index
      %13 = vector.load %arg5[%c0_12, %c0_13] : memref<1x128xf32, #tpu.memory_space<vmem>>, vector<1x128xf32>
      %14 = vector.broadcast %13 : vector<1x128xf32> to vector<128x128xf32>
      %15 = arith.addf %12, %14 : vector<128x128xf32>
      %c0_14 = arith.constant 0 : index
      %c0_15 = arith.constant 0 : index
      %16 = vector.load %arg6[%c0_14, %c0_15] : memref<128x128xf32, #tpu.memory_space<vmem>>, vector<128x128xf32>
      tpu.vector_store %arg6[%c0_14, %c0_15], %15 {strides = array<i32>} : memref<128x128xf32, #tpu.memory_space<vmem>>, vector<128x128xf32>,
    } else {
    }
    return
  }
  func.func @transform_0(%arg0: i32, %arg1: i32, %arg2: i32) -> (i32, i32) {
    %c0_i32 = arith.constant 0 : i32
    return %arg0, %arg2 : i32, i32
  }
  func.func @transform_1(%arg0: i32, %arg1: i32, %arg2: i32) -> (i32, i32) {
    %c0_i32 = arith.constant 0 : i32
    return %arg1, %arg2 : i32, i32
  }
  func.func @transform_2(%arg0: i32, %arg1: i32, %arg2: i32) -> (i32, i32) {
    %c0_i32 = arith.constant 0 : i32
    %c0_i32_0 = arith.constant 0 : i32
    return %c0_i32, %arg1 : i32, i32
  }
  func.func @transform_3(%arg0: i32, %arg1: i32, %arg2: i32) -> (i32, i32) {
    %c0_i32 = arith.constant 0 : i32
    return %arg0, %arg1 : i32, i32
  }
}

module attributes {stable_mosaic.version = 11 : i64} {
  func.func @_matmul_nt_kernel(%arg0: i32, %arg1: i32, %arg2: i32, %arg3: memref<128x128xf32, #tpu.memory_space<vmem>>, %arg4: memref<128x128xbf16, #tpu.memory_space<vmem>>, %arg5: memref<1x128xf32, #tpu.memory_space<vmem>>, %arg6: memref<128x128xf32, #tpu.memory_space<vmem>>, %arg7: memref<128x128xf32, #tpu.memory_space<vmem>>) attributes {dimension_semantics = [#tpu.dimension_semantics<parallel>, #tpu.dimension_semantics<parallel>, #tpu.dimension_semantics<arbitrary>], iteration_bounds = array<i64: 2, 4, 1>, scalar_prefetch = 0 : i64, scratch_operands = 1 : i64, tpu.core_type = #tpu.core_type<tc>, window_params = [{transform_indices = @transform_0, window_bounds = array<i64: 128, 128>}, {transform_indices = @transform_1, window_bounds = array<i64: 128, 128>}, {transform_indices = @transform_2, window_bounds = array<i64: 1, 128>}, {transform_indices = @transform_3, window_bounds = array<i64: 128, 128>}]} {
    %c0_i32 = arith.constant 0 : i32
    %0 = arith.cmpi eq, %arg2, %c0_i32 : i32
    %1 = arith.extui %0 : i1 to i32
    %c0_i32_0 = arith.constant 0 : i32
    %2 = arith.cmpi ne, %1, %c0_i32_0 : i32
    scf.if %2 {
      %cst_10 = arith.constant 0.000000e+00 : f32
      %13 = vector.broadcast %cst_10 : f32 to vector<128x128xf32>
      %c0_11 = arith.constant 0 : index
      %c0_12 = arith.constant 0 : index
      %14 = vector.load %arg7[%c0_11, %c0_12] : memref<128x128xf32, #tpu.memory_space<vmem>>, vector<128x128xf32>
      tpu.vector_store %arg7[%c0_11, %c0_12], %13 {strides = array<i32>} : memref<128x128xf32, #tpu.memory_space<vmem>>, vector<128x128xf32>,
    } else {
    }
    %c0 = arith.constant 0 : index
    %c0_1 = arith.constant 0 : index
    %3 = vector.load %arg3[%c0, %c0_1] : memref<128x128xf32, #tpu.memory_space<vmem>>, vector<128x128xf32>
    %4 = arith.truncf %3 : vector<128x128xf32> to vector<128x128xbf16>
    %c0_2 = arith.constant 0 : index
    %c0_3 = arith.constant 0 : index
    %5 = vector.load %arg7[%c0_2, %c0_3] : memref<128x128xf32, #tpu.memory_space<vmem>>, vector<128x128xf32>
    %c0_4 = arith.constant 0 : index
    %c0_5 = arith.constant 0 : index
    %6 = vector.load %arg4[%c0_4, %c0_5] : memref<128x128xbf16, #tpu.memory_space<vmem>>, vector<128x128xbf16>
    %cst = arith.constant dense<0.000000e+00> : vector<128x128xf32>
    %7 = tpu.matmul %4, %6, %cst {dimension_numbers = #tpu.dot_dimension_numbers<[1], [1], [0], [0], [0, 0, 1, 0], [], []>} : vector<128x128xbf16>, vector<128x128xbf16>, vector<128x128xf32> -> vector<128x128xf32>
    %8 = arith.addf %5, %7 : vector<128x128xf32>
    %c0_6 = arith.constant 0 : index
    %c0_7 = arith.constant 0 : index
    %9 = vector.load %arg7[%c0_6, %c0_7] : memref<128x128xf32, #tpu.memory_space<vmem>>, vector<128x128xf32>
    tpu.vector_store %arg7[%c0_6, %c0_7], %8 {strides = array<i32>} : memref<128x128xf32, #tpu.memory_space<vmem>>, vector<128x128xf32>,
    %c0_i32_8 = arith.constant 0 : i32
    %10 = arith.cmpi eq, %arg2, %c0_i32_8 : i32
    %11 = arith.extui %10 : i1 to i32
    %c0_i32_9 = arith.constant 0 : i32
    %12 = arith.cmpi ne, %11, %c0_i32_9 : i32
    scf.if %12 {
      %c0_10 = arith.constant 0 : index
      %c0_11 = arith.constant 0 : index
      %13 = vector.load %arg7[%c0_10, %c0_11] : memref<128x128xf32, #tpu.memory_space<vmem>>, vector<128x128xf32>
      %c0_12 = arith.constant 0 : index
      %c0_13 = arith.constant 0 : index
      %14 = vector.load %arg5[%c0_12, %c0_13] : memref<1x128xf32, #tpu.memory_space<vmem>>, vector<1x128xf32>
      %15 = vector.broadcast %14 : vector<1x128xf32> to vector<128x128xf32>
      %16 = arith.addf %13, %15 : vector<128x128xf32>
      %c0_14 = arith.constant 0 : index
      %c0_15 = arith.constant 0 : index
      %17 = vector.load %arg6[%c0_14, %c0_15] : memref<128x128xf32, #tpu.memory_space<vmem>>, vector<128x128xf32>
      tpu.vector_store %arg6[%c0_14, %c0_15], %16 {strides = array<i32>} : memref<128x128xf32, #tpu.memory_space<vmem>>, vector<128x128xf32>,
    } else {
    }
    return
  }
  func.func @transform_0(%arg0: i32, %arg1: i32, %arg2: i32) -> (i32, i32) {
    %c0_i32 = arith.constant 0 : i32
    return %arg0, %arg2 : i32, i32
  }
  func.func @transform_1(%arg0: i32, %arg1: i32, %arg2: i32) -> (i32, i32) {
    %c0_i32 = arith.constant 0 : i32
    return %arg1, %arg2 : i32, i32
  }
  func.func @transform_2(%arg0: i32, %arg1: i32, %arg2: i32) -> (i32, i32) {
    %c0_i32 = arith.constant 0 : i32
    %c0_i32_0 = arith.constant 0 : i32
    return %c0_i32, %arg1 : i32, i32
  }
  func.func @transform_3(%arg0: i32, %arg1: i32, %arg2: i32) -> (i32, i32) {
    %c0_i32 = arith.constant 0 : i32
    return %arg0, %arg1 : i32, i32
  }
}

module attributes {stable_mosaic.version = 11 : i64} {
  func.func @_lstm_recurrence_kernel(%arg0: i32, %arg1: i32, %arg2: memref<8x8x512xf32, #tpu.memory_space<vmem>>, %arg3: memref<8x128xf32, #tpu.memory_space<vmem>>, %arg4: memref<8x128xf32, #tpu.memory_space<vmem>>, %arg5: memref<128x512xbf16, #tpu.memory_space<any>>, %arg6: memref<8x8x128xf32, #tpu.memory_space<vmem>>, %arg7: memref<8x128xf32, #tpu.memory_space<vmem>>, %arg8: memref<8x128xf32, #tpu.memory_space<vmem>>, %arg9: memref<8x128xf32, #tpu.memory_space<vmem>>, %arg10: memref<8x128xf32, #tpu.memory_space<vmem>>, %arg11: memref<128x512xbf16, #tpu.memory_space<vmem>>, %arg12: memref<!tpu.dma_semaphore, #tpu.memory_space<semaphore_mem>>) attributes {dimension_semantics = [#tpu.dimension_semantics<parallel>, #tpu.dimension_semantics<arbitrary>], iteration_bounds = array<i64: 2, 2>, scalar_prefetch = 0 : i64, scratch_operands = 4 : i64, tpu.core_type = #tpu.core_type<tc>, window_params = [{transform_indices = @transform_0, window_bounds = array<i64: 8, 8, 512>}, {transform_indices = @transform_1, window_bounds = array<i64: 8, 128>}, {transform_indices = @transform_2, window_bounds = array<i64: 8, 128>}, {}, {transform_indices = @transform_4, window_bounds = array<i64: 8, 8, 128>}, {transform_indices = @transform_5, window_bounds = array<i64: 8, 128>}, {transform_indices = @transform_6, window_bounds = array<i64: 8, 128>}]} {
    %c0_i32 = arith.constant 0 : i32
    %0 = arith.cmpi eq, %arg1, %c0_i32 : i32
    %1 = arith.extui %0 : i1 to i32
    %c0_i32_0 = arith.constant 0 : i32
    %2 = arith.cmpi ne, %1, %c0_i32_0 : i32
    scf.if %2 {
      tpu.enqueue_dma source(%arg5 : memref<128x512xbf16, #tpu.memory_space<any>>) target(%arg11 : memref<128x512xbf16, #tpu.memory_space<vmem>>) target_semaphore(%arg12 : memref<!tpu.dma_semaphore, #tpu.memory_space<semaphore_mem>>)
      tpu.wait_dma2 semaphore(%arg12 : memref<!tpu.dma_semaphore, #tpu.memory_space<semaphore_mem>>) src(%arg5 : memref<128x512xbf16, #tpu.memory_space<any>>) dst(%arg11 : memref<128x512xbf16, #tpu.memory_space<vmem>>)
      %c0_90 = arith.constant 0 : index
      %c0_91 = arith.constant 0 : index
      %298 = vector.load %arg3[%c0_90, %c0_91] : memref<8x128xf32, #tpu.memory_space<vmem>>, vector<8x128xf32>
      %c0_92 = arith.constant 0 : index
      %c0_93 = arith.constant 0 : index
      %299 = vector.load %arg9[%c0_92, %c0_93] : memref<8x128xf32, #tpu.memory_space<vmem>>, vector<8x128xf32>
      tpu.vector_store %arg9[%c0_92, %c0_93], %298 {strides = array<i32>} : memref<8x128xf32, #tpu.memory_space<vmem>>, vector<8x128xf32>,
      %c0_94 = arith.constant 0 : index
      %c0_95 = arith.constant 0 : index
      %300 = vector.load %arg4[%c0_94, %c0_95] : memref<8x128xf32, #tpu.memory_space<vmem>>, vector<8x128xf32>
      %c0_96 = arith.constant 0 : index
      %c0_97 = arith.constant 0 : index
      %301 = vector.load %arg10[%c0_96, %c0_97] : memref<8x128xf32, #tpu.memory_space<vmem>>, vector<8x128xf32>
      tpu.vector_store %arg10[%c0_96, %c0_97], %300 {strides = array<i32>} : memref<8x128xf32, #tpu.memory_space<vmem>>, vector<8x128xf32>,
    } else {
    }
    %c0 = arith.constant 0 : index
    %c0_1 = arith.constant 0 : index
    %3 = vector.load %arg9[%c0, %c0_1] : memref<8x128xf32, #tpu.memory_space<vmem>>, vector<8x128xf32>
    %c0_2 = arith.constant 0 : index
    %c0_3 = arith.constant 0 : index
    %4 = vector.load %arg10[%c0_2, %c0_3] : memref<8x128xf32, #tpu.memory_space<vmem>>, vector<8x128xf32>
    %c0_i32_4 = arith.constant 0 : i32
    %5 = arith.index_cast %c0_i32_4 : i32 to index
    %c0_5 = arith.constant 0 : index
    %c0_6 = arith.constant 0 : index
    %6 = vector.load %arg2[%5, %c0_5, %c0_6] : memref<8x8x512xf32, #tpu.memory_space<vmem>>, vector<1x8x512xf32>
    %7 = vector.shape_cast %6 : vector<1x8x512xf32> to vector<8x512xf32>
    %8 = arith.truncf %3 : vector<8x128xf32> to vector<8x128xbf16>
    %c0_7 = arith.constant 0 : index
    %c0_8 = arith.constant 0 : index
    %9 = vector.load %arg11[%c0_7, %c0_8] : memref<128x512xbf16, #tpu.memory_space<vmem>>, vector<128x512xbf16>
    %cst = arith.constant dense<0.000000e+00> : vector<8x512xf32>
    %10 = tpu.matmul %8, %9, %cst {dimension_numbers = #tpu.dot_dimension_numbers<[1], [0], [0], [1], [0, 0, 1, 1], [], []>} : vector<8x128xbf16>, vector<128x512xbf16>, vector<8x512xf32> -> vector<8x512xf32>
    %11 = arith.addf %7, %10 : vector<8x512xf32>
    %12 = vector.extract_strided_slice %11 {offsets = [0, 0], sizes = [8, 128], strides = [1, 1]} : vector<8x512xf32> to vector<8x128xf32>
    %13 = arith.negf %12 : vector<8x128xf32>
    %14 = math.exp %13 : vector<8x128xf32>
    %cst_9 = arith.constant 1.000000e+00 : f32
    %15 = vector.broadcast %cst_9 : f32 to vector<8x128xf32>
    %16 = arith.addf %15, %14 : vector<8x128xf32>
    %17 = arith.divf %15, %16 : vector<8x128xf32>
    %18 = vector.extract_strided_slice %11 {offsets = [0, 128], sizes = [8, 128], strides = [1, 1]} : vector<8x512xf32> to vector<8x128xf32>
    %19 = arith.negf %18 : vector<8x128xf32>
    %20 = math.exp %19 : vector<8x128xf32>
    %cst_10 = arith.constant 1.000000e+00 : f32
    %21 = vector.broadcast %cst_10 : f32 to vector<8x128xf32>
    %22 = arith.addf %21, %20 : vector<8x128xf32>
    %23 = arith.divf %21, %22 : vector<8x128xf32>
    %24 = vector.extract_strided_slice %11 {offsets = [0, 256], sizes = [8, 128], strides = [1, 1]} : vector<8x512xf32> to vector<8x128xf32>
    %25 = math.tanh %24 : vector<8x128xf32>
    %26 = vector.extract_strided_slice %11 {offsets = [0, 384], sizes = [8, 128], strides = [1, 1]} : vector<8x512xf32> to vector<8x128xf32>
    %27 = arith.negf %26 : vector<8x128xf32>
    %28 = math.exp %27 : vector<8x128xf32>
    %cst_11 = arith.constant 1.000000e+00 : f32
    %29 = vector.broadcast %cst_11 : f32 to vector<8x128xf32>
    %30 = arith.addf %29, %28 : vector<8x128xf32>
    %31 = arith.divf %29, %30 : vector<8x128xf32>
    %32 = arith.mulf %23, %4 : vector<8x128xf32>
    %33 = arith.mulf %17, %25 : vector<8x128xf32>
    %34 = arith.addf %32, %33 : vector<8x128xf32>
    %35 = math.tanh %34 : vector<8x128xf32>
    %36 = arith.mulf %31, %35 : vector<8x128xf32>
    %37 = arith.index_cast %c0_i32_4 : i32 to index
    %c0_12 = arith.constant 0 : index
    %c0_13 = arith.constant 0 : index
    %38 = vector.load %arg6[%37, %c0_12, %c0_13] : memref<8x8x128xf32, #tpu.memory_space<vmem>>, vector<1x8x128xf32>
    %39 = vector.shape_cast %38 : vector<1x8x128xf32> to vector<8x128xf32>
    %40 = vector.shape_cast %36 : vector<8x128xf32> to vector<1x8x128xf32>
    tpu.vector_store %arg6[%37, %c0_12, %c0_13], %40 {strides = array<i32>} : memref<8x8x128xf32, #tpu.memory_space<vmem>>, vector<1x8x128xf32>,
    %c1_i32 = arith.constant 1 : i32
    %41 = arith.index_cast %c1_i32 : i32 to index
    %c0_14 = arith.constant 0 : index
    %c0_15 = arith.constant 0 : index
    %42 = vector.load %arg2[%41, %c0_14, %c0_15] : memref<8x8x512xf32, #tpu.memory_space<vmem>>, vector<1x8x512xf32>
    %43 = vector.shape_cast %42 : vector<1x8x512xf32> to vector<8x512xf32>
    %44 = arith.truncf %36 : vector<8x128xf32> to vector<8x128xbf16>
    %c0_16 = arith.constant 0 : index
    %c0_17 = arith.constant 0 : index
    %45 = vector.load %arg11[%c0_16, %c0_17] : memref<128x512xbf16, #tpu.memory_space<vmem>>, vector<128x512xbf16>
    %cst_18 = arith.constant dense<0.000000e+00> : vector<8x512xf32>
    %46 = tpu.matmul %44, %45, %cst_18 {dimension_numbers = #tpu.dot_dimension_numbers<[1], [0], [0], [1], [0, 0, 1, 1], [], []>} : vector<8x128xbf16>, vector<128x512xbf16>, vector<8x512xf32> -> vector<8x512xf32>
    %47 = arith.addf %43, %46 : vector<8x512xf32>
    %48 = vector.extract_strided_slice %47 {offsets = [0, 0], sizes = [8, 128], strides = [1, 1]} : vector<8x512xf32> to vector<8x128xf32>
    %49 = arith.negf %48 : vector<8x128xf32>
    %50 = math.exp %49 : vector<8x128xf32>
    %cst_19 = arith.constant 1.000000e+00 : f32
    %51 = vector.broadcast %cst_19 : f32 to vector<8x128xf32>
    %52 = arith.addf %51, %50 : vector<8x128xf32>
    %53 = arith.divf %51, %52 : vector<8x128xf32>
    %54 = vector.extract_strided_slice %47 {offsets = [0, 128], sizes = [8, 128], strides = [1, 1]} : vector<8x512xf32> to vector<8x128xf32>
    %55 = arith.negf %54 : vector<8x128xf32>
    %56 = math.exp %55 : vector<8x128xf32>
    %cst_20 = arith.constant 1.000000e+00 : f32
    %57 = vector.broadcast %cst_20 : f32 to vector<8x128xf32>
    %58 = arith.addf %57, %56 : vector<8x128xf32>
    %59 = arith.divf %57, %58 : vector<8x128xf32>
    %60 = vector.extract_strided_slice %47 {offsets = [0, 256], sizes = [8, 128], strides = [1, 1]} : vector<8x512xf32> to vector<8x128xf32>
    %61 = math.tanh %60 : vector<8x128xf32>
    %62 = vector.extract_strided_slice %47 {offsets = [0, 384], sizes = [8, 128], strides = [1, 1]} : vector<8x512xf32> to vector<8x128xf32>
    %63 = arith.negf %62 : vector<8x128xf32>
    %64 = math.exp %63 : vector<8x128xf32>
    %cst_21 = arith.constant 1.000000e+00 : f32
    %65 = vector.broadcast %cst_21 : f32 to vector<8x128xf32>
    %66 = arith.addf %65, %64 : vector<8x128xf32>
    %67 = arith.divf %65, %66 : vector<8x128xf32>
    %68 = arith.mulf %59, %34 : vector<8x128xf32>
    %69 = arith.mulf %53, %61 : vector<8x128xf32>
    %70 = arith.addf %68, %69 : vector<8x128xf32>
    %71 = math.tanh %70 : vector<8x128xf32>
    %72 = arith.mulf %67, %71 : vector<8x128xf32>
    %73 = arith.index_cast %c1_i32 : i32 to index
    %c0_22 = arith.constant 0 : index
    %c0_23 = arith.constant 0 : index
    %74 = vector.load %arg6[%73, %c0_22, %c0_23] : memref<8x8x128xf32, #tpu.memory_space<vmem>>, vector<1x8x128xf32>
    %75 = vector.shape_cast %74 : vector<1x8x128xf32> to vector<8x128xf32>
    %76 = vector.shape_cast %72 : vector<8x128xf32> to vector<1x8x128xf32>
    tpu.vector_store %arg6[%73, %c0_22, %c0_23], %76 {strides = array<i32>} : memref<8x8x128xf32, #tpu.memory_space<vmem>>, vector<1x8x128xf32>,
    %c2_i32 = arith.constant 2 : i32
    %77 = arith.index_cast %c2_i32 : i32 to index
    %c0_24 = arith.constant 0 : index
    %c0_25 = arith.constant 0 : index
    %78 = vector.load %arg2[%77, %c0_24, %c0_25] : memref<8x8x512xf32, #tpu.memory_space<vmem>>, vector<1x8x512xf32>
    %79 = vector.shape_cast %78 : vector<1x8x512xf32> to vector<8x512xf32>
    %80 = arith.truncf %72 : vector<8x128xf32> to vector<8x128xbf16>
    %c0_26 = arith.constant 0 : index
    %c0_27 = arith.constant 0 : index
    %81 = vector.load %arg11[%c0_26, %c0_27] : memref<128x512xbf16, #tpu.memory_space<vmem>>, vector<128x512xbf16>
    %cst_28 = arith.constant dense<0.000000e+00> : vector<8x512xf32>
    %82 = tpu.matmul %80, %81, %cst_28 {dimension_numbers = #tpu.dot_dimension_numbers<[1], [0], [0], [1], [0, 0, 1, 1], [], []>} : vector<8x128xbf16>, vector<128x512xbf16>, vector<8x512xf32> -> vector<8x512xf32>
    %83 = arith.addf %79, %82 : vector<8x512xf32>
    %84 = vector.extract_strided_slice %83 {offsets = [0, 0], sizes = [8, 128], strides = [1, 1]} : vector<8x512xf32> to vector<8x128xf32>
    %85 = arith.negf %84 : vector<8x128xf32>
    %86 = math.exp %85 : vector<8x128xf32>
    %cst_29 = arith.constant 1.000000e+00 : f32
    %87 = vector.broadcast %cst_29 : f32 to vector<8x128xf32>
    %88 = arith.addf %87, %86 : vector<8x128xf32>
    %89 = arith.divf %87, %88 : vector<8x128xf32>
    %90 = vector.extract_strided_slice %83 {offsets = [0, 128], sizes = [8, 128], strides = [1, 1]} : vector<8x512xf32> to vector<8x128xf32>
    %91 = arith.negf %90 : vector<8x128xf32>
    %92 = math.exp %91 : vector<8x128xf32>
    %cst_30 = arith.constant 1.000000e+00 : f32
    %93 = vector.broadcast %cst_30 : f32 to vector<8x128xf32>
    %94 = arith.addf %93, %92 : vector<8x128xf32>
    %95 = arith.divf %93, %94 : vector<8x128xf32>
    %96 = vector.extract_strided_slice %83 {offsets = [0, 256], sizes = [8, 128], strides = [1, 1]} : vector<8x512xf32> to vector<8x128xf32>
    %97 = math.tanh %96 : vector<8x128xf32>
    %98 = vector.extract_strided_slice %83 {offsets = [0, 384], sizes = [8, 128], strides = [1, 1]} : vector<8x512xf32> to vector<8x128xf32>
    %99 = arith.negf %98 : vector<8x128xf32>
    %100 = math.exp %99 : vector<8x128xf32>
    %cst_31 = arith.constant 1.000000e+00 : f32
    %101 = vector.broadcast %cst_31 : f32 to vector<8x128xf32>
    %102 = arith.addf %101, %100 : vector<8x128xf32>
    %103 = arith.divf %101, %102 : vector<8x128xf32>
    %104 = arith.mulf %95, %70 : vector<8x128xf32>
    %105 = arith.mulf %89, %97 : vector<8x128xf32>
    %106 = arith.addf %104, %105 : vector<8x128xf32>
    %107 = math.tanh %106 : vector<8x128xf32>
    %108 = arith.mulf %103, %107 : vector<8x128xf32>
    %109 = arith.index_cast %c2_i32 : i32 to index
    %c0_32 = arith.constant 0 : index
    %c0_33 = arith.constant 0 : index
    %110 = vector.load %arg6[%109, %c0_32, %c0_33] : memref<8x8x128xf32, #tpu.memory_space<vmem>>, vector<1x8x128xf32>
    %111 = vector.shape_cast %110 : vector<1x8x128xf32> to vector<8x128xf32>
    %112 = vector.shape_cast %108 : vector<8x128xf32> to vector<1x8x128xf32>
    tpu.vector_store %arg6[%109, %c0_32, %c0_33], %112 {strides = array<i32>} : memref<8x8x128xf32, #tpu.memory_space<vmem>>, vector<1x8x128xf32>,
    %c3_i32 = arith.constant 3 : i32
    %113 = arith.index_cast %c3_i32 : i32 to index
    %c0_34 = arith.constant 0 : index
    %c0_35 = arith.constant 0 : index
    %114 = vector.load %arg2[%113, %c0_34, %c0_35] : memref<8x8x512xf32, #tpu.memory_space<vmem>>, vector<1x8x512xf32>
    %115 = vector.shape_cast %114 : vector<1x8x512xf32> to vector<8x512xf32>
    %116 = arith.truncf %108 : vector<8x128xf32> to vector<8x128xbf16>
    %c0_36 = arith.constant 0 : index
    %c0_37 = arith.constant 0 : index
    %117 = vector.load %arg11[%c0_36, %c0_37] : memref<128x512xbf16, #tpu.memory_space<vmem>>, vector<128x512xbf16>
    %cst_38 = arith.constant dense<0.000000e+00> : vector<8x512xf32>
    %118 = tpu.matmul %116, %117, %cst_38 {dimension_numbers = #tpu.dot_dimension_numbers<[1], [0], [0], [1], [0, 0, 1, 1], [], []>} : vector<8x128xbf16>, vector<128x512xbf16>, vector<8x512xf32> -> vector<8x512xf32>
    %119 = arith.addf %115, %118 : vector<8x512xf32>
    %120 = vector.extract_strided_slice %119 {offsets = [0, 0], sizes = [8, 128], strides = [1, 1]} : vector<8x512xf32> to vector<8x128xf32>
    %121 = arith.negf %120 : vector<8x128xf32>
    %122 = math.exp %121 : vector<8x128xf32>
    %cst_39 = arith.constant 1.000000e+00 : f32
    %123 = vector.broadcast %cst_39 : f32 to vector<8x128xf32>
    %124 = arith.addf %123, %122 : vector<8x128xf32>
    %125 = arith.divf %123, %124 : vector<8x128xf32>
    %126 = vector.extract_strided_slice %119 {offsets = [0, 128], sizes = [8, 128], strides = [1, 1]} : vector<8x512xf32> to vector<8x128xf32>
    %127 = arith.negf %126 : vector<8x128xf32>
    %128 = math.exp %127 : vector<8x128xf32>
    %cst_40 = arith.constant 1.000000e+00 : f32
    %129 = vector.broadcast %cst_40 : f32 to vector<8x128xf32>
    %130 = arith.addf %129, %128 : vector<8x128xf32>
    %131 = arith.divf %129, %130 : vector<8x128xf32>
    %132 = vector.extract_strided_slice %119 {offsets = [0, 256], sizes = [8, 128], strides = [1, 1]} : vector<8x512xf32> to vector<8x128xf32>
    %133 = math.tanh %132 : vector<8x128xf32>
    %134 = vector.extract_strided_slice %119 {offsets = [0, 384], sizes = [8, 128], strides = [1, 1]} : vector<8x512xf32> to vector<8x128xf32>
    %135 = arith.negf %134 : vector<8x128xf32>
    %136 = math.exp %135 : vector<8x128xf32>
    %cst_41 = arith.constant 1.000000e+00 : f32
    %137 = vector.broadcast %cst_41 : f32 to vector<8x128xf32>
    %138 = arith.addf %137, %136 : vector<8x128xf32>
    %139 = arith.divf %137, %138 : vector<8x128xf32>
    %140 = arith.mulf %131, %106 : vector<8x128xf32>
    %141 = arith.mulf %125, %133 : vector<8x128xf32>
    %142 = arith.addf %140, %141 : vector<8x128xf32>
    %143 = math.tanh %142 : vector<8x128xf32>
    %144 = arith.mulf %139, %143 : vector<8x128xf32>
    %145 = arith.index_cast %c3_i32 : i32 to index
    %c0_42 = arith.constant 0 : index
    %c0_43 = arith.constant 0 : index
    %146 = vector.load %arg6[%145, %c0_42, %c0_43] : memref<8x8x128xf32, #tpu.memory_space<vmem>>, vector<1x8x128xf32>
    %147 = vector.shape_cast %146 : vector<1x8x128xf32> to vector<8x128xf32>
    %148 = vector.shape_cast %144 : vector<8x128xf32> to vector<1x8x128xf32>
    tpu.vector_store %arg6[%145, %c0_42, %c0_43], %148 {strides = array<i32>} : memref<8x8x128xf32, #tpu.memory_space<vmem>>, vector<1x8x128xf32>,
    %c4_i32 = arith.constant 4 : i32
    %149 = arith.index_cast %c4_i32 : i32 to index
    %c0_44 = arith.constant 0 : index
    %c0_45 = arith.constant 0 : index
    %150 = vector.load %arg2[%149, %c0_44, %c0_45] : memref<8x8x512xf32, #tpu.memory_space<vmem>>, vector<1x8x512xf32>
    %151 = vector.shape_cast %150 : vector<1x8x512xf32> to vector<8x512xf32>
    %152 = arith.truncf %144 : vector<8x128xf32> to vector<8x128xbf16>
    %c0_46 = arith.constant 0 : index
    %c0_47 = arith.constant 0 : index
    %153 = vector.load %arg11[%c0_46, %c0_47] : memref<128x512xbf16, #tpu.memory_space<vmem>>, vector<128x512xbf16>
    %cst_48 = arith.constant dense<0.000000e+00> : vector<8x512xf32>
    %154 = tpu.matmul %152, %153, %cst_48 {dimension_numbers = #tpu.dot_dimension_numbers<[1], [0], [0], [1], [0, 0, 1, 1], [], []>} : vector<8x128xbf16>, vector<128x512xbf16>, vector<8x512xf32> -> vector<8x512xf32>
    %155 = arith.addf %151, %154 : vector<8x512xf32>
    %156 = vector.extract_strided_slice %155 {offsets = [0, 0], sizes = [8, 128], strides = [1, 1]} : vector<8x512xf32> to vector<8x128xf32>
    %157 = arith.negf %156 : vector<8x128xf32>
    %158 = math.exp %157 : vector<8x128xf32>
    %cst_49 = arith.constant 1.000000e+00 : f32
    %159 = vector.broadcast %cst_49 : f32 to vector<8x128xf32>
    %160 = arith.addf %159, %158 : vector<8x128xf32>
    %161 = arith.divf %159, %160 : vector<8x128xf32>
    %162 = vector.extract_strided_slice %155 {offsets = [0, 128], sizes = [8, 128], strides = [1, 1]} : vector<8x512xf32> to vector<8x128xf32>
    %163 = arith.negf %162 : vector<8x128xf32>
    %164 = math.exp %163 : vector<8x128xf32>
    %cst_50 = arith.constant 1.000000e+00 : f32
    %165 = vector.broadcast %cst_50 : f32 to vector<8x128xf32>
    %166 = arith.addf %165, %164 : vector<8x128xf32>
    %167 = arith.divf %165, %166 : vector<8x128xf32>
    %168 = vector.extract_strided_slice %155 {offsets = [0, 256], sizes = [8, 128], strides = [1, 1]} : vector<8x512xf32> to vector<8x128xf32>
    %169 = math.tanh %168 : vector<8x128xf32>
    %170 = vector.extract_strided_slice %155 {offsets = [0, 384], sizes = [8, 128], strides = [1, 1]} : vector<8x512xf32> to vector<8x128xf32>
    %171 = arith.negf %170 : vector<8x128xf32>
    %172 = math.exp %171 : vector<8x128xf32>
    %cst_51 = arith.constant 1.000000e+00 : f32
    %173 = vector.broadcast %cst_51 : f32 to vector<8x128xf32>
    %174 = arith.addf %173, %172 : vector<8x128xf32>
    %175 = arith.divf %173, %174 : vector<8x128xf32>
    %176 = arith.mulf %167, %142 : vector<8x128xf32>
    %177 = arith.mulf %161, %169 : vector<8x128xf32>
    %178 = arith.addf %176, %177 : vector<8x128xf32>
    %179 = math.tanh %178 : vector<8x128xf32>
    %180 = arith.mulf %175, %179 : vector<8x128xf32>
    %181 = arith.index_cast %c4_i32 : i32 to index
    %c0_52 = arith.constant 0 : index
    %c0_53 = arith.constant 0 : index
    %182 = vector.load %arg6[%181, %c0_52, %c0_53] : memref<8x8x128xf32, #tpu.memory_space<vmem>>, vector<1x8x128xf32>
    %183 = vector.shape_cast %182 : vector<1x8x128xf32> to vector<8x128xf32>
    %184 = vector.shape_cast %180 : vector<8x128xf32> to vector<1x8x128xf32>
    tpu.vector_store %arg6[%181, %c0_52, %c0_53], %184 {strides = array<i32>} : memref<8x8x128xf32, #tpu.memory_space<vmem>>, vector<1x8x128xf32>,
    %c5_i32 = arith.constant 5 : i32
    %185 = arith.index_cast %c5_i32 : i32 to index
    %c0_54 = arith.constant 0 : index
    %c0_55 = arith.constant 0 : index
    %186 = vector.load %arg2[%185, %c0_54, %c0_55] : memref<8x8x512xf32, #tpu.memory_space<vmem>>, vector<1x8x512xf32>
    %187 = vector.shape_cast %186 : vector<1x8x512xf32> to vector<8x512xf32>
    %188 = arith.truncf %180 : vector<8x128xf32> to vector<8x128xbf16>
    %c0_56 = arith.constant 0 : index
    %c0_57 = arith.constant 0 : index
    %189 = vector.load %arg11[%c0_56, %c0_57] : memref<128x512xbf16, #tpu.memory_space<vmem>>, vector<128x512xbf16>
    %cst_58 = arith.constant dense<0.000000e+00> : vector<8x512xf32>
    %190 = tpu.matmul %188, %189, %cst_58 {dimension_numbers = #tpu.dot_dimension_numbers<[1], [0], [0], [1], [0, 0, 1, 1], [], []>} : vector<8x128xbf16>, vector<128x512xbf16>, vector<8x512xf32> -> vector<8x512xf32>
    %191 = arith.addf %187, %190 : vector<8x512xf32>
    %192 = vector.extract_strided_slice %191 {offsets = [0, 0], sizes = [8, 128], strides = [1, 1]} : vector<8x512xf32> to vector<8x128xf32>
    %193 = arith.negf %192 : vector<8x128xf32>
    %194 = math.exp %193 : vector<8x128xf32>
    %cst_59 = arith.constant 1.000000e+00 : f32
    %195 = vector.broadcast %cst_59 : f32 to vector<8x128xf32>
    %196 = arith.addf %195, %194 : vector<8x128xf32>
    %197 = arith.divf %195, %196 : vector<8x128xf32>
    %198 = vector.extract_strided_slice %191 {offsets = [0, 128], sizes = [8, 128], strides = [1, 1]} : vector<8x512xf32> to vector<8x128xf32>
    %199 = arith.negf %198 : vector<8x128xf32>
    %200 = math.exp %199 : vector<8x128xf32>
    %cst_60 = arith.constant 1.000000e+00 : f32
    %201 = vector.broadcast %cst_60 : f32 to vector<8x128xf32>
    %202 = arith.addf %201, %200 : vector<8x128xf32>
    %203 = arith.divf %201, %202 : vector<8x128xf32>
    %204 = vector.extract_strided_slice %191 {offsets = [0, 256], sizes = [8, 128], strides = [1, 1]} : vector<8x512xf32> to vector<8x128xf32>
    %205 = math.tanh %204 : vector<8x128xf32>
    %206 = vector.extract_strided_slice %191 {offsets = [0, 384], sizes = [8, 128], strides = [1, 1]} : vector<8x512xf32> to vector<8x128xf32>
    %207 = arith.negf %206 : vector<8x128xf32>
    %208 = math.exp %207 : vector<8x128xf32>
    %cst_61 = arith.constant 1.000000e+00 : f32
    %209 = vector.broadcast %cst_61 : f32 to vector<8x128xf32>
    %210 = arith.addf %209, %208 : vector<8x128xf32>
    %211 = arith.divf %209, %210 : vector<8x128xf32>
    %212 = arith.mulf %203, %178 : vector<8x128xf32>
    %213 = arith.mulf %197, %205 : vector<8x128xf32>
    %214 = arith.addf %212, %213 : vector<8x128xf32>
    %215 = math.tanh %214 : vector<8x128xf32>
    %216 = arith.mulf %211, %215 : vector<8x128xf32>
    %217 = arith.index_cast %c5_i32 : i32 to index
    %c0_62 = arith.constant 0 : index
    %c0_63 = arith.constant 0 : index
    %218 = vector.load %arg6[%217, %c0_62, %c0_63] : memref<8x8x128xf32, #tpu.memory_space<vmem>>, vector<1x8x128xf32>
    %219 = vector.shape_cast %218 : vector<1x8x128xf32> to vector<8x128xf32>
    %220 = vector.shape_cast %216 : vector<8x128xf32> to vector<1x8x128xf32>
    tpu.vector_store %arg6[%217, %c0_62, %c0_63], %220 {strides = array<i32>} : memref<8x8x128xf32, #tpu.memory_space<vmem>>, vector<1x8x128xf32>,
    %c6_i32 = arith.constant 6 : i32
    %221 = arith.index_cast %c6_i32 : i32 to index
    %c0_64 = arith.constant 0 : index
    %c0_65 = arith.constant 0 : index
    %222 = vector.load %arg2[%221, %c0_64, %c0_65] : memref<8x8x512xf32, #tpu.memory_space<vmem>>, vector<1x8x512xf32>
    %223 = vector.shape_cast %222 : vector<1x8x512xf32> to vector<8x512xf32>
    %224 = arith.truncf %216 : vector<8x128xf32> to vector<8x128xbf16>
    %c0_66 = arith.constant 0 : index
    %c0_67 = arith.constant 0 : index
    %225 = vector.load %arg11[%c0_66, %c0_67] : memref<128x512xbf16, #tpu.memory_space<vmem>>, vector<128x512xbf16>
    %cst_68 = arith.constant dense<0.000000e+00> : vector<8x512xf32>
    %226 = tpu.matmul %224, %225, %cst_68 {dimension_numbers = #tpu.dot_dimension_numbers<[1], [0], [0], [1], [0, 0, 1, 1], [], []>} : vector<8x128xbf16>, vector<128x512xbf16>, vector<8x512xf32> -> vector<8x512xf32>
    %227 = arith.addf %223, %226 : vector<8x512xf32>
    %228 = vector.extract_strided_slice %227 {offsets = [0, 0], sizes = [8, 128], strides = [1, 1]} : vector<8x512xf32> to vector<8x128xf32>
    %229 = arith.negf %228 : vector<8x128xf32>
    %230 = math.exp %229 : vector<8x128xf32>
    %cst_69 = arith.constant 1.000000e+00 : f32
    %231 = vector.broadcast %cst_69 : f32 to vector<8x128xf32>
    %232 = arith.addf %231, %230 : vector<8x128xf32>
    %233 = arith.divf %231, %232 : vector<8x128xf32>
    %234 = vector.extract_strided_slice %227 {offsets = [0, 128], sizes = [8, 128], strides = [1, 1]} : vector<8x512xf32> to vector<8x128xf32>
    %235 = arith.negf %234 : vector<8x128xf32>
    %236 = math.exp %235 : vector<8x128xf32>
    %cst_70 = arith.constant 1.000000e+00 : f32
    %237 = vector.broadcast %cst_70 : f32 to vector<8x128xf32>
    %238 = arith.addf %237, %236 : vector<8x128xf32>
    %239 = arith.divf %237, %238 : vector<8x128xf32>
    %240 = vector.extract_strided_slice %227 {offsets = [0, 256], sizes = [8, 128], strides = [1, 1]} : vector<8x512xf32> to vector<8x128xf32>
    %241 = math.tanh %240 : vector<8x128xf32>
    %242 = vector.extract_strided_slice %227 {offsets = [0, 384], sizes = [8, 128], strides = [1, 1]} : vector<8x512xf32> to vector<8x128xf32>
    %243 = arith.negf %242 : vector<8x128xf32>
    %244 = math.exp %243 : vector<8x128xf32>
    %cst_71 = arith.constant 1.000000e+00 : f32
    %245 = vector.broadcast %cst_71 : f32 to vector<8x128xf32>
    %246 = arith.addf %245, %244 : vector<8x128xf32>
    %247 = arith.divf %245, %246 : vector<8x128xf32>
    %248 = arith.mulf %239, %214 : vector<8x128xf32>
    %249 = arith.mulf %233, %241 : vector<8x128xf32>
    %250 = arith.addf %248, %249 : vector<8x128xf32>
    %251 = math.tanh %250 : vector<8x128xf32>
    %252 = arith.mulf %247, %251 : vector<8x128xf32>
    %253 = arith.index_cast %c6_i32 : i32 to index
    %c0_72 = arith.constant 0 : index
    %c0_73 = arith.constant 0 : index
    %254 = vector.load %arg6[%253, %c0_72, %c0_73] : memref<8x8x128xf32, #tpu.memory_space<vmem>>, vector<1x8x128xf32>
    %255 = vector.shape_cast %254 : vector<1x8x128xf32> to vector<8x128xf32>
    %256 = vector.shape_cast %252 : vector<8x128xf32> to vector<1x8x128xf32>
    tpu.vector_store %arg6[%253, %c0_72, %c0_73], %256 {strides = array<i32>} : memref<8x8x128xf32, #tpu.memory_space<vmem>>, vector<1x8x128xf32>,
    %c7_i32 = arith.constant 7 : i32
    %257 = arith.index_cast %c7_i32 : i32 to index
    %c0_74 = arith.constant 0 : index
    %c0_75 = arith.constant 0 : index
    %258 = vector.load %arg2[%257, %c0_74, %c0_75] : memref<8x8x512xf32, #tpu.memory_space<vmem>>, vector<1x8x512xf32>
    %259 = vector.shape_cast %258 : vector<1x8x512xf32> to vector<8x512xf32>
    %260 = arith.truncf %252 : vector<8x128xf32> to vector<8x128xbf16>
    %c0_76 = arith.constant 0 : index
    %c0_77 = arith.constant 0 : index
    %261 = vector.load %arg11[%c0_76, %c0_77] : memref<128x512xbf16, #tpu.memory_space<vmem>>, vector<128x512xbf16>
    %cst_78 = arith.constant dense<0.000000e+00> : vector<8x512xf32>
    %262 = tpu.matmul %260, %261, %cst_78 {dimension_numbers = #tpu.dot_dimension_numbers<[1], [0], [0], [1], [0, 0, 1, 1], [], []>} : vector<8x128xbf16>, vector<128x512xbf16>, vector<8x512xf32> -> vector<8x512xf32>
    %263 = arith.addf %259, %262 : vector<8x512xf32>
    %264 = vector.extract_strided_slice %263 {offsets = [0, 0], sizes = [8, 128], strides = [1, 1]} : vector<8x512xf32> to vector<8x128xf32>
    %265 = arith.negf %264 : vector<8x128xf32>
    %266 = math.exp %265 : vector<8x128xf32>
    %cst_79 = arith.constant 1.000000e+00 : f32
    %267 = vector.broadcast %cst_79 : f32 to vector<8x128xf32>
    %268 = arith.addf %267, %266 : vector<8x128xf32>
    %269 = arith.divf %267, %268 : vector<8x128xf32>
    %270 = vector.extract_strided_slice %263 {offsets = [0, 128], sizes = [8, 128], strides = [1, 1]} : vector<8x512xf32> to vector<8x128xf32>
    %271 = arith.negf %270 : vector<8x128xf32>
    %272 = math.exp %271 : vector<8x128xf32>
    %cst_80 = arith.constant 1.000000e+00 : f32
    %273 = vector.broadcast %cst_80 : f32 to vector<8x128xf32>
    %274 = arith.addf %273, %272 : vector<8x128xf32>
    %275 = arith.divf %273, %274 : vector<8x128xf32>
    %276 = vector.extract_strided_slice %263 {offsets = [0, 256], sizes = [8, 128], strides = [1, 1]} : vector<8x512xf32> to vector<8x128xf32>
    %277 = math.tanh %276 : vector<8x128xf32>
    %278 = vector.extract_strided_slice %263 {offsets = [0, 384], sizes = [8, 128], strides = [1, 1]} : vector<8x512xf32> to vector<8x128xf32>
    %279 = arith.negf %278 : vector<8x128xf32>
    %280 = math.exp %279 : vector<8x128xf32>
    %cst_81 = arith.constant 1.000000e+00 : f32
    %281 = vector.broadcast %cst_81 : f32 to vector<8x128xf32>
    %282 = arith.addf %281, %280 : vector<8x128xf32>
    %283 = arith.divf %281, %282 : vector<8x128xf32>
    %284 = arith.mulf %275, %250 : vector<8x128xf32>
    %285 = arith.mulf %269, %277 : vector<8x128xf32>
    %286 = arith.addf %284, %285 : vector<8x128xf32>
    %287 = math.tanh %286 : vector<8x128xf32>
    %288 = arith.mulf %283, %287 : vector<8x128xf32>
    %289 = arith.index_cast %c7_i32 : i32 to index
    %c0_82 = arith.constant 0 : index
    %c0_83 = arith.constant 0 : index
    %290 = vector.load %arg6[%289, %c0_82, %c0_83] : memref<8x8x128xf32, #tpu.memory_space<vmem>>, vector<1x8x128xf32>
    %291 = vector.shape_cast %290 : vector<1x8x128xf32> to vector<8x128xf32>
    %292 = vector.shape_cast %288 : vector<8x128xf32> to vector<1x8x128xf32>
    tpu.vector_store %arg6[%289, %c0_82, %c0_83], %292 {strides = array<i32>} : memref<8x8x128xf32, #tpu.memory_space<vmem>>, vector<1x8x128xf32>,
    %c8_i32 = arith.constant 8 : i32
    %c0_84 = arith.constant 0 : index
    %c0_85 = arith.constant 0 : index
    %293 = vector.load %arg9[%c0_84, %c0_85] : memref<8x128xf32, #tpu.memory_space<vmem>>, vector<8x128xf32>
    tpu.vector_store %arg9[%c0_84, %c0_85], %288 {strides = array<i32>} : memref<8x128xf32, #tpu.memory_space<vmem>>, vector<8x128xf32>,
    %c0_86 = arith.constant 0 : index
    %c0_87 = arith.constant 0 : index
    %294 = vector.load %arg10[%c0_86, %c0_87] : memref<8x128xf32, #tpu.memory_space<vmem>>, vector<8x128xf32>
    tpu.vector_store %arg10[%c0_86, %c0_87], %286 {strides = array<i32>} : memref<8x128xf32, #tpu.memory_space<vmem>>, vector<8x128xf32>,
    %c1_i32_88 = arith.constant 1 : i32
    %295 = arith.cmpi eq, %arg1, %c1_i32_88 : i32
    %296 = arith.extui %295 : i1 to i32
    %c0_i32_89 = arith.constant 0 : i32
    %297 = arith.cmpi ne, %296, %c0_i32_89 : i32
    scf.if %297 {
      %c0_90 = arith.constant 0 : index
      %c0_91 = arith.constant 0 : index
      %298 = vector.load %arg7[%c0_90, %c0_91] : memref<8x128xf32, #tpu.memory_space<vmem>>, vector<8x128xf32>
      tpu.vector_store %arg7[%c0_90, %c0_91], %288 {strides = array<i32>} : memref<8x128xf32, #tpu.memory_space<vmem>>, vector<8x128xf32>,
      %c0_92 = arith.constant 0 : index
      %c0_93 = arith.constant 0 : index
      %299 = vector.load %arg8[%c0_92, %c0_93] : memref<8x128xf32, #tpu.memory_space<vmem>>, vector<8x128xf32>
      tpu.vector_store %arg8[%c0_92, %c0_93], %286 {strides = array<i32>} : memref<8x128xf32, #tpu.memory_space<vmem>>, vector<8x128xf32>,
    } else {
    }
    return
  }
  func.func @transform_0(%arg0: i32, %arg1: i32) -> (i32, i32, i32) {
    %c0_i32 = arith.constant 0 : i32
    %c0_i32_0 = arith.constant 0 : i32
    return %arg1, %arg0, %c0_i32 : i32, i32, i32
  }
  func.func @transform_1(%arg0: i32, %arg1: i32) -> (i32, i32) {
    %c0_i32 = arith.constant 0 : i32
    %c0_i32_0 = arith.constant 0 : i32
    return %arg0, %c0_i32 : i32, i32
  }
  func.func @transform_2(%arg0: i32, %arg1: i32) -> (i32, i32) {
    %c0_i32 = arith.constant 0 : i32
    %c0_i32_0 = arith.constant 0 : i32
    return %arg0, %c0_i32 : i32, i32
  }
  func.func @transform_4(%arg0: i32, %arg1: i32) -> (i32, i32, i32) {
    %c0_i32 = arith.constant 0 : i32
    %c0_i32_0 = arith.constant 0 : i32
    return %arg1, %arg0, %c0_i32 : i32, i32, i32
  }
  func.func @transform_5(%arg0: i32, %arg1: i32) -> (i32, i32) {
    %c0_i32 = arith.constant 0 : i32
    %c0_i32_0 = arith.constant 0 : i32
    return %arg0, %c0_i32 : i32, i32
  }
  func.func @transform_6(%arg0: i32, %arg1: i32) -> (i32, i32) {
    %c0_i32 = arith.constant 0 : i32
    %c0_i32_0 = arith.constant 0 : i32
    return %arg0, %c0_i32 : i32, i32
  }
}

module attributes {stable_mosaic.version = 11 : i64} {
  func.func @_matmul_nt_kernel(%arg0: i32, %arg1: i32, %arg2: i32, %arg3: memref<128x128xf32, #tpu.memory_space<vmem>>, %arg4: memref<128x128xbf16, #tpu.memory_space<vmem>>, %arg5: memref<1x128xf32, #tpu.memory_space<vmem>>, %arg6: memref<128x128xf32, #tpu.memory_space<vmem>>, %arg7: memref<128x128xf32, #tpu.memory_space<vmem>>) attributes {dimension_semantics = [#tpu.dimension_semantics<parallel>, #tpu.dimension_semantics<parallel>, #tpu.dimension_semantics<arbitrary>], iteration_bounds = array<i64: 2, 2, 1>, scalar_prefetch = 0 : i64, scratch_operands = 1 : i64, tpu.core_type = #tpu.core_type<tc>, window_params = [{transform_indices = @transform_0, window_bounds = array<i64: 128, 128>}, {transform_indices = @transform_1, window_bounds = array<i64: 128, 128>}, {transform_indices = @transform_2, window_bounds = array<i64: 1, 128>}, {transform_indices = @transform_3, window_bounds = array<i64: 128, 128>}]} {
    %c0_i32 = arith.constant 0 : i32
    %0 = arith.cmpi eq, %arg2, %c0_i32 : i32
    %1 = arith.extui %0 : i1 to i32
    %c0_i32_0 = arith.constant 0 : i32
    %2 = arith.cmpi ne, %1, %c0_i32_0 : i32
    scf.if %2 {
      %cst_10 = arith.constant 0.000000e+00 : f32
      %13 = vector.broadcast %cst_10 : f32 to vector<128x128xf32>
      %c0_11 = arith.constant 0 : index
      %c0_12 = arith.constant 0 : index
      %14 = vector.load %arg7[%c0_11, %c0_12] : memref<128x128xf32, #tpu.memory_space<vmem>>, vector<128x128xf32>
      tpu.vector_store %arg7[%c0_11, %c0_12], %13 {strides = array<i32>} : memref<128x128xf32, #tpu.memory_space<vmem>>, vector<128x128xf32>,
    } else {
    }
    %c0 = arith.constant 0 : index
    %c0_1 = arith.constant 0 : index
    %3 = vector.load %arg3[%c0, %c0_1] : memref<128x128xf32, #tpu.memory_space<vmem>>, vector<128x128xf32>
    %4 = arith.truncf %3 : vector<128x128xf32> to vector<128x128xbf16>
    %c0_2 = arith.constant 0 : index
    %c0_3 = arith.constant 0 : index
    %5 = vector.load %arg7[%c0_2, %c0_3] : memref<128x128xf32, #tpu.memory_space<vmem>>, vector<128x128xf32>
    %c0_4 = arith.constant 0 : index
    %c0_5 = arith.constant 0 : index
    %6 = vector.load %arg4[%c0_4, %c0_5] : memref<128x128xbf16, #tpu.memory_space<vmem>>, vector<128x128xbf16>
    %cst = arith.constant dense<0.000000e+00> : vector<128x128xf32>
    %7 = tpu.matmul %4, %6, %cst {dimension_numbers = #tpu.dot_dimension_numbers<[1], [1], [0], [0], [0, 0, 1, 0], [], []>} : vector<128x128xbf16>, vector<128x128xbf16>, vector<128x128xf32> -> vector<128x128xf32>
    %8 = arith.addf %5, %7 : vector<128x128xf32>
    %c0_6 = arith.constant 0 : index
    %c0_7 = arith.constant 0 : index
    %9 = vector.load %arg7[%c0_6, %c0_7] : memref<128x128xf32, #tpu.memory_space<vmem>>, vector<128x128xf32>
    tpu.vector_store %arg7[%c0_6, %c0_7], %8 {strides = array<i32>} : memref<128x128xf32, #tpu.memory_space<vmem>>, vector<128x128xf32>,
    %c0_i32_8 = arith.constant 0 : i32
    %10 = arith.cmpi eq, %arg2, %c0_i32_8 : i32
    %11 = arith.extui %10 : i1 to i32
    %c0_i32_9 = arith.constant 0 : i32
    %12 = arith.cmpi ne, %11, %c0_i32_9 : i32
    scf.if %12 {
      %c0_10 = arith.constant 0 : index
      %c0_11 = arith.constant 0 : index
      %13 = vector.load %arg7[%c0_10, %c0_11] : memref<128x128xf32, #tpu.memory_space<vmem>>, vector<128x128xf32>
      %c0_12 = arith.constant 0 : index
      %c0_13 = arith.constant 0 : index
      %14 = vector.load %arg5[%c0_12, %c0_13] : memref<1x128xf32, #tpu.memory_space<vmem>>, vector<1x128xf32>
      %15 = vector.broadcast %14 : vector<1x128xf32> to vector<128x128xf32>
      %16 = arith.addf %13, %15 : vector<128x128xf32>
      %c0_14 = arith.constant 0 : index
      %c0_15 = arith.constant 0 : index
      %17 = vector.load %arg6[%c0_14, %c0_15] : memref<128x128xf32, #tpu.memory_space<vmem>>, vector<128x128xf32>
      tpu.vector_store %arg6[%c0_14, %c0_15], %16 {strides = array<i32>} : memref<128x128xf32, #tpu.memory_space<vmem>>, vector<128x128xf32>,
    } else {
    }
    return
  }
  func.func @transform_0(%arg0: i32, %arg1: i32, %arg2: i32) -> (i32, i32) {
    %c0_i32 = arith.constant 0 : i32
    return %arg0, %arg2 : i32, i32
  }
  func.func @transform_1(%arg0: i32, %arg1: i32, %arg2: i32) -> (i32, i32) {
    %c0_i32 = arith.constant 0 : i32
    return %arg1, %arg2 : i32, i32
  }
  func.func @transform_2(%arg0: i32, %arg1: i32, %arg2: i32) -> (i32, i32) {
    %c0_i32 = arith.constant 0 : i32
    %c0_i32_0 = arith.constant 0 : i32
    return %c0_i32, %arg1 : i32, i32
  }
  func.func @transform_3(%arg0: i32, %arg1: i32, %arg2: i32) -> (i32, i32) {
    %c0_i32 = arith.constant 0 : i32
    return %arg0, %arg1 : i32, i32
  }
}

</mosaic_0001>

<llo_original>
// kernel: model_forward.5
$region0: #{model_forward.5}
  #allocation0 [shape = 'u32[]', space=smem, size = 0x4, offset = 0x4, fixed_abs, tag = 'smem constant byte address 0x4 - core index']
  #allocation1 [shape = 'u32[72,128]{1,0:T(1,128)}', space=vmem, size = 0x9000, scoped, tag = 'internal scratch']
  #allocation2 [shape = 'f32[128,128]{1,0:T(8,128)}', space=vmem, size = 0x10000, scoped, tag = 'scratch operand']
  %s0 = inlined_call_operand.vmem [shape: bf16[256,128], index: 0, kind: input, shape index: {}]
  %s1 = inlined_call_operand.vmem [shape: bf16[512,128], index: 1, kind: input, shape index: {}]
  %s2 = inlined_call_operand.vmem [shape: f32[1,512], index: 2, kind: input, shape index: {}]
  %s3 = inlined_call_operand.vmem [shape: f32[256,512], index: 3, kind: output, shape index: {}]
  %s4 = sld [smem:[#allocation0]]
  $region87: #{model_forward.5} parent=0
    _
  %s6 = ssub.s32 1, %s4
  %s7 = scalar_select 0, %s6, %s4
  $region1: #{model_forward.5} parent=0
    #allocation3 [shape = 'u8[131072]{0}', space=vmem, size = 0x20000, scoped, tag = 'output window, operand 0']
    loop: start=0, step=1, limit=10
    $region2: #{model_forward.5} parent=1 // loop_pre_header
      _
    $region3: #{model_forward.5} parent=1 // loop_header
      %s9 = sphi 0, %s13
      %p10 = scmp.ge.s32.totalorder %s9, 10
      %s16 = sphi 0, %s35
      %s17 = sphi 0, %s31
      %s18 = sphi 0, %s27
      %s19 = sphi 0, %s16
      %s20 = sphi 0, %s17
      %s21 = sphi 0, %s18
      %s22 = sphi 0, %s19
      %s23 = sphi 0, %s20
      %s24 = sphi 0, %s21
      %s40 = sphi 0, %s42
      %s43 = sphi 0, %s40
      %s44 = sphi 0, %s43
      %s60 = sphi 0, %s44
      %s68 = sphi 0, %s70
      %s71 = sphi 0, %s68
      %s72 = sphi 0, %s71
      %s88 = sphi 0, %s72
      %s94 = sphi 0, %s96
      %s97 = sphi 0, %s94
      %s98 = sphi 0, %s97
      %s114 = sphi 0, %s98
      %s122 = sphi 0, %s124
      %s125 = sphi 0, %s122
      %s126 = sphi 0, %s125
      %s142 = sphi 0, %s126
    $region4: #{model_forward.5} parent=1 // loop_header_branch
      %12 = sbr.rel (%p10) target = $region8
    $region5: #{model_forward.5} parent=1 // loop_body
      %s14 = ssub.s32 %s9, 1
      %s15 = ssub.s32 %s9, 2
      %s25 = sadd.s32 1, %s18
      %p26 = scmp.ge.s32.totalorder %s25, 1
      %s27 = scalar_select %p26, 0, %s25
      %s28 = sadd.s32 1, %s17
      %s29 = scalar_select %p26, %s28, %s17
      %p30 = scmp.ge.s32.totalorder %s29, 4
      %s31 = scalar_select %p30, 0, %s29
      %s32 = sadd.s32 1, %s16
      %s33 = scalar_select %p30, %s32, %s16
      %p34 = scmp.ge.s32.totalorder %s33, 2
      %s35 = scalar_select %p34, 0, %s33
      %s36 = ssub.s32 %s16, %s35
      %s37 = ssub.s32 %s18, %s27
      %s38 = sor.u32 %s36, %s37
      %p39 = scmp.eq.s32.totalorder %s38, 0
      %s41 = sadd.s32 %s40, 1
      %s42 = scalar_select %p39, %s40, %s41
      %p45 = pneg %p39
      %p46 = scmp.eq.s32.totalorder %s9, 7
      %p47 = por %p45, %p46
      %p48 = scmp.ne.s32.totalorder %s40, %s43
      %p49 = scmp.eq.s32.totalorder %s9, 0
      %p50 = por %p48, %p49
      %p51 = scmp.ne.s32.totalorder %s40, %s43
      %p52 = scmp.eq.s32.totalorder %s14, 7
      %p53 = por %p51, %p52
      %p54 = scmp.ne.s32.totalorder %s43, %s44
      %p55 = scmp.eq.s32.totalorder %s14, 0
      %p56 = por %p54, %p55
      %p57 = scmp.ne.s32.totalorder %s43, %s44
      %p58 = scmp.eq.s32.totalorder %s15, 7
      %p59 = por %p57, %p58
      %p61 = scmp.ne.s32.totalorder %s44, %s60
      %p62 = scmp.eq.s32.totalorder %s15, 0
      %p63 = por %p61, %p62
      %s64 = ssub.s32 %s17, %s31
      %s65 = ssub.s32 %s18, %s27
      %s66 = sor.u32 %s64, %s65
      %p67 = scmp.eq.s32.totalorder %s66, 0
      %s69 = sadd.s32 %s68, 1
      %s70 = scalar_select %p67, %s68, %s69
      %p73 = pneg %p67
      %p74 = scmp.eq.s32.totalorder %s9, 7
      %p75 = por %p73, %p74
      %p76 = scmp.ne.s32.totalorder %s68, %s71
      %p77 = scmp.eq.s32.totalorder %s9, 0
      %p78 = por %p76, %p77
      %p79 = scmp.ne.s32.totalorder %s68, %s71
      %p80 = scmp.eq.s32.totalorder %s14, 7
      %p81 = por %p79, %p80
      %p82 = scmp.ne.s32.totalorder %s71, %s72
      %p83 = scmp.eq.s32.totalorder %s14, 0
      %p84 = por %p82, %p83
      %p85 = scmp.ne.s32.totalorder %s71, %s72
      %p86 = scmp.eq.s32.totalorder %s15, 7
      %p87 = por %p85, %p86
      %p89 = scmp.ne.s32.totalorder %s72, %s88
      %p90 = scmp.eq.s32.totalorder %s15, 0
      %p91 = por %p89, %p90
      %s92 = ssub.s32 %s17, %s31
      %p93 = scmp.eq.s32.totalorder %s92, 0
      %s95 = sadd.s32 %s94, 1
      %s96 = scalar_select %p93, %s94, %s95
      %p99 = pneg %p93
      %p100 = scmp.eq.s32.totalorder %s9, 7
      %p101 = por %p99, %p100
      %p102 = scmp.ne.s32.totalorder %s94, %s97
      %p103 = scmp.eq.s32.totalorder %s9, 0
      %p104 = por %p102, %p103
      %p105 = scmp.ne.s32.totalorder %s94, %s97
      %p106 = scmp.eq.s32.totalorder %s14, 7
      %p107 = por %p105, %p106
      %p108 = scmp.ne.s32.totalorder %s97, %s98
      %p109 = scmp.eq.s32.totalorder %s14, 0
      %p110 = por %p108, %p109
      %p111 = scmp.ne.s32.totalorder %s97, %s98
      %p112 = scmp.eq.s32.totalorder %s15, 7
      %p113 = por %p111, %p112
      %p115 = scmp.ne.s32.totalorder %s98, %s114
      %p116 = scmp.eq.s32.totalorder %s15, 0
      %p117 = por %p115, %p116
      %s118 = ssub.s32 %s16, %s35
      %s119 = ssub.s32 %s17, %s31
      %s120 = sor.u32 %s118, %s119
      %p121 = scmp.eq.s32.totalorder %s120, 0
      %s123 = sadd.s32 %s122, 1
      %s124 = scalar_select %p121, %s122, %s123
      %p127 = pneg %p121
      %p128 = scmp.eq.s32.totalorder %s9, 7
      %p129 = por %p127, %p128
      %p130 = scmp.ne.s32.totalorder %s122, %s125
      %p131 = scmp.eq.s32.totalorder %s9, 0
      %p132 = por %p130, %p131
      %p133 = scmp.ne.s32.totalorder %s122, %s125
      %p134 = scmp.eq.s32.totalorder %s14, 7
      %p135 = por %p133, %p134
      %p136 = scmp.ne.s32.totalorder %s125, %s126
      %p137 = scmp.eq.s32.totalorder %s14, 0
      %p138 = por %p136, %p137
      %p139 = scmp.ne.s32.totalorder %s125, %s126
      %p140 = scmp.eq.s32.totalorder %s15, 7
      %p141 = por %p139, %p140
      %p143 = scmp.ne.s32.totalorder %s126, %s142
      %p144 = scmp.eq.s32.totalorder %s15, 0
      %p145 = por %p143, %p144
      %p146 = scmp.le.s32.totalorder 1, %s9
      %p147 = scmp.lt.s32.totalorder %s9, 9
      %p148 = pnand %p146, %p147
      %p149 = pneg %p148
      // Predicated region
      $region9: #{model_forward.5} parent=5 // pred_check
        _
      $region10: #{model_forward.5} parent=5 // pred_check_branch
        %151 = sbr.rel (%p148) target = $region12
      $region11: #{model_forward.5} parent=5 // pred_region
        %s152 = ssub.s32 %s9, 1
      $region12: #{model_forward.5} parent=5 // pred_fallthru
        _
      %p153 = scmp.lt.s32.totalorder %s9, 8
      // Predicated region
      $region13: #{model_forward.5} parent=5 // pred_check
        %p154 = pneg %p153
      $region14: #{model_forward.5} parent=5 // pred_check_branch
        %156 = sbr.rel (%p154) target = $region16
      $region15: #{model_forward.5} parent=5 // pred_region
        // Predicated region
        $region17: #{model_forward.5} parent=15 // pred_check
          %p157 = pneg %p50
        $region18: #{model_forward.5} parent=15 // pred_check_branch
          %159 = sbr.rel (%p157) target = $region20
        $region19: #{model_forward.5} parent=15 // pred_region
          %s160 = smul.u32 16, %s16
          %p161 = scmp.lt.s32.totalorder %s160, 31
          %s162 = scalar_select %p161, %s160, 31
          %p163 = scmp.lt.s32.totalorder %s18, 0
          %s164 = scalar_select %p163, %s18, 0
          %s165 = sadd.s32 %s164, %s162
          %s166 = smul.addr %s165, 4
          %s167 = scalar_lea.vmem %s0, %s166
          %s168 = smul.u32 16, %s16
        $region20: #{model_forward.5} parent=15 // pred_fallthru
          _
        // Predicated region
        $region21: #{model_forward.5} parent=15 // pred_check
          %p169 = pneg %p78
        $region22: #{model_forward.5} parent=15 // pred_check_branch
          %171 = sbr.rel (%p169) target = $region24
        $region23: #{model_forward.5} parent=15 // pred_region
          %s172 = smul.u32 16, %s17
          %p173 = scmp.lt.s32.totalorder %s172, 63
          %s174 = scalar_select %p173, %s172, 63
          %p175 = scmp.lt.s32.totalorder %s18, 0
          %s176 = scalar_select %p175, %s18, 0
          %s177 = sadd.s32 %s176, %s174
          %s178 = smul.addr %s177, 4
          %s179 = scalar_lea.vmem %s1, %s178
          %s180 = smul.u32 16, %s17
        $region24: #{model_forward.5} parent=15 // pred_fallthru
          _
        // Predicated region
        $region25: #{model_forward.5} parent=15 // pred_check
          %p181 = pneg %p104
        $region26: #{model_forward.5} parent=15 // pred_check_branch
          %183 = sbr.rel (%p181) target = $region28
        $region27: #{model_forward.5} parent=15 // pred_region
          %p184 = scmp.lt.s32.totalorder %s17, 3
          %s185 = scalar_select %p184, %s17, 3
          %s186 = scalar_lea.vmem %s2, %s185
        $region28: #{model_forward.5} parent=15 // pred_fallthru
          _
      $region16: #{model_forward.5} parent=5 // pred_fallthru
        _
      %p187 = scmp.le.s32.totalorder 1, %s9
      %p188 = scmp.lt.s32.totalorder %s9, 9
      %p189 = pnand %p187, %p188
      %p190 = pneg %p189
      // Predicated region
      $region29: #{model_forward.5} parent=5 // pred_check
        _
      $region30: #{model_forward.5} parent=5 // pred_check_branch
        %192 = sbr.rel (%p189) target = $region32
      $region31: #{model_forward.5} parent=5 // pred_region
        %s193 = ssub.s32 %s9, 1
        %s194 = smul.u32 16, %s19
        %p195 = scmp.lt.s32.totalorder %s194, 31
        %s196 = scalar_select %p195, %s194, 31
        %p197 = scmp.lt.s32.totalorder %s21, 0
        %s198 = scalar_select %p197, %s21, 0
        %s199 = sadd.s32 %s198, %s196
        %s200 = smul.addr %s199, 4
        %s201 = scalar_lea.vmem %s0, %s200
        %p202 = pneg %p56
        %p203 = pneg %p53
        %s204 = smul.u32 16, %s20
        %p205 = scmp.lt.s32.totalorder %s204, 63
        %s206 = scalar_select %p205, %s204, 63
        %p207 = scmp.lt.s32.totalorder %s21, 0
        %s208 = scalar_select %p207, %s21, 0
        %s209 = sadd.s32 %s208, %s206
        %s210 = smul.addr %s209, 4
        %s211 = scalar_lea.vmem %s1, %s210
        %p212 = pneg %p84
        %p213 = pneg %p81
        %p214 = scmp.lt.s32.totalorder %s20, 3
        %s215 = scalar_select %p214, %s20, 3
        %s216 = scalar_lea.vmem %s2, %s215
        %p217 = pneg %p110
        %p218 = pneg %p107
        %p219 = pneg %p138
        %p220 = pneg %p135
        %s221 = sand.u32 %s125, 1
        %s222 = sand.u32 %s125, 1
        %s223 = smul.addr %s222, 128
        %s224 = scalar_lea.vmem [#allocation3], %s223
        %s225 = smul.u32 16, %s19
        %p226 = scmp.lt.s32.totalorder %s225, 31
        %s227 = scalar_select %p226, %s225, 31
        %p228 = scmp.lt.s32.totalorder %s21, 0
        %s229 = scalar_select %p228, %s21, 0
        %s230 = sadd.s32 %s229, %s227
        %s231 = smul.addr %s230, 4
        %s232 = scalar_lea.vmem %s0, %s231
        %s233 = smul.u32 16, %s19
        %s234 = smul.u32 16, %s20
        %p235 = scmp.lt.s32.totalorder %s234, 63
        %s236 = scalar_select %p235, %s234, 63
        %p237 = scmp.lt.s32.totalorder %s21, 0
        %s238 = scalar_select %p237, %s21, 0
        %s239 = sadd.s32 %s238, %s236
        %s240 = smul.addr %s239, 4
        %s241 = scalar_lea.vmem %s1, %s240
        %s242 = smul.u32 16, %s20
        %p243 = scmp.lt.s32.totalorder %s20, 3
        %s244 = scalar_select %p243, %s20, 3
        %s245 = scalar_lea.vmem %s2, %s244
        %s246 = smul.u32 16, %s19
        %p247 = scmp.eq.s32.totalorder %s21, 0
        // Predicated region
        $region33: #{model_forward.5} parent=31 // pred_check
          %p248 = pneg %p247
        $region34: #{model_forward.5} parent=31 // pred_check_branch
          %250 = sbr.rel (%p248) target = $region36
        $region35: #{model_forward.5} parent=31 // pred_region
          %251 = vst [vmem:[#allocation2] sm:$0xff] 0.0
          %252 = vst [vmem:[#allocation2 + $0x8] sm:$0xff] 0.0
          %253 = vst [vmem:[#allocation2 + $0x10] sm:$0xff] 0.0
          %254 = vst [vmem:[#allocation2 + $0x18] sm:$0xff] 0.0
          %255 = vst [vmem:[#allocation2 + $0x20] sm:$0xff] 0.0
          %256 = vst [vmem:[#allocation2 + $0x28] sm:$0xff] 0.0
          %257 = vst [vmem:[#allocation2 + $0x30] sm:$0xff] 0.0
          %258 = vst [vmem:[#allocation2 + $0x38] sm:$0xff] 0.0
          %259 = vst [vmem:[#allocation2 + $0x40] sm:$0xff] 0.0
          %260 = vst [vmem:[#allocation2 + $0x48] sm:$0xff] 0.0
          %261 = vst [vmem:[#allocation2 + $0x50] sm:$0xff] 0.0
          %262 = vst [vmem:[#allocation2 + $0x58] sm:$0xff] 0.0
          %263 = vst [vmem:[#allocation2 + $0x60] sm:$0xff] 0.0
          %264 = vst [vmem:[#allocation2 + $0x68] sm:$0xff] 0.0
          %265 = vst [vmem:[#allocation2 + $0x70] sm:$0xff] 0.0
          %266 = vst [vmem:[#allocation2 + $0x78] sm:$0xff] 0.0
        $region36: #{model_forward.5} parent=31 // pred_fallthru
          _
        %v267 = vld [vmem:[%s232] sm:$0xf]
        %v268 = vld [vmem:[%s232 + $0x4] sm:$0xf]
        %v269 = vld [vmem:[%s232 + $0x8] sm:$0xf]
        %v270 = vld [vmem:[%s232 + $0xc] sm:$0xf]
        %v271 = vld [vmem:[%s232 + $0x10] sm:$0xf]
        %v272 = vld [vmem:[%s232 + $0x14] sm:$0xf]
        %v273 = vld [vmem:[%s232 + $0x18] sm:$0xf]
        %v274 = vld [vmem:[%s232 + $0x1c] sm:$0xf]
        %v275 = vld [vmem:[%s232 + $0x20] sm:$0xf]
        %v276 = vld [vmem:[%s232 + $0x24] sm:$0xf]
        %v277 = vld [vmem:[%s232 + $0x28] sm:$0xf]
        %v278 = vld [vmem:[%s232 + $0x2c] sm:$0xf]
        %v279 = vld [vmem:[%s232 + $0x30] sm:$0xf]
        %v280 = vld [vmem:[%s232 + $0x34] sm:$0xf]
        %v281 = vld [vmem:[%s232 + $0x38] sm:$0xf]
        %v282 = vld [vmem:[%s232 + $0x3c] sm:$0xf]
        %v283 = vld [vmem:[#allocation2] sm:$0xff]
        %v284 = vld [vmem:[#allocation2 + $0x8] sm:$0xff]
        %v285 = vld [vmem:[#allocation2 + $0x10] sm:$0xff]
        %v286 = vld [vmem:[#allocation2 + $0x18] sm:$0xff]
        %v287 = vld [vmem:[#allocation2 + $0x20] sm:$0xff]
        %v288 = vld [vmem:[#allocation2 + $0x28] sm:$0xff]
        %v289 = vld [vmem:[#allocation2 + $0x30] sm:$0xff]
        %v290 = vld [vmem:[#allocation2 + $0x38] sm:$0xff]
        %v291 = vld [vmem:[#allocation2 + $0x40] sm:$0xff]
        %v292 = vld [vmem:[#allocation2 + $0x48] sm:$0xff]
        %v293 = vld [vmem:[#allocation2 + $0x50] sm:$0xff]
        %v294 = vld [vmem:[#allocation2 + $0x58] sm:$0xff]
        %v295 = vld [vmem:[#allocation2 + $0x60] sm:$0xff]
        %v296 = vld [vmem:[#allocation2 + $0x68] sm:$0xff]
        %v297 = vld [vmem:[#allocation2 + $0x70] sm:$0xff]
        %v298 = vld [vmem:[#allocation2 + $0x78] sm:$0xff]
        %v299 = vld [vmem:[%s241] sm:$0xf]
        %v300 = vld [vmem:[%s241 + $0x4] sm:$0xf]
        %v301 = vld [vmem:[%s241 + $0x8] sm:$0xf]
        %v302 = vld [vmem:[%s241 + $0xc] sm:$0xf]
        %v303 = vld [vmem:[%s241 + $0x10] sm:$0xf]
        %v304 = vld [vmem:[%s241 + $0x14] sm:$0xf]
        %v305 = vld [vmem:[%s241 + $0x18] sm:$0xf]
        %v306 = vld [vmem:[%s241 + $0x1c] sm:$0xf]
        %v307 = vld [vmem:[%s241 + $0x20] sm:$0xf]
        %v308 = vld [vmem:[%s241 + $0x24] sm:$0xf]
        %v309 = vld [vmem:[%s241 + $0x28] sm:$0xf]
        %v310 = vld [vmem:[%s241 + $0x2c] sm:$0xf]
        %v311 = vld [vmem:[%s241 + $0x30] sm:$0xf]
        %v312 = vld [vmem:[%s241 + $0x34] sm:$0xf]
        %v313 = vld [vmem:[%s241 + $0x38] sm:$0xf]
        %v314 = vld [vmem:[%s241 + $0x3c] sm:$0xf]
        %v331 = vunpack.c.l.b16 %v267
        %v332 = vunpack.c.l.b16 %v268
        %v333 = vunpack.c.l.b16 %v269
        %v334 = vunpack.c.l.b16 %v270
        %v335 = vunpack.c.l.b16 %v271
        %v336 = vunpack.c.l.b16 %v272
        %v337 = vunpack.c.l.b16 %v273
        %v338 = vunpack.c.l.b16 %v274
        %v339 = vunpack.c.l.b16 %v275
        %v340 = vunpack.c.l.b16 %v276
        %v341 = vunpack.c.l.b16 %v277
        %v342 = vunpack.c.l.b16 %v278
        %v343 = vunpack.c.l.b16 %v279
        %v344 = vunpack.c.l.b16 %v280
        %v345 = vunpack.c.l.b16 %v281
        %v346 = vunpack.c.l.b16 %v282
        %v347 = vpack.c.b16 %v332, %v331
        %v348 = vpack.c.b16 %v334, %v333
        %v349 = vpack.c.b16 %v336, %v335
        %v350 = vpack.c.b16 %v338, %v337
        %v351 = vpack.c.b16 %v340, %v339
        %v352 = vpack.c.b16 %v342, %v341
        %v353 = vpack.c.b16 %v344, %v343
        %v354 = vpack.c.b16 %v346, %v345
        %v379 = vunpack.c.l.b16 %v299
        %v380 = vunpack.c.l.b16 %v300
        %v381 = vunpack.c.l.b16 %v301
        %v382 = vunpack.c.l.b16 %v302
        %v383 = vunpack.c.l.b16 %v303
        %v384 = vunpack.c.l.b16 %v304
        %v385 = vunpack.c.l.b16 %v305
        %v386 = vunpack.c.l.b16 %v306
        %v387 = vunpack.c.l.b16 %v307
        %v388 = vunpack.c.l.b16 %v308
        %v389 = vunpack.c.l.b16 %v309
        %v390 = vunpack.c.l.b16 %v310
        %v391 = vunpack.c.l.b16 %v311
        %v392 = vunpack.c.l.b16 %v312
        %v393 = vunpack.c.l.b16 %v313
        %v394 = vunpack.c.l.b16 %v314
        %v395 = vpack.c.b16 %v380, %v379
        %v396 = vpack.c.b16 %v382, %v381
        %v397 = vpack.c.b16 %v384, %v383
        %v398 = vpack.c.b16 %v386, %v385
        %v399 = vpack.c.b16 %v388, %v387
        %v400 = vpack.c.b16 %v390, %v389
        %v401 = vpack.c.b16 %v392, %v391
        %v402 = vpack.c.b16 %v394, %v393
        %411 = vmatpush.bf16.xpose.msra.mxu0 %v402
        %412 = vmatpush.bf16.xpose.msra.mxu0 %v401
        %413 = vmatpush.bf16.xpose.msra.mxu0 %v400
        %414 = vmatpush.bf16.xpose.msra.mxu0 %v399
        %415 = vmatpush.bf16.xpose.msra.mxu0 %v398
        %416 = vmatpush.bf16.xpose.msra.mxu0 %v397
        %417 = vmatpush.bf16.xpose.msra.mxu0 %v396
        %418 = vmatpush.bf16.xpose.msra.mxu0 %v395
        %419 = vmatmul.bf16.gmra.mxu0 %v347
        %v420 = vpop.f32.mrf.mxu0
        %v421 = vadd.f32 0.0, %v420
        %v422 = vpop.f32.mrf.mxu0
        %v423 = vadd.f32 0.0, %v422
        %424 = vmatmul.bf16.gmra.mxu0 %v348
        %v425 = vpop.f32.mrf.mxu0
        %v426 = vadd.f32 0.0, %v425
        %v427 = vpop.f32.mrf.mxu0
        %v428 = vadd.f32 0.0, %v427
        %429 = vmatmul.bf16.gmra.mxu0 %v349
        %v430 = vpop.f32.mrf.mxu0
        %v431 = vadd.f32 0.0, %v430
        %v432 = vpop.f32.mrf.mxu0
        %v433 = vadd.f32 0.0, %v432
        %434 = vmatmul.bf16.gmra.mxu0 %v350
        %v435 = vpop.f32.mrf.mxu0
        %v436 = vadd.f32 0.0, %v435
        %v437 = vpop.f32.mrf.mxu0
        %v438 = vadd.f32 0.0, %v437
        %439 = vmatmul.bf16.gmra.mxu0 %v351
        %v440 = vpop.f32.mrf.mxu0
        %v441 = vadd.f32 0.0, %v440
        %v442 = vpop.f32.mrf.mxu0
        %v443 = vadd.f32 0.0, %v442
        %444 = vmatmul.bf16.gmra.mxu0 %v352
        %v445 = vpop.f32.mrf.mxu0
        %v446 = vadd.f32 0.0, %v445
        %v447 = vpop.f32.mrf.mxu0
        %v448 = vadd.f32 0.0, %v447
        %449 = vmatmul.bf16.gmra.mxu0 %v353
        %v450 = vpop.f32.mrf.mxu0
        %v451 = vadd.f32 0.0, %v450
        %v452 = vpop.f32.mrf.mxu0
        %v453 = vadd.f32 0.0, %v452
        %454 = vmatmul.bf16.gmra.mxu0 %v354
        %v455 = vpop.f32.mrf.mxu0
        %v456 = vadd.f32 0.0, %v455
        %v457 = vpop.f32.mrf.mxu0
        %v458 = vadd.f32 0.0, %v457
        %459 = vdwg.mxu0
        %v460 = vadd.f32 %v283, %v421
        %v461 = vadd.f32 %v284, %v423
        %v462 = vadd.f32 %v285, %v426
        %v463 = vadd.f32 %v286, %v428
        %v464 = vadd.f32 %v287, %v431
        %v465 = vadd.f32 %v288, %v433
        %v466 = vadd.f32 %v289, %v436
        %v467 = vadd.f32 %v290, %v438
        %v468 = vadd.f32 %v291, %v441
        %v469 = vadd.f32 %v292, %v443
        %v470 = vadd.f32 %v293, %v446
        %v471 = vadd.f32 %v294, %v448
        %v472 = vadd.f32 %v295, %v451
        %v473 = vadd.f32 %v296, %v453
        %v474 = vadd.f32 %v297, %v456
        %v475 = vadd.f32 %v298, %v458
        %476 = vst [vmem:[#allocation2] sm:$0xff] %v460
        %477 = vst [vmem:[#allocation2 + $0x8] sm:$0xff] %v461
        %478 = vst [vmem:[#allocation2 + $0x10] sm:$0xff] %v462
        %479 = vst [vmem:[#allocation2 + $0x18] sm:$0xff] %v463
        %480 = vst [vmem:[#allocation2 + $0x20] sm:$0xff] %v464
        %481 = vst [vmem:[#allocation2 + $0x28] sm:$0xff] %v465
        %482 = vst [vmem:[#allocation2 + $0x30] sm:$0xff] %v466
        %483 = vst [vmem:[#allocation2 + $0x38] sm:$0xff] %v467
        %484 = vst [vmem:[#allocation2 + $0x40] sm:$0xff] %v468
        %485 = vst [vmem:[#allocation2 + $0x48] sm:$0xff] %v469
        %486 = vst [vmem:[#allocation2 + $0x50] sm:$0xff] %v470
        %487 = vst [vmem:[#allocation2 + $0x58] sm:$0xff] %v471
        %488 = vst [vmem:[#allocation2 + $0x60] sm:$0xff] %v472
        %489 = vst [vmem:[#allocation2 + $0x68] sm:$0xff] %v473
        %490 = vst [vmem:[#allocation2 + $0x70] sm:$0xff] %v474
        %491 = vst [vmem:[#allocation2 + $0x78] sm:$0xff] %v475
        // Predicated region
        $region37: #{model_forward.5} parent=31 // pred_check
          %p492 = pneg %p247
        $region38: #{model_forward.5} parent=31 // pred_check_branch
          %494 = sbr.rel (%p492) target = $region40
        $region39: #{model_forward.5} parent=31 // pred_region
          %v495 = vld [vmem:[#allocation2] sm:$0xff]
          %v496 = vld [vmem:[#allocation2 + $0x8] sm:$0xff]
          %v497 = vld [vmem:[#allocation2 + $0x10] sm:$0xff]
          %v498 = vld [vmem:[#allocation2 + $0x18] sm:$0xff]
          %v499 = vld [vmem:[#allocation2 + $0x20] sm:$0xff]
          %v500 = vld [vmem:[#allocation2 + $0x28] sm:$0xff]
          %v501 = vld [vmem:[#allocation2 + $0x30] sm:$0xff]
          %v502 = vld [vmem:[#allocation2 + $0x38] sm:$0xff]
          %v503 = vld [vmem:[#allocation2 + $0x40] sm:$0xff]
          %v504 = vld [vmem:[#allocation2 + $0x48] sm:$0xff]
          %v505 = vld [vmem:[#allocation2 + $0x50] sm:$0xff]
          %v506 = vld [vmem:[#allocation2 + $0x58] sm:$0xff]
          %v507 = vld [vmem:[#allocation2 + $0x60] sm:$0xff]
          %v508 = vld [vmem:[#allocation2 + $0x68] sm:$0xff]
          %v509 = vld [vmem:[#allocation2 + $0x70] sm:$0xff]
          %v510 = vld [vmem:[#allocation2 + $0x78] sm:$0xff]
          %v511 = vld [vmem:[%s245] sm:$0x1]
          %v513 = vperm.slane %v511, 0
          %v515 = vadd.f32 %v495, %v513
          %v516 = vadd.f32 %v496, %v513
          %v517 = vadd.f32 %v497, %v513
          %v518 = vadd.f32 %v498, %v513
          %v519 = vadd.f32 %v499, %v513
          %v520 = vadd.f32 %v500, %v513
          %v521 = vadd.f32 %v501, %v513
          %v522 = vadd.f32 %v502, %v513
          %v523 = vadd.f32 %v503, %v513
          %v524 = vadd.f32 %v504, %v513
          %v525 = vadd.f32 %v505, %v513
          %v526 = vadd.f32 %v506, %v513
          %v527 = vadd.f32 %v507, %v513
          %v528 = vadd.f32 %v508, %v513
          %v529 = vadd.f32 %v509, %v513
          %v530 = vadd.f32 %v510, %v513
          %531 = vst [vmem:[%s224] sm:$0xff] %v515
          %532 = vst [vmem:[%s224 + $0x8] sm:$0xff] %v516
          %533 = vst [vmem:[%s224 + $0x10] sm:$0xff] %v517
          %534 = vst [vmem:[%s224 + $0x18] sm:$0xff] %v518
          %535 = vst [vmem:[%s224 + $0x20] sm:$0xff] %v519
          %536 = vst [vmem:[%s224 + $0x28] sm:$0xff] %v520
          %537 = vst [vmem:[%s224 + $0x30] sm:$0xff] %v521
          %538 = vst [vmem:[%s224 + $0x38] sm:$0xff] %v522
          %539 = vst [vmem:[%s224 + $0x40] sm:$0xff] %v523
          %540 = vst [vmem:[%s224 + $0x48] sm:$0xff] %v524
          %541 = vst [vmem:[%s224 + $0x50] sm:$0xff] %v525
          %542 = vst [vmem:[%s224 + $0x58] sm:$0xff] %v526
          %543 = vst [vmem:[%s224 + $0x60] sm:$0xff] %v527
          %544 = vst [vmem:[%s224 + $0x68] sm:$0xff] %v528
          %545 = vst [vmem:[%s224 + $0x70] sm:$0xff] %v529
          %546 = vst [vmem:[%s224 + $0x78] sm:$0xff] %v530
        $region40: #{model_forward.5} parent=31 // pred_fallthru
          _
        %s547 = sand.u32 %s125, 1
        %s548 = sand.u32 %s125, 1
        %s549 = smul.addr %s548, 128
        %s550 = scalar_lea.vmem [#allocation3], %s549
        // Predicated region
        $region41: #{model_forward.5} parent=31 // pred_check
          %p551 = pneg %p135
        $region42: #{model_forward.5} parent=31 // pred_check_branch
          %553 = sbr.rel (%p551) target = $region44
        $region43: #{model_forward.5} parent=31 // pred_region
          %s554 = smul.u32 16, %s19
          %s555 = smul.addr %s554, 4
          %s556 = sadd.s32 %s20, %s555
          %s557 = smul.addr %s556, 8
          %s558 = scalar_lea.vmem %s3, %s557
          // Predicated region
          $region45: #{model_forward.5} parent=43 // pred_check
            _
          $region46: #{model_forward.5} parent=43 // pred_check_branch
            %560 = sbr.rel (0) target = $region48
          $region47: #{model_forward.5} parent=43 // pred_region
            // Predicated region
            $region49: #{model_forward.5} parent=47 // pred_check
              _
            $region50: #{model_forward.5} parent=47 // pred_check_branch
              %562 = sbr.rel (0) target = $region52
            $region51: #{model_forward.5} parent=47 // pred_region
              // Predicated region
              $region64: #{model_forward.5} parent=51 // pred_check
                _
              $region65: #{model_forward.5} parent=51 // pred_check_branch
                %608 = sbr.rel (0) target = $region67
              $region66: #{model_forward.5} parent=51 // pred_region
                loop: start=0, step=1, limit=1
                $region68: #{model_forward.5} parent=66 // loop_pre_header
                  _
                $region69: #{model_forward.5} parent=66 // loop_header
                  %s610 = sphi 0, %s614
                  %p611 = scmp.ge.s32.totalorder %s610, 1
                  %s615 = sphi %s550, %s550
                  %s616 = sphi %s558, %s558
                $region70: #{model_forward.5} parent=66 // loop_header_branch
                  %613 = sbr.rel (%p611) target = $region74
                $region71: #{model_forward.5} parent=66 // loop_body
                  %v617 = vld [vmem:[%s615] sm:$0xff]
                  %618 = vst [vmem:[%s616] sm:$0xff] %v617
                  %v619 = vld [vmem:[%s615 + $0x8] sm:$0xff]
                  %620 = vst [vmem:[%s616 + $0x20] sm:$0xff] %v619
                  %v621 = vld [vmem:[%s615 + $0x10] sm:$0xff]
                  %622 = vst [vmem:[%s616 + $0x40] sm:$0xff] %v621
                  %v623 = vld [vmem:[%s615 + $0x18] sm:$0xff]
                  %624 = vst [vmem:[%s616 + $0x60] sm:$0xff] %v623
                  %v625 = vld [vmem:[%s615 + $0x20] sm:$0xff]
                  %626 = vst [vmem:[%s616 + $0x80] sm:$0xff] %v625
                  %v627 = vld [vmem:[%s615 + $0x28] sm:$0xff]
                  %628 = vst [vmem:[%s616 + $0xa0] sm:$0xff] %v627
                  %v629 = vld [vmem:[%s615 + $0x30] sm:$0xff]
                  %630 = vst [vmem:[%s616 + $0xc0] sm:$0xff] %v629
                  %v631 = vld [vmem:[%s615 + $0x38] sm:$0xff]
                  %632 = vst [vmem:[%s616 + $0xe0] sm:$0xff] %v631
                  %v633 = vld [vmem:[%s615 + $0x40] sm:$0xff]
                  %634 = vst [vmem:[%s616 + $0x100] sm:$0xff] %v633
                  %v635 = vld [vmem:[%s615 + $0x48] sm:$0xff]
                  %636 = vst [vmem:[%s616 + $0x120] sm:$0xff] %v635
                  %v637 = vld [vmem:[%s615 + $0x50] sm:$0xff]
                  %638 = vst [vmem:[%s616 + $0x140] sm:$0xff] %v637
                  %v639 = vld [vmem:[%s615 + $0x58] sm:$0xff]
                  %640 = vst [vmem:[%s616 + $0x160] sm:$0xff] %v639
                  %v641 = vld [vmem:[%s615 + $0x60] sm:$0xff]
                  %642 = vst [vmem:[%s616 + $0x180] sm:$0xff] %v641
                  %v643 = vld [vmem:[%s615 + $0x68] sm:$0xff]
                  %644 = vst [vmem:[%s616 + $0x1a0] sm:$0xff] %v643
                  %v645 = vld [vmem:[%s615 + $0x70] sm:$0xff]
                  %646 = vst [vmem:[%s616 + $0x1c0] sm:$0xff] %v645
                  %v647 = vld [vmem:[%s615 + $0x78] sm:$0xff]
                  %648 = vst [vmem:[%s616 + $0x1e0] sm:$0xff] %v647
                $region72: #{model_forward.5} parent=66 // loop_footer
                  %s614 = sadd.s32 1, %s610
                $region73: #{model_forward.5} parent=66 // loop_footer_branch
                  %609 = sbr.rel target = $region69
                $region74: #{model_forward.5} parent=66 // loop_exit
                  _
              $region67: #{model_forward.5} parent=51 // pred_fallthru
                _
              // Predicated region
              $region75: #{model_forward.5} parent=51 // pred_check
                _
              $region76: #{model_forward.5} parent=51 // pred_check_branch
                %650 = sbr.rel target = $region78
              $region77: #{model_forward.5} parent=51 // pred_region
                _
              $region78: #{model_forward.5} parent=51 // pred_fallthru
                _
            $region52: #{model_forward.5} parent=47 // pred_fallthru
              _
            // Predicated region
            $region53: #{model_forward.5} parent=47 // pred_check
              _
            $region54: #{model_forward.5} parent=47 // pred_check_branch
              %564 = sbr.rel target = $region56
            $region55: #{model_forward.5} parent=47 // pred_region
              %s566 = ssub.s32 256, 1
              loop: start=0, step=1, limit=1
              $region57: #{model_forward.5} parent=55 // loop_pre_header
                _
              $region58: #{model_forward.5} parent=55 // loop_header
                %s568 = sphi 0, %s572
                %p569 = scmp.ge.s32.totalorder %s568, 1
                %s573 = sphi %s550, %s550
                %s574 = sphi %s558, %s558
              $region59: #{model_forward.5} parent=55 // loop_header_branch
                %571 = sbr.rel (%p569) target = $region63
              $region60: #{model_forward.5} parent=55 // loop_body
                %v575 = vld [vmem:[%s573] sm:%s566]
                %576 = vst [vmem:[%s574] sm:%s566] %v575
                %v577 = vld [vmem:[%s573 + $0x8] sm:%s566]
                %578 = vst [vmem:[%s574 + $0x20] sm:%s566] %v577
                %v579 = vld [vmem:[%s573 + $0x10] sm:%s566]
                %580 = vst [vmem:[%s574 + $0x40] sm:%s566] %v579
                %v581 = vld [vmem:[%s573 + $0x18] sm:%s566]
                %582 = vst [vmem:[%s574 + $0x60] sm:%s566] %v581
                %v583 = vld [vmem:[%s573 + $0x20] sm:%s566]
                %584 = vst [vmem:[%s574 + $0x80] sm:%s566] %v583
                %v585 = vld [vmem:[%s573 + $0x28] sm:%s566]
                %586 = vst [vmem:[%s574 + $0xa0] sm:%s566] %v585
                %v587 = vld [vmem:[%s573 + $0x30] sm:%s566]
                %588 = vst [vmem:[%s574 + $0xc0] sm:%s566] %v587
                %v589 = vld [vmem:[%s573 + $0x38] sm:%s566]
                %590 = vst [vmem:[%s574 + $0xe0] sm:%s566] %v589
                %v591 = vld [vmem:[%s573 + $0x40] sm:%s566]
                %592 = vst [vmem:[%s574 + $0x100] sm:%s566] %v591
                %v593 = vld [vmem:[%s573 + $0x48] sm:%s566]
                %594 = vst [vmem:[%s574 + $0x120] sm:%s566] %v593
                %v595 = vld [vmem:[%s573 + $0x50] sm:%s566]
                %596 = vst [vmem:[%s574 + $0x140] sm:%s566] %v595
                %v597 = vld [vmem:[%s573 + $0x58] sm:%s566]
                %598 = vst [vmem:[%s574 + $0x160] sm:%s566] %v597
                %v599 = vld [vmem:[%s573 + $0x60] sm:%s566]
                %600 = vst [vmem:[%s574 + $0x180] sm:%s566] %v599
                %v601 = vld [vmem:[%s573 + $0x68] sm:%s566]
                %602 = vst [vmem:[%s574 + $0x1a0] sm:%s566] %v601
                %v603 = vld [vmem:[%s573 + $0x70] sm:%s566]
                %604 = vst [vmem:[%s574 + $0x1c0] sm:%s566] %v603
                %v605 = vld [vmem:[%s573 + $0x78] sm:%s566]
                %606 = vst [vmem:[%s574 + $0x1e0] sm:%s566] %v605
              $region61: #{model_forward.5} parent=55 // loop_footer
                %s572 = sadd.s32 1, %s568
              $region62: #{model_forward.5} parent=55 // loop_footer_branch
                %567 = sbr.rel target = $region58
              $region63: #{model_forward.5} parent=55 // loop_exit
                _
            $region56: #{model_forward.5} parent=47 // pred_fallthru
              _
          $region48: #{model_forward.5} parent=43 // pred_fallthru
            _
          %651 = vnop
        $region44: #{model_forward.5} parent=31 // pred_fallthru
          _
      $region32: #{model_forward.5} parent=5 // pred_fallthru
        _
      %p652 = scmp.le.s32.totalorder 2, %s9
      // Predicated region
      $region79: #{model_forward.5} parent=5 // pred_check
        %p653 = pneg %p652
      $region80: #{model_forward.5} parent=5 // pred_check_branch
        %655 = sbr.rel (%p653) target = $region82
      $region81: #{model_forward.5} parent=5 // pred_region
        %s656 = ssub.s32 %s9, 2
        // Predicated region
        $region83: #{model_forward.5} parent=81 // pred_check
          %p657 = pneg %p141
        $region84: #{model_forward.5} parent=81 // pred_check_branch
          %659 = sbr.rel (%p657) target = $region86
        $region85: #{model_forward.5} parent=81 // pred_region
          %s660 = sand.u32 %s126, 1
          %s661 = sand.u32 %s126, 1
          %s662 = smul.addr %s661, 128
          %s663 = scalar_lea.vmem [#allocation3], %s662
        $region86: #{model_forward.5} parent=81 // pred_fallthru
          _
      $region82: #{model_forward.5} parent=5 // pred_fallthru
        _
    $region6: #{model_forward.5} parent=1 // loop_footer
      %s13 = sadd.s32 1, %s9
    $region7: #{model_forward.5} parent=1 // loop_footer_branch
      %8 = sbr.rel target = $region3
    $region8: #{model_forward.5} parent=1 // loop_exit
      _

// kernel: model_forward.7
$region0: #{model_forward.7}
  #allocation0 [shape = 'u32[]', space=smem, size = 0x4, offset = 0x4, fixed_abs, tag = 'smem constant byte address 0x4 - core index']
  #allocation1 [shape = 'u32[72,128]{1,0:T(1,128)}', space=vmem, size = 0x9000, scoped, tag = 'internal scratch']
  #allocation2 [shape = 'f32[128,128]{1,0:T(8,128)}', space=vmem, size = 0x10000, scoped, tag = 'scratch operand']
  %s0 = inlined_call_operand.vmem [shape: f32[256,128], index: 0, kind: input, shape index: {}]
  %s1 = inlined_call_operand.vmem [shape: bf16[512,128], index: 1, kind: input, shape index: {}]
  %s2 = inlined_call_operand.vmem [shape: f32[1,512], index: 2, kind: input, shape index: {}]
  %s3 = inlined_call_operand.vmem [shape: f32[256,512], index: 3, kind: output, shape index: {}]
  %s4 = sld [smem:[#allocation0]]
  $region87: #{model_forward.7} parent=0
    _
  %s6 = ssub.s32 1, %s4
  %s7 = scalar_select 0, %s6, %s4
  $region1: #{model_forward.7} parent=0
    #allocation3 [shape = 'u8[131072]{0}', space=vmem, size = 0x20000, scoped, tag = 'output window, operand 0']
    loop: start=0, step=1, limit=10
    $region2: #{model_forward.7} parent=1 // loop_pre_header
      _
    $region3: #{model_forward.7} parent=1 // loop_header
      %s9 = sphi 0, %s13
      %p10 = scmp.ge.s32.totalorder %s9, 10
      %s16 = sphi 0, %s35
      %s17 = sphi 0, %s31
      %s18 = sphi 0, %s27
      %s19 = sphi 0, %s16
      %s20 = sphi 0, %s17
      %s21 = sphi 0, %s18
      %s22 = sphi 0, %s19
      %s23 = sphi 0, %s20
      %s24 = sphi 0, %s21
      %s40 = sphi 0, %s42
      %s43 = sphi 0, %s40
      %s44 = sphi 0, %s43
      %s60 = sphi 0, %s44
      %s68 = sphi 0, %s70
      %s71 = sphi 0, %s68
      %s72 = sphi 0, %s71
      %s88 = sphi 0, %s72
      %s94 = sphi 0, %s96
      %s97 = sphi 0, %s94
      %s98 = sphi 0, %s97
      %s114 = sphi 0, %s98
      %s122 = sphi 0, %s124
      %s125 = sphi 0, %s122
      %s126 = sphi 0, %s125
      %s142 = sphi 0, %s126
    $region4: #{model_forward.7} parent=1 // loop_header_branch
      %12 = sbr.rel (%p10) target = $region8
    $region5: #{model_forward.7} parent=1 // loop_body
      %s14 = ssub.s32 %s9, 1
      %s15 = ssub.s32 %s9, 2
      %s25 = sadd.s32 1, %s18
      %p26 = scmp.ge.s32.totalorder %s25, 1
      %s27 = scalar_select %p26, 0, %s25
      %s28 = sadd.s32 1, %s17
      %s29 = scalar_select %p26, %s28, %s17
      %p30 = scmp.ge.s32.totalorder %s29, 4
      %s31 = scalar_select %p30, 0, %s29
      %s32 = sadd.s32 1, %s16
      %s33 = scalar_select %p30, %s32, %s16
      %p34 = scmp.ge.s32.totalorder %s33, 2
      %s35 = scalar_select %p34, 0, %s33
      %s36 = ssub.s32 %s16, %s35
      %s37 = ssub.s32 %s18, %s27
      %s38 = sor.u32 %s36, %s37
      %p39 = scmp.eq.s32.totalorder %s38, 0
      %s41 = sadd.s32 %s40, 1
      %s42 = scalar_select %p39, %s40, %s41
      %p45 = pneg %p39
      %p46 = scmp.eq.s32.totalorder %s9, 7
      %p47 = por %p45, %p46
      %p48 = scmp.ne.s32.totalorder %s40, %s43
      %p49 = scmp.eq.s32.totalorder %s9, 0
      %p50 = por %p48, %p49
      %p51 = scmp.ne.s32.totalorder %s40, %s43
      %p52 = scmp.eq.s32.totalorder %s14, 7
      %p53 = por %p51, %p52
      %p54 = scmp.ne.s32.totalorder %s43, %s44
      %p55 = scmp.eq.s32.totalorder %s14, 0
      %p56 = por %p54, %p55
      %p57 = scmp.ne.s32.totalorder %s43, %s44
      %p58 = scmp.eq.s32.totalorder %s15, 7
      %p59 = por %p57, %p58
      %p61 = scmp.ne.s32.totalorder %s44, %s60
      %p62 = scmp.eq.s32.totalorder %s15, 0
      %p63 = por %p61, %p62
      %s64 = ssub.s32 %s17, %s31
      %s65 = ssub.s32 %s18, %s27
      %s66 = sor.u32 %s64, %s65
      %p67 = scmp.eq.s32.totalorder %s66, 0
      %s69 = sadd.s32 %s68, 1
      %s70 = scalar_select %p67, %s68, %s69
      %p73 = pneg %p67
      %p74 = scmp.eq.s32.totalorder %s9, 7
      %p75 = por %p73, %p74
      %p76 = scmp.ne.s32.totalorder %s68, %s71
      %p77 = scmp.eq.s32.totalorder %s9, 0
      %p78 = por %p76, %p77
      %p79 = scmp.ne.s32.totalorder %s68, %s71
      %p80 = scmp.eq.s32.totalorder %s14, 7
      %p81 = por %p79, %p80
      %p82 = scmp.ne.s32.totalorder %s71, %s72
      %p83 = scmp.eq.s32.totalorder %s14, 0
      %p84 = por %p82, %p83
      %p85 = scmp.ne.s32.totalorder %s71, %s72
      %p86 = scmp.eq.s32.totalorder %s15, 7
      %p87 = por %p85, %p86
      %p89 = scmp.ne.s32.totalorder %s72, %s88
      %p90 = scmp.eq.s32.totalorder %s15, 0
      %p91 = por %p89, %p90
      %s92 = ssub.s32 %s17, %s31
      %p93 = scmp.eq.s32.totalorder %s92, 0
      %s95 = sadd.s32 %s94, 1
      %s96 = scalar_select %p93, %s94, %s95
      %p99 = pneg %p93
      %p100 = scmp.eq.s32.totalorder %s9, 7
      %p101 = por %p99, %p100
      %p102 = scmp.ne.s32.totalorder %s94, %s97
      %p103 = scmp.eq.s32.totalorder %s9, 0
      %p104 = por %p102, %p103
      %p105 = scmp.ne.s32.totalorder %s94, %s97
      %p106 = scmp.eq.s32.totalorder %s14, 7
      %p107 = por %p105, %p106
      %p108 = scmp.ne.s32.totalorder %s97, %s98
      %p109 = scmp.eq.s32.totalorder %s14, 0
      %p110 = por %p108, %p109
      %p111 = scmp.ne.s32.totalorder %s97, %s98
      %p112 = scmp.eq.s32.totalorder %s15, 7
      %p113 = por %p111, %p112
      %p115 = scmp.ne.s32.totalorder %s98, %s114
      %p116 = scmp.eq.s32.totalorder %s15, 0
      %p117 = por %p115, %p116
      %s118 = ssub.s32 %s16, %s35
      %s119 = ssub.s32 %s17, %s31
      %s120 = sor.u32 %s118, %s119
      %p121 = scmp.eq.s32.totalorder %s120, 0
      %s123 = sadd.s32 %s122, 1
      %s124 = scalar_select %p121, %s122, %s123
      %p127 = pneg %p121
      %p128 = scmp.eq.s32.totalorder %s9, 7
      %p129 = por %p127, %p128
      %p130 = scmp.ne.s32.totalorder %s122, %s125
      %p131 = scmp.eq.s32.totalorder %s9, 0
      %p132 = por %p130, %p131
      %p133 = scmp.ne.s32.totalorder %s122, %s125
      %p134 = scmp.eq.s32.totalorder %s14, 7
      %p135 = por %p133, %p134
      %p136 = scmp.ne.s32.totalorder %s125, %s126
      %p137 = scmp.eq.s32.totalorder %s14, 0
      %p138 = por %p136, %p137
      %p139 = scmp.ne.s32.totalorder %s125, %s126
      %p140 = scmp.eq.s32.totalorder %s15, 7
      %p141 = por %p139, %p140
      %p143 = scmp.ne.s32.totalorder %s126, %s142
      %p144 = scmp.eq.s32.totalorder %s15, 0
      %p145 = por %p143, %p144
      %p146 = scmp.le.s32.totalorder 1, %s9
      %p147 = scmp.lt.s32.totalorder %s9, 9
      %p148 = pnand %p146, %p147
      %p149 = pneg %p148
      // Predicated region
      $region9: #{model_forward.7} parent=5 // pred_check
        _
      $region10: #{model_forward.7} parent=5 // pred_check_branch
        %151 = sbr.rel (%p148) target = $region12
      $region11: #{model_forward.7} parent=5 // pred_region
        %s152 = ssub.s32 %s9, 1
      $region12: #{model_forward.7} parent=5 // pred_fallthru
        _
      %p153 = scmp.lt.s32.totalorder %s9, 8
      // Predicated region
      $region13: #{model_forward.7} parent=5 // pred_check
        %p154 = pneg %p153
      $region14: #{model_forward.7} parent=5 // pred_check_branch
        %156 = sbr.rel (%p154) target = $region16
      $region15: #{model_forward.7} parent=5 // pred_region
        // Predicated region
        $region17: #{model_forward.7} parent=15 // pred_check
          %p157 = pneg %p50
        $region18: #{model_forward.7} parent=15 // pred_check_branch
          %159 = sbr.rel (%p157) target = $region20
        $region19: #{model_forward.7} parent=15 // pred_region
          %s160 = smul.u32 16, %s16
          %p161 = scmp.lt.s32.totalorder %s160, 31
          %s162 = scalar_select %p161, %s160, 31
          %p163 = scmp.lt.s32.totalorder %s18, 0
          %s164 = scalar_select %p163, %s18, 0
          %s165 = sadd.s32 %s164, %s162
          %s166 = smul.addr %s165, 8
          %s167 = scalar_lea.vmem %s0, %s166
          %s168 = smul.u32 16, %s16
        $region20: #{model_forward.7} parent=15 // pred_fallthru
          _
        // Predicated region
        $region21: #{model_forward.7} parent=15 // pred_check
          %p169 = pneg %p78
        $region22: #{model_forward.7} parent=15 // pred_check_branch
          %171 = sbr.rel (%p169) target = $region24
        $region23: #{model_forward.7} parent=15 // pred_region
          %s172 = smul.u32 16, %s17
          %p173 = scmp.lt.s32.totalorder %s172, 63
          %s174 = scalar_select %p173, %s172, 63
          %p175 = scmp.lt.s32.totalorder %s18, 0
          %s176 = scalar_select %p175, %s18, 0
          %s177 = sadd.s32 %s176, %s174
          %s178 = smul.addr %s177, 4
          %s179 = scalar_lea.vmem %s1, %s178
          %s180 = smul.u32 16, %s17
        $region24: #{model_forward.7} parent=15 // pred_fallthru
          _
        // Predicated region
        $region25: #{model_forward.7} parent=15 // pred_check
          %p181 = pneg %p104
        $region26: #{model_forward.7} parent=15 // pred_check_branch
          %183 = sbr.rel (%p181) target = $region28
        $region27: #{model_forward.7} parent=15 // pred_region
          %p184 = scmp.lt.s32.totalorder %s17, 3
          %s185 = scalar_select %p184, %s17, 3
          %s186 = scalar_lea.vmem %s2, %s185
        $region28: #{model_forward.7} parent=15 // pred_fallthru
          _
      $region16: #{model_forward.7} parent=5 // pred_fallthru
        _
      %p187 = scmp.le.s32.totalorder 1, %s9
      %p188 = scmp.lt.s32.totalorder %s9, 9
      %p189 = pnand %p187, %p188
      %p190 = pneg %p189
      // Predicated region
      $region29: #{model_forward.7} parent=5 // pred_check
        _
      $region30: #{model_forward.7} parent=5 // pred_check_branch
        %192 = sbr.rel (%p189) target = $region32
      $region31: #{model_forward.7} parent=5 // pred_region
        %s193 = ssub.s32 %s9, 1
        %s194 = smul.u32 16, %s19
        %p195 = scmp.lt.s32.totalorder %s194, 31
        %s196 = scalar_select %p195, %s194, 31
        %p197 = scmp.lt.s32.totalorder %s21, 0
        %s198 = scalar_select %p197, %s21, 0
        %s199 = sadd.s32 %s198, %s196
        %s200 = smul.addr %s199, 8
        %s201 = scalar_lea.vmem %s0, %s200
        %p202 = pneg %p56
        %p203 = pneg %p53
        %s204 = smul.u32 16, %s20
        %p205 = scmp.lt.s32.totalorder %s204, 63
        %s206 = scalar_select %p205, %s204, 63
        %p207 = scmp.lt.s32.totalorder %s21, 0
        %s208 = scalar_select %p207, %s21, 0
        %s209 = sadd.s32 %s208, %s206
        %s210 = smul.addr %s209, 4
        %s211 = scalar_lea.vmem %s1, %s210
        %p212 = pneg %p84
        %p213 = pneg %p81
        %p214 = scmp.lt.s32.totalorder %s20, 3
        %s215 = scalar_select %p214, %s20, 3
        %s216 = scalar_lea.vmem %s2, %s215
        %p217 = pneg %p110
        %p218 = pneg %p107
        %p219 = pneg %p138
        %p220 = pneg %p135
        %s221 = sand.u32 %s125, 1
        %s222 = sand.u32 %s125, 1
        %s223 = smul.addr %s222, 128
        %s224 = scalar_lea.vmem [#allocation3], %s223
        %s225 = smul.u32 16, %s19
        %p226 = scmp.lt.s32.totalorder %s225, 31
        %s227 = scalar_select %p226, %s225, 31
        %p228 = scmp.lt.s32.totalorder %s21, 0
        %s229 = scalar_select %p228, %s21, 0
        %s230 = sadd.s32 %s229, %s227
        %s231 = smul.addr %s230, 8
        %s232 = scalar_lea.vmem %s0, %s231
        %s233 = smul.u32 16, %s19
        %s234 = smul.u32 16, %s20
        %p235 = scmp.lt.s32.totalorder %s234, 63
        %s236 = scalar_select %p235, %s234, 63
        %p237 = scmp.lt.s32.totalorder %s21, 0
        %s238 = scalar_select %p237, %s21, 0
        %s239 = sadd.s32 %s238, %s236
        %s240 = smul.addr %s239, 4
        %s241 = scalar_lea.vmem %s1, %s240
        %s242 = smul.u32 16, %s20
        %p243 = scmp.lt.s32.totalorder %s20, 3
        %s244 = scalar_select %p243, %s20, 3
        %s245 = scalar_lea.vmem %s2, %s244
        %s246 = smul.u32 16, %s19
        %p247 = scmp.eq.s32.totalorder %s21, 0
        // Predicated region
        $region33: #{model_forward.7} parent=31 // pred_check
          %p248 = pneg %p247
        $region34: #{model_forward.7} parent=31 // pred_check_branch
          %250 = sbr.rel (%p248) target = $region36
        $region35: #{model_forward.7} parent=31 // pred_region
          %251 = vst [vmem:[#allocation2] sm:$0xff] 0.0
          %252 = vst [vmem:[#allocation2 + $0x8] sm:$0xff] 0.0
          %253 = vst [vmem:[#allocation2 + $0x10] sm:$0xff] 0.0
          %254 = vst [vmem:[#allocation2 + $0x18] sm:$0xff] 0.0
          %255 = vst [vmem:[#allocation2 + $0x20] sm:$0xff] 0.0
          %256 = vst [vmem:[#allocation2 + $0x28] sm:$0xff] 0.0
          %257 = vst [vmem:[#allocation2 + $0x30] sm:$0xff] 0.0
          %258 = vst [vmem:[#allocation2 + $0x38] sm:$0xff] 0.0
          %259 = vst [vmem:[#allocation2 + $0x40] sm:$0xff] 0.0
          %260 = vst [vmem:[#allocation2 + $0x48] sm:$0xff] 0.0
          %261 = vst [vmem:[#allocation2 + $0x50] sm:$0xff] 0.0
          %262 = vst [vmem:[#allocation2 + $0x58] sm:$0xff] 0.0
          %263 = vst [vmem:[#allocation2 + $0x60] sm:$0xff] 0.0
          %264 = vst [vmem:[#allocation2 + $0x68] sm:$0xff] 0.0
          %265 = vst [vmem:[#allocation2 + $0x70] sm:$0xff] 0.0
          %266 = vst [vmem:[#allocation2 + $0x78] sm:$0xff] 0.0
        $region36: #{model_forward.7} parent=31 // pred_fallthru
          _
        %v267 = vld [vmem:[%s232] sm:$0xff]
        %v268 = vld [vmem:[%s232 + $0x8] sm:$0xff]
        %v269 = vld [vmem:[%s232 + $0x10] sm:$0xff]
        %v270 = vld [vmem:[%s232 + $0x18] sm:$0xff]
        %v271 = vld [vmem:[%s232 + $0x20] sm:$0xff]
        %v272 = vld [vmem:[%s232 + $0x28] sm:$0xff]
        %v273 = vld [vmem:[%s232 + $0x30] sm:$0xff]
        %v274 = vld [vmem:[%s232 + $0x38] sm:$0xff]
        %v275 = vld [vmem:[%s232 + $0x40] sm:$0xff]
        %v276 = vld [vmem:[%s232 + $0x48] sm:$0xff]
        %v277 = vld [vmem:[%s232 + $0x50] sm:$0xff]
        %v278 = vld [vmem:[%s232 + $0x58] sm:$0xff]
        %v279 = vld [vmem:[%s232 + $0x60] sm:$0xff]
        %v280 = vld [vmem:[%s232 + $0x68] sm:$0xff]
        %v281 = vld [vmem:[%s232 + $0x70] sm:$0xff]
        %v282 = vld [vmem:[%s232 + $0x78] sm:$0xff]
        %v283 = vpack.c.bf16 %v268, %v267
        %v284 = vpack.c.bf16 %v270, %v269
        %v285 = vpack.c.bf16 %v272, %v271
        %v286 = vpack.c.bf16 %v274, %v273
        %v287 = vpack.c.bf16 %v276, %v275
        %v288 = vpack.c.bf16 %v278, %v277
        %v289 = vpack.c.bf16 %v280, %v279
        %v290 = vpack.c.bf16 %v282, %v281
        %v291 = vld [vmem:[#allocation2] sm:$0xff]
        %v292 = vld [vmem:[#allocation2 + $0x8] sm:$0xff]
        %v293 = vld [vmem:[#allocation2 + $0x10] sm:$0xff]
        %v294 = vld [vmem:[#allocation2 + $0x18] sm:$0xff]
        %v295 = vld [vmem:[#allocation2 + $0x20] sm:$0xff]
        %v296 = vld [vmem:[#allocation2 + $0x28] sm:$0xff]
        %v297 = vld [vmem:[#allocation2 + $0x30] sm:$0xff]
        %v298 = vld [vmem:[#allocation2 + $0x38] sm:$0xff]
        %v299 = vld [vmem:[#allocation2 + $0x40] sm:$0xff]
        %v300 = vld [vmem:[#allocation2 + $0x48] sm:$0xff]
        %v301 = vld [vmem:[#allocation2 + $0x50] sm:$0xff]
        %v302 = vld [vmem:[#allocation2 + $0x58] sm:$0xff]
        %v303 = vld [vmem:[#allocation2 + $0x60] sm:$0xff]
        %v304 = vld [vmem:[#allocation2 + $0x68] sm:$0xff]
        %v305 = vld [vmem:[#allocation2 + $0x70] sm:$0xff]
        %v306 = vld [vmem:[#allocation2 + $0x78] sm:$0xff]
        %v307 = vld [vmem:[%s241] sm:$0xf]
        %v308 = vld [vmem:[%s241 + $0x4] sm:$0xf]
        %v309 = vld [vmem:[%s241 + $0x8] sm:$0xf]
        %v310 = vld [vmem:[%s241 + $0xc] sm:$0xf]
        %v311 = vld [vmem:[%s241 + $0x10] sm:$0xf]
        %v312 = vld [vmem:[%s241 + $0x14] sm:$0xf]
        %v313 = vld [vmem:[%s241 + $0x18] sm:$0xf]
        %v314 = vld [vmem:[%s241 + $0x1c] sm:$0xf]
        %v315 = vld [vmem:[%s241 + $0x20] sm:$0xf]
        %v316 = vld [vmem:[%s241 + $0x24] sm:$0xf]
        %v317 = vld [vmem:[%s241 + $0x28] sm:$0xf]
        %v318 = vld [vmem:[%s241 + $0x2c] sm:$0xf]
        %v319 = vld [vmem:[%s241 + $0x30] sm:$0xf]
        %v320 = vld [vmem:[%s241 + $0x34] sm:$0xf]
        %v321 = vld [vmem:[%s241 + $0x38] sm:$0xf]
        %v322 = vld [vmem:[%s241 + $0x3c] sm:$0xf]
        %v339 = vunpack.c.l.b16 %v307
        %v340 = vunpack.c.l.b16 %v308
        %v341 = vunpack.c.l.b16 %v309
        %v342 = vunpack.c.l.b16 %v310
        %v343 = vunpack.c.l.b16 %v311
        %v344 = vunpack.c.l.b16 %v312
        %v345 = vunpack.c.l.b16 %v313
        %v346 = vunpack.c.l.b16 %v314
        %v347 = vunpack.c.l.b16 %v315
        %v348 = vunpack.c.l.b16 %v316
        %v349 = vunpack.c.l.b16 %v317
        %v350 = vunpack.c.l.b16 %v318
        %v351 = vunpack.c.l.b16 %v319
        %v352 = vunpack.c.l.b16 %v320
        %v353 = vunpack.c.l.b16 %v321
        %v354 = vunpack.c.l.b16 %v322
        %v355 = vpack.c.b16 %v340, %v339
        %v356 = vpack.c.b16 %v342, %v341
        %v357 = vpack.c.b16 %v344, %v343
        %v358 = vpack.c.b16 %v346, %v345
        %v359 = vpack.c.b16 %v348, %v347
        %v360 = vpack.c.b16 %v350, %v349
        %v361 = vpack.c.b16 %v352, %v351
        %v362 = vpack.c.b16 %v354, %v353
        %371 = vmatpush.bf16.xpose.msra.mxu0 %v362
        %372 = vmatpush.bf16.xpose.msra.mxu0 %v361
        %373 = vmatpush.bf16.xpose.msra.mxu0 %v360
        %374 = vmatpush.bf16.xpose.msra.mxu0 %v359
        %375 = vmatpush.bf16.xpose.msra.mxu0 %v358
        %376 = vmatpush.bf16.xpose.msra.mxu0 %v357
        %377 = vmatpush.bf16.xpose.msra.mxu0 %v356
        %378 = vmatpush.bf16.xpose.msra.mxu0 %v355
        %379 = vmatmul.bf16.gmra.mxu0 %v283
        %v380 = vpop.f32.mrf.mxu0
        %v381 = vadd.f32 0.0, %v380
        %v382 = vpop.f32.mrf.mxu0
        %v383 = vadd.f32 0.0, %v382
        %384 = vmatmul.bf16.gmra.mxu0 %v284
        %v385 = vpop.f32.mrf.mxu0
        %v386 = vadd.f32 0.0, %v385
        %v387 = vpop.f32.mrf.mxu0
        %v388 = vadd.f32 0.0, %v387
        %389 = vmatmul.bf16.gmra.mxu0 %v285
        %v390 = vpop.f32.mrf.mxu0
        %v391 = vadd.f32 0.0, %v390
        %v392 = vpop.f32.mrf.mxu0
        %v393 = vadd.f32 0.0, %v392
        %394 = vmatmul.bf16.gmra.mxu0 %v286
        %v395 = vpop.f32.mrf.mxu0
        %v396 = vadd.f32 0.0, %v395
        %v397 = vpop.f32.mrf.mxu0
        %v398 = vadd.f32 0.0, %v397
        %399 = vmatmul.bf16.gmra.mxu0 %v287
        %v400 = vpop.f32.mrf.mxu0
        %v401 = vadd.f32 0.0, %v400
        %v402 = vpop.f32.mrf.mxu0
        %v403 = vadd.f32 0.0, %v402
        %404 = vmatmul.bf16.gmra.mxu0 %v288
        %v405 = vpop.f32.mrf.mxu0
        %v406 = vadd.f32 0.0, %v405
        %v407 = vpop.f32.mrf.mxu0
        %v408 = vadd.f32 0.0, %v407
        %409 = vmatmul.bf16.gmra.mxu0 %v289
        %v410 = vpop.f32.mrf.mxu0
        %v411 = vadd.f32 0.0, %v410
        %v412 = vpop.f32.mrf.mxu0
        %v413 = vadd.f32 0.0, %v412
        %414 = vmatmul.bf16.gmra.mxu0 %v290
        %v415 = vpop.f32.mrf.mxu0
        %v416 = vadd.f32 0.0, %v415
        %v417 = vpop.f32.mrf.mxu0
        %v418 = vadd.f32 0.0, %v417
        %419 = vdwg.mxu0
        %v420 = vadd.f32 %v291, %v381
        %v421 = vadd.f32 %v292, %v383
        %v422 = vadd.f32 %v293, %v386
        %v423 = vadd.f32 %v294, %v388
        %v424 = vadd.f32 %v295, %v391
        %v425 = vadd.f32 %v296, %v393
        %v426 = vadd.f32 %v297, %v396
        %v427 = vadd.f32 %v298, %v398
        %v428 = vadd.f32 %v299, %v401
        %v429 = vadd.f32 %v300, %v403
        %v430 = vadd.f32 %v301, %v406
        %v431 = vadd.f32 %v302, %v408
        %v432 = vadd.f32 %v303, %v411
        %v433 = vadd.f32 %v304, %v413
        %v434 = vadd.f32 %v305, %v416
        %v435 = vadd.f32 %v306, %v418
        %436 = vst [vmem:[#allocation2] sm:$0xff] %v420
        %437 = vst [vmem:[#allocation2 + $0x8] sm:$0xff] %v421
        %438 = vst [vmem:[#allocation2 + $0x10] sm:$0xff] %v422
        %439 = vst [vmem:[#allocation2 + $0x18] sm:$0xff] %v423
        %440 = vst [vmem:[#allocation2 + $0x20] sm:$0xff] %v424
        %441 = vst [vmem:[#allocation2 + $0x28] sm:$0xff] %v425
        %442 = vst [vmem:[#allocation2 + $0x30] sm:$0xff] %v426
        %443 = vst [vmem:[#allocation2 + $0x38] sm:$0xff] %v427
        %444 = vst [vmem:[#allocation2 + $0x40] sm:$0xff] %v428
        %445 = vst [vmem:[#allocation2 + $0x48] sm:$0xff] %v429
        %446 = vst [vmem:[#allocation2 + $0x50] sm:$0xff] %v430
        %447 = vst [vmem:[#allocation2 + $0x58] sm:$0xff] %v431
        %448 = vst [vmem:[#allocation2 + $0x60] sm:$0xff] %v432
        %449 = vst [vmem:[#allocation2 + $0x68] sm:$0xff] %v433
        %450 = vst [vmem:[#allocation2 + $0x70] sm:$0xff] %v434
        %451 = vst [vmem:[#allocation2 + $0x78] sm:$0xff] %v435
        // Predicated region
        $region37: #{model_forward.7} parent=31 // pred_check
          %p452 = pneg %p247
        $region38: #{model_forward.7} parent=31 // pred_check_branch
          %454 = sbr.rel (%p452) target = $region40
        $region39: #{model_forward.7} parent=31 // pred_region
          %v455 = vld [vmem:[#allocation2] sm:$0xff]
          %v456 = vld [vmem:[#allocation2 + $0x8] sm:$0xff]
          %v457 = vld [vmem:[#allocation2 + $0x10] sm:$0xff]
          %v458 = vld [vmem:[#allocation2 + $0x18] sm:$0xff]
          %v459 = vld [vmem:[#allocation2 + $0x20] sm:$0xff]
          %v460 = vld [vmem:[#allocation2 + $0x28] sm:$0xff]
          %v461 = vld [vmem:[#allocation2 + $0x30] sm:$0xff]
          %v462 = vld [vmem:[#allocation2 + $0x38] sm:$0xff]
          %v463 = vld [vmem:[#allocation2 + $0x40] sm:$0xff]
          %v464 = vld [vmem:[#allocation2 + $0x48] sm:$0xff]
          %v465 = vld [vmem:[#allocation2 + $0x50] sm:$0xff]
          %v466 = vld [vmem:[#allocation2 + $0x58] sm:$0xff]
          %v467 = vld [vmem:[#allocation2 + $0x60] sm:$0xff]
          %v468 = vld [vmem:[#allocation2 + $0x68] sm:$0xff]
          %v469 = vld [vmem:[#allocation2 + $0x70] sm:$0xff]
          %v470 = vld [vmem:[#allocation2 + $0x78] sm:$0xff]
          %v471 = vld [vmem:[%s245] sm:$0x1]
          %v473 = vperm.slane %v471, 0
          %v475 = vadd.f32 %v455, %v473
          %v476 = vadd.f32 %v456, %v473
          %v477 = vadd.f32 %v457, %v473
          %v478 = vadd.f32 %v458, %v473
          %v479 = vadd.f32 %v459, %v473
          %v480 = vadd.f32 %v460, %v473
          %v481 = vadd.f32 %v461, %v473
          %v482 = vadd.f32 %v462, %v473
          %v483 = vadd.f32 %v463, %v473
          %v484 = vadd.f32 %v464, %v473
          %v485 = vadd.f32 %v465, %v473
          %v486 = vadd.f32 %v466, %v473
          %v487 = vadd.f32 %v467, %v473
          %v488 = vadd.f32 %v468, %v473
          %v489 = vadd.f32 %v469, %v473
          %v490 = vadd.f32 %v470, %v473
          %491 = vst [vmem:[%s224] sm:$0xff] %v475
          %492 = vst [vmem:[%s224 + $0x8] sm:$0xff] %v476
          %493 = vst [vmem:[%s224 + $0x10] sm:$0xff] %v477
          %494 = vst [vmem:[%s224 + $0x18] sm:$0xff] %v478
          %495 = vst [vmem:[%s224 + $0x20] sm:$0xff] %v479
          %496 = vst [vmem:[%s224 + $0x28] sm:$0xff] %v480
          %497 = vst [vmem:[%s224 + $0x30] sm:$0xff] %v481
          %498 = vst [vmem:[%s224 + $0x38] sm:$0xff] %v482
          %499 = vst [vmem:[%s224 + $0x40] sm:$0xff] %v483
          %500 = vst [vmem:[%s224 + $0x48] sm:$0xff] %v484
          %501 = vst [vmem:[%s224 + $0x50] sm:$0xff] %v485
          %502 = vst [vmem:[%s224 + $0x58] sm:$0xff] %v486
          %503 = vst [vmem:[%s224 + $0x60] sm:$0xff] %v487
          %504 = vst [vmem:[%s224 + $0x68] sm:$0xff] %v488
          %505 = vst [vmem:[%s224 + $0x70] sm:$0xff] %v489
          %506 = vst [vmem:[%s224 + $0x78] sm:$0xff] %v490
        $region40: #{model_forward.7} parent=31 // pred_fallthru
          _
        %s507 = sand.u32 %s125, 1
        %s508 = sand.u32 %s125, 1
        %s509 = smul.addr %s508, 128
        %s510 = scalar_lea.vmem [#allocation3], %s509
        // Predicated region
        $region41: #{model_forward.7} parent=31 // pred_check
          %p511 = pneg %p135
        $region42: #{model_forward.7} parent=31 // pred_check_branch
          %513 = sbr.rel (%p511) target = $region44
        $region43: #{model_forward.7} parent=31 // pred_region
          %s514 = smul.u32 16, %s19
          %s515 = smul.addr %s514, 4
          %s516 = sadd.s32 %s20, %s515
          %s517 = smul.addr %s516, 8
          %s518 = scalar_lea.vmem %s3, %s517
          // Predicated region
          $region45: #{model_forward.7} parent=43 // pred_check
            _
          $region46: #{model_forward.7} parent=43 // pred_check_branch
            %520 = sbr.rel (0) target = $region48
          $region47: #{model_forward.7} parent=43 // pred_region
            // Predicated region
            $region49: #{model_forward.7} parent=47 // pred_check
              _
            $region50: #{model_forward.7} parent=47 // pred_check_branch
              %522 = sbr.rel (0) target = $region52
            $region51: #{model_forward.7} parent=47 // pred_region
              // Predicated region
              $region64: #{model_forward.7} parent=51 // pred_check
                _
              $region65: #{model_forward.7} parent=51 // pred_check_branch
                %568 = sbr.rel (0) target = $region67
              $region66: #{model_forward.7} parent=51 // pred_region
                loop: start=0, step=1, limit=1
                $region68: #{model_forward.7} parent=66 // loop_pre_header
                  _
                $region69: #{model_forward.7} parent=66 // loop_header
                  %s570 = sphi 0, %s574
                  %p571 = scmp.ge.s32.totalorder %s570, 1
                  %s575 = sphi %s510, %s510
                  %s576 = sphi %s518, %s518
                $region70: #{model_forward.7} parent=66 // loop_header_branch
                  %573 = sbr.rel (%p571) target = $region74
                $region71: #{model_forward.7} parent=66 // loop_body
                  %v577 = vld [vmem:[%s575] sm:$0xff]
                  %578 = vst [vmem:[%s576] sm:$0xff] %v577
                  %v579 = vld [vmem:[%s575 + $0x8] sm:$0xff]
                  %580 = vst [vmem:[%s576 + $0x20] sm:$0xff] %v579
                  %v581 = vld [vmem:[%s575 + $0x10] sm:$0xff]
                  %582 = vst [vmem:[%s576 + $0x40] sm:$0xff] %v581
                  %v583 = vld [vmem:[%s575 + $0x18] sm:$0xff]
                  %584 = vst [vmem:[%s576 + $0x60] sm:$0xff] %v583
                  %v585 = vld [vmem:[%s575 + $0x20] sm:$0xff]
                  %586 = vst [vmem:[%s576 + $0x80] sm:$0xff] %v585
                  %v587 = vld [vmem:[%s575 + $0x28] sm:$0xff]
                  %588 = vst [vmem:[%s576 + $0xa0] sm:$0xff] %v587
                  %v589 = vld [vmem:[%s575 + $0x30] sm:$0xff]
                  %590 = vst [vmem:[%s576 + $0xc0] sm:$0xff] %v589
                  %v591 = vld [vmem:[%s575 + $0x38] sm:$0xff]
                  %592 = vst [vmem:[%s576 + $0xe0] sm:$0xff] %v591
                  %v593 = vld [vmem:[%s575 + $0x40] sm:$0xff]
                  %594 = vst [vmem:[%s576 + $0x100] sm:$0xff] %v593
                  %v595 = vld [vmem:[%s575 + $0x48] sm:$0xff]
                  %596 = vst [vmem:[%s576 + $0x120] sm:$0xff] %v595
                  %v597 = vld [vmem:[%s575 + $0x50] sm:$0xff]
                  %598 = vst [vmem:[%s576 + $0x140] sm:$0xff] %v597
                  %v599 = vld [vmem:[%s575 + $0x58] sm:$0xff]
                  %600 = vst [vmem:[%s576 + $0x160] sm:$0xff] %v599
                  %v601 = vld [vmem:[%s575 + $0x60] sm:$0xff]
                  %602 = vst [vmem:[%s576 + $0x180] sm:$0xff] %v601
                  %v603 = vld [vmem:[%s575 + $0x68] sm:$0xff]
                  %604 = vst [vmem:[%s576 + $0x1a0] sm:$0xff] %v603
                  %v605 = vld [vmem:[%s575 + $0x70] sm:$0xff]
                  %606 = vst [vmem:[%s576 + $0x1c0] sm:$0xff] %v605
                  %v607 = vld [vmem:[%s575 + $0x78] sm:$0xff]
                  %608 = vst [vmem:[%s576 + $0x1e0] sm:$0xff] %v607
                $region72: #{model_forward.7} parent=66 // loop_footer
                  %s574 = sadd.s32 1, %s570
                $region73: #{model_forward.7} parent=66 // loop_footer_branch
                  %569 = sbr.rel target = $region69
                $region74: #{model_forward.7} parent=66 // loop_exit
                  _
              $region67: #{model_forward.7} parent=51 // pred_fallthru
                _
              // Predicated region
              $region75: #{model_forward.7} parent=51 // pred_check
                _
              $region76: #{model_forward.7} parent=51 // pred_check_branch
                %610 = sbr.rel target = $region78
              $region77: #{model_forward.7} parent=51 // pred_region
                _
              $region78: #{model_forward.7} parent=51 // pred_fallthru
                _
            $region52: #{model_forward.7} parent=47 // pred_fallthru
              _
            // Predicated region
            $region53: #{model_forward.7} parent=47 // pred_check
              _
            $region54: #{model_forward.7} parent=47 // pred_check_branch
              %524 = sbr.rel target = $region56
            $region55: #{model_forward.7} parent=47 // pred_region
              %s526 = ssub.s32 256, 1
              loop: start=0, step=1, limit=1
              $region57: #{model_forward.7} parent=55 // loop_pre_header
                _
              $region58: #{model_forward.7} parent=55 // loop_header
                %s528 = sphi 0, %s532
                %p529 = scmp.ge.s32.totalorder %s528, 1
                %s533 = sphi %s510, %s510
                %s534 = sphi %s518, %s518
              $region59: #{model_forward.7} parent=55 // loop_header_branch
                %531 = sbr.rel (%p529) target = $region63
              $region60: #{model_forward.7} parent=55 // loop_body
                %v535 = vld [vmem:[%s533] sm:%s526]
                %536 = vst [vmem:[%s534] sm:%s526] %v535
                %v537 = vld [vmem:[%s533 + $0x8] sm:%s526]
                %538 = vst [vmem:[%s534 + $0x20] sm:%s526] %v537
                %v539 = vld [vmem:[%s533 + $0x10] sm:%s526]
                %540 = vst [vmem:[%s534 + $0x40] sm:%s526] %v539
                %v541 = vld [vmem:[%s533 + $0x18] sm:%s526]
                %542 = vst [vmem:[%s534 + $0x60] sm:%s526] %v541
                %v543 = vld [vmem:[%s533 + $0x20] sm:%s526]
                %544 = vst [vmem:[%s534 + $0x80] sm:%s526] %v543
                %v545 = vld [vmem:[%s533 + $0x28] sm:%s526]
                %546 = vst [vmem:[%s534 + $0xa0] sm:%s526] %v545
                %v547 = vld [vmem:[%s533 + $0x30] sm:%s526]
                %548 = vst [vmem:[%s534 + $0xc0] sm:%s526] %v547
                %v549 = vld [vmem:[%s533 + $0x38] sm:%s526]
                %550 = vst [vmem:[%s534 + $0xe0] sm:%s526] %v549
                %v551 = vld [vmem:[%s533 + $0x40] sm:%s526]
                %552 = vst [vmem:[%s534 + $0x100] sm:%s526] %v551
                %v553 = vld [vmem:[%s533 + $0x48] sm:%s526]
                %554 = vst [vmem:[%s534 + $0x120] sm:%s526] %v553
                %v555 = vld [vmem:[%s533 + $0x50] sm:%s526]
                %556 = vst [vmem:[%s534 + $0x140] sm:%s526] %v555
                %v557 = vld [vmem:[%s533 + $0x58] sm:%s526]
                %558 = vst [vmem:[%s534 + $0x160] sm:%s526] %v557
                %v559 = vld [vmem:[%s533 + $0x60] sm:%s526]
                %560 = vst [vmem:[%s534 + $0x180] sm:%s526] %v559
                %v561 = vld [vmem:[%s533 + $0x68] sm:%s526]
                %562 = vst [vmem:[%s534 + $0x1a0] sm:%s526] %v561
                %v563 = vld [vmem:[%s533 + $0x70] sm:%s526]
                %564 = vst [vmem:[%s534 + $0x1c0] sm:%s526] %v563
                %v565 = vld [vmem:[%s533 + $0x78] sm:%s526]
                %566 = vst [vmem:[%s534 + $0x1e0] sm:%s526] %v565
              $region61: #{model_forward.7} parent=55 // loop_footer
                %s532 = sadd.s32 1, %s528
              $region62: #{model_forward.7} parent=55 // loop_footer_branch
                %527 = sbr.rel target = $region58
              $region63: #{model_forward.7} parent=55 // loop_exit
                _
            $region56: #{model_forward.7} parent=47 // pred_fallthru
              _
          $region48: #{model_forward.7} parent=43 // pred_fallthru
            _
          %611 = vnop
        $region44: #{model_forward.7} parent=31 // pred_fallthru
          _
      $region32: #{model_forward.7} parent=5 // pred_fallthru
        _
      %p612 = scmp.le.s32.totalorder 2, %s9
      // Predicated region
      $region79: #{model_forward.7} parent=5 // pred_check
        %p613 = pneg %p612
      $region80: #{model_forward.7} parent=5 // pred_check_branch
        %615 = sbr.rel (%p613) target = $region82
      $region81: #{model_forward.7} parent=5 // pred_region
        %s616 = ssub.s32 %s9, 2
        // Predicated region
        $region83: #{model_forward.7} parent=81 // pred_check
          %p617 = pneg %p141
        $region84: #{model_forward.7} parent=81 // pred_check_branch
          %619 = sbr.rel (%p617) target = $region86
        $region85: #{model_forward.7} parent=81 // pred_region
          %s620 = sand.u32 %s126, 1
          %s621 = sand.u32 %s126, 1
          %s622 = smul.addr %s621, 128
          %s623 = scalar_lea.vmem [#allocation3], %s622
        $region86: #{model_forward.7} parent=81 // pred_fallthru
          _
      $region82: #{model_forward.7} parent=5 // pred_fallthru
        _
    $region6: #{model_forward.7} parent=1 // loop_footer
      %s13 = sadd.s32 1, %s9
    $region7: #{model_forward.7} parent=1 // loop_footer_branch
      %8 = sbr.rel target = $region3
    $region8: #{model_forward.7} parent=1 // loop_exit
      _

// kernel: model_forward.9
$region0: #{model_forward.9}
  #allocation0 [shape = 'u32[]', space=smem, size = 0x4, offset = 0x4, fixed_abs, tag = 'smem constant byte address 0x4 - core index']
  #allocation1 [shape = 'u32[72,128]{1,0:T(1,128)}', space=vmem, size = 0x9000, scoped, tag = 'internal scratch']
  #allocation2 [shape = 'f32[128,128]{1,0:T(8,128)}', space=vmem, size = 0x10000, scoped, tag = 'scratch operand']
  %s0 = inlined_call_operand.vmem [shape: f32[256,128], index: 0, kind: input, shape index: {}]
  %s1 = inlined_call_operand.vmem [shape: bf16[256,128], index: 1, kind: input, shape index: {}]
  %s2 = inlined_call_operand.vmem [shape: f32[1,256], index: 2, kind: input, shape index: {}]
  %s3 = inlined_call_operand.hbm [shape: f32[256,256], index: 3, kind: output, shape index: {}]
  %s4 = sld [smem:[#allocation0]]
  $region53: #{model_forward.9} parent=0
    _
  %s6 = ssub.s32 1, %s4
  %s7 = scalar_select 0, %s6, %s4
  $region1: #{model_forward.9} parent=0
    #allocation3 [shape = 'u8[131072]{0}', space=vmem, size = 0x20000, scoped, tag = 'output window, operand 0']
    #allocation4 [shape = 's32[2]{0}', space=sflag, size = 0x8, scoped, tag = 'scoped memory for model_forward.9']
    %8 = vsyncpa [#allocation4], 0
    %s9 = scalar_lea.sflag [#allocation4], 1
    %10 = vsyncpa %s9, 0
    loop: start=0, step=1, limit=6
    $region2: #{model_forward.9} parent=1 // loop_pre_header
      _
    $region3: #{model_forward.9} parent=1 // loop_header
      %s12 = sphi 0, %s16
      %p13 = scmp.ge.s32.totalorder %s12, 6
      %s19 = sphi 0, %s38
      %s20 = sphi 0, %s34
      %s21 = sphi 0, %s30
      %s22 = sphi 0, %s19
      %s23 = sphi 0, %s20
      %s24 = sphi 0, %s21
      %s25 = sphi 0, %s22
      %s26 = sphi 0, %s23
      %s27 = sphi 0, %s24
      %s43 = sphi 0, %s45
      %s46 = sphi 0, %s43
      %s47 = sphi 0, %s46
      %s63 = sphi 0, %s47
      %s71 = sphi 0, %s73
      %s74 = sphi 0, %s71
      %s75 = sphi 0, %s74
      %s91 = sphi 0, %s75
      %s97 = sphi 0, %s99
      %s100 = sphi 0, %s97
      %s101 = sphi 0, %s100
      %s117 = sphi 0, %s101
      %s125 = sphi 0, %s127
      %s128 = sphi 0, %s125
      %s129 = sphi 0, %s128
      %s145 = sphi 0, %s129
    $region4: #{model_forward.9} parent=1 // loop_header_branch
      %15 = sbr.rel (%p13) target = $region8
    $region5: #{model_forward.9} parent=1 // loop_body
      %s17 = ssub.s32 %s12, 1
      %s18 = ssub.s32 %s12, 2
      %s28 = sadd.s32 1, %s21
      %p29 = scmp.ge.s32.totalorder %s28, 1
      %s30 = scalar_select %p29, 0, %s28
      %s31 = sadd.s32 1, %s20
      %s32 = scalar_select %p29, %s31, %s20
      %p33 = scmp.ge.s32.totalorder %s32, 2
      %s34 = scalar_select %p33, 0, %s32
      %s35 = sadd.s32 1, %s19
      %s36 = scalar_select %p33, %s35, %s19
      %p37 = scmp.ge.s32.totalorder %s36, 2
      %s38 = scalar_select %p37, 0, %s36
      %s39 = ssub.s32 %s19, %s38
      %s40 = ssub.s32 %s21, %s30
      %s41 = sor.u32 %s39, %s40
      %p42 = scmp.eq.s32.totalorder %s41, 0
      %s44 = sadd.s32 %s43, 1
      %s45 = scalar_select %p42, %s43, %s44
      %p48 = pneg %p42
      %p49 = scmp.eq.s32.totalorder %s12, 3
      %p50 = por %p48, %p49
      %p51 = scmp.ne.s32.totalorder %s43, %s46
      %p52 = scmp.eq.s32.totalorder %s12, 0
      %p53 = por %p51, %p52
      %p54 = scmp.ne.s32.totalorder %s43, %s46
      %p55 = scmp.eq.s32.totalorder %s17, 3
      %p56 = por %p54, %p55
      %p57 = scmp.ne.s32.totalorder %s46, %s47
      %p58 = scmp.eq.s32.totalorder %s17, 0
      %p59 = por %p57, %p58
      %p60 = scmp.ne.s32.totalorder %s46, %s47
      %p61 = scmp.eq.s32.totalorder %s18, 3
      %p62 = por %p60, %p61
      %p64 = scmp.ne.s32.totalorder %s47, %s63
      %p65 = scmp.eq.s32.totalorder %s18, 0
      %p66 = por %p64, %p65
      %s67 = ssub.s32 %s20, %s34
      %s68 = ssub.s32 %s21, %s30
      %s69 = sor.u32 %s67, %s68
      %p70 = scmp.eq.s32.totalorder %s69, 0
      %s72 = sadd.s32 %s71, 1
      %s73 = scalar_select %p70, %s71, %s72
      %p76 = pneg %p70
      %p77 = scmp.eq.s32.totalorder %s12, 3
      %p78 = por %p76, %p77
      %p79 = scmp.ne.s32.totalorder %s71, %s74
      %p80 = scmp.eq.s32.totalorder %s12, 0
      %p81 = por %p79, %p80
      %p82 = scmp.ne.s32.totalorder %s71, %s74
      %p83 = scmp.eq.s32.totalorder %s17, 3
      %p84 = por %p82, %p83
      %p85 = scmp.ne.s32.totalorder %s74, %s75
      %p86 = scmp.eq.s32.totalorder %s17, 0
      %p87 = por %p85, %p86
      %p88 = scmp.ne.s32.totalorder %s74, %s75
      %p89 = scmp.eq.s32.totalorder %s18, 3
      %p90 = por %p88, %p89
      %p92 = scmp.ne.s32.totalorder %s75, %s91
      %p93 = scmp.eq.s32.totalorder %s18, 0
      %p94 = por %p92, %p93
      %s95 = ssub.s32 %s20, %s34
      %p96 = scmp.eq.s32.totalorder %s95, 0
      %s98 = sadd.s32 %s97, 1
      %s99 = scalar_select %p96, %s97, %s98
      %p102 = pneg %p96
      %p103 = scmp.eq.s32.totalorder %s12, 3
      %p104 = por %p102, %p103
      %p105 = scmp.ne.s32.totalorder %s97, %s100
      %p106 = scmp.eq.s32.totalorder %s12, 0
      %p107 = por %p105, %p106
      %p108 = scmp.ne.s32.totalorder %s97, %s100
      %p109 = scmp.eq.s32.totalorder %s17, 3
      %p110 = por %p108, %p109
      %p111 = scmp.ne.s32.totalorder %s100, %s101
      %p112 = scmp.eq.s32.totalorder %s17, 0
      %p113 = por %p111, %p112
      %p114 = scmp.ne.s32.totalorder %s100, %s101
      %p115 = scmp.eq.s32.totalorder %s18, 3
      %p116 = por %p114, %p115
      %p118 = scmp.ne.s32.totalorder %s101, %s117
      %p119 = scmp.eq.s32.totalorder %s18, 0
      %p120 = por %p118, %p119
      %s121 = ssub.s32 %s19, %s38
      %s122 = ssub.s32 %s20, %s34
      %s123 = sor.u32 %s121, %s122
      %p124 = scmp.eq.s32.totalorder %s123, 0
      %s126 = sadd.s32 %s125, 1
      %s127 = scalar_select %p124, %s125, %s126
      %p130 = pneg %p124
      %p131 = scmp.eq.s32.totalorder %s12, 3
      %p132 = por %p130, %p131
      %p133 = scmp.ne.s32.totalorder %s125, %s128
      %p134 = scmp.eq.s32.totalorder %s12, 0
      %p135 = por %p133, %p134
      %p136 = scmp.ne.s32.totalorder %s125, %s128
      %p137 = scmp.eq.s32.totalorder %s17, 3
      %p138 = por %p136, %p137
      %p139 = scmp.ne.s32.totalorder %s128, %s129
      %p140 = scmp.eq.s32.totalorder %s17, 0
      %p141 = por %p139, %p140
      %p142 = scmp.ne.s32.totalorder %s128, %s129
      %p143 = scmp.eq.s32.totalorder %s18, 3
      %p144 = por %p142, %p143
      %p146 = scmp.ne.s32.totalorder %s129, %s145
      %p147 = scmp.eq.s32.totalorder %s18, 0
      %p148 = por %p146, %p147
      %p149 = scmp.le.s32.totalorder 1, %s12
      %p150 = scmp.lt.s32.totalorder %s12, 5
      %p151 = pnand %p149, %p150
      %p152 = pneg %p151
      // Predicated region
      $region9: #{model_forward.9} parent=5 // pred_check
        _
      $region10: #{model_forward.9} parent=5 // pred_check_branch
        %154 = sbr.rel (%p151) target = $region12
      $region11: #{model_forward.9} parent=5 // pred_region
        %s155 = ssub.s32 %s12, 1
      $region12: #{model_forward.9} parent=5 // pred_fallthru
        _
      %p156 = scmp.lt.s32.totalorder %s12, 4
      // Predicated region
      $region13: #{model_forward.9} parent=5 // pred_check
        %p157 = pneg %p156
      $region14: #{model_forward.9} parent=5 // pred_check_branch
        %159 = sbr.rel (%p157) target = $region16
      $region15: #{model_forward.9} parent=5 // pred_region
        // Predicated region
        $region17: #{model_forward.9} parent=15 // pred_check
          %p160 = pneg %p53
        $region18: #{model_forward.9} parent=15 // pred_check_branch
          %162 = sbr.rel (%p160) target = $region20
        $region19: #{model_forward.9} parent=15 // pred_region
          %s163 = smul.u32 16, %s19
          %p164 = scmp.lt.s32.totalorder %s163, 31
          %s165 = scalar_select %p164, %s163, 31
          %p166 = scmp.lt.s32.totalorder %s21, 0
          %s167 = scalar_select %p166, %s21, 0
          %s168 = sadd.s32 %s167, %s165
          %s169 = smul.addr %s168, 8
          %s170 = scalar_lea.vmem %s0, %s169
          %s171 = smul.u32 16, %s19
        $region20: #{model_forward.9} parent=15 // pred_fallthru
          _
        // Predicated region
        $region21: #{model_forward.9} parent=15 // pred_check
          %p172 = pneg %p81
        $region22: #{model_forward.9} parent=15 // pred_check_branch
          %174 = sbr.rel (%p172) target = $region24
        $region23: #{model_forward.9} parent=15 // pred_region
          %s175 = smul.u32 16, %s20
          %p176 = scmp.lt.s32.totalorder %s175, 31
          %s177 = scalar_select %p176, %s175, 31
          %p178 = scmp.lt.s32.totalorder %s21, 0
          %s179 = scalar_select %p178, %s21, 0
          %s180 = sadd.s32 %s179, %s177
          %s181 = smul.addr %s180, 4
          %s182 = scalar_lea.vmem %s1, %s181
          %s183 = smul.u32 16, %s20
        $region24: #{model_forward.9} parent=15 // pred_fallthru
          _
        // Predicated region
        $region25: #{model_forward.9} parent=15 // pred_check
          %p184 = pneg %p107
        $region26: #{model_forward.9} parent=15 // pred_check_branch
          %186 = sbr.rel (%p184) target = $region28
        $region27: #{model_forward.9} parent=15 // pred_region
          %p187 = scmp.lt.s32.totalorder %s20, 1
          %s188 = scalar_select %p187, %s20, 1
          %s189 = scalar_lea.vmem %s2, %s188
        $region28: #{model_forward.9} parent=15 // pred_fallthru
          _
      $region16: #{model_forward.9} parent=5 // pred_fallthru
        _
      %p190 = scmp.le.s32.totalorder 1, %s12
      %p191 = scmp.lt.s32.totalorder %s12, 5
      %p192 = pnand %p190, %p191
      %p193 = pneg %p192
      // Predicated region
      $region29: #{model_forward.9} parent=5 // pred_check
        _
      $region30: #{model_forward.9} parent=5 // pred_check_branch
        %195 = sbr.rel (%p192) target = $region32
      $region31: #{model_forward.9} parent=5 // pred_region
        %s196 = ssub.s32 %s12, 1
        %s197 = smul.u32 16, %s22
        %p198 = scmp.lt.s32.totalorder %s197, 31
        %s199 = scalar_select %p198, %s197, 31
        %p200 = scmp.lt.s32.totalorder %s24, 0
        %s201 = scalar_select %p200, %s24, 0
        %s202 = sadd.s32 %s201, %s199
        %s203 = smul.addr %s202, 8
        %s204 = scalar_lea.vmem %s0, %s203
        %p205 = pneg %p59
        %p206 = pneg %p56
        %s207 = smul.u32 16, %s23
        %p208 = scmp.lt.s32.totalorder %s207, 31
        %s209 = scalar_select %p208, %s207, 31
        %p210 = scmp.lt.s32.totalorder %s24, 0
        %s211 = scalar_select %p210, %s24, 0
        %s212 = sadd.s32 %s211, %s209
        %s213 = smul.addr %s212, 4
        %s214 = scalar_lea.vmem %s1, %s213
        %p215 = pneg %p87
        %p216 = pneg %p84
        %p217 = scmp.lt.s32.totalorder %s23, 1
        %s218 = scalar_select %p217, %s23, 1
        %s219 = scalar_lea.vmem %s2, %s218
        %p220 = pneg %p113
        %p221 = pneg %p110
        %p222 = pneg %p141
        %p223 = pneg %p138
        %s224 = sand.u32 %s128, 1
        %s225 = scalar_lea.sflag [#allocation4], %s224
        %s226 = sand.u32 %s128, 1
        %s227 = smul.addr %s226, 128
        %s228 = scalar_lea.vmem [#allocation3], %s227
        %s229 = smul.u32 16, %s22
        %p230 = scmp.lt.s32.totalorder %s229, 31
        %s231 = scalar_select %p230, %s229, 31
        %p232 = scmp.lt.s32.totalorder %s24, 0
        %s233 = scalar_select %p232, %s24, 0
        %s234 = sadd.s32 %s233, %s231
        %s235 = smul.addr %s234, 8
        %s236 = scalar_lea.vmem %s0, %s235
        %s237 = smul.u32 16, %s22
        %s238 = smul.u32 16, %s23
        %p239 = scmp.lt.s32.totalorder %s238, 31
        %s240 = scalar_select %p239, %s238, 31
        %p241 = scmp.lt.s32.totalorder %s24, 0
        %s242 = scalar_select %p241, %s24, 0
        %s243 = sadd.s32 %s242, %s240
        %s244 = smul.addr %s243, 4
        %s245 = scalar_lea.vmem %s1, %s244
        %s246 = smul.u32 16, %s23
        %p247 = scmp.lt.s32.totalorder %s23, 1
        %s248 = scalar_select %p247, %s23, 1
        %s249 = scalar_lea.vmem %s2, %s248
        %s250 = smul.u32 16, %s22
        %p251 = scmp.eq.s32.totalorder %s24, 0
        // Predicated region
        $region33: #{model_forward.9} parent=31 // pred_check
          %p252 = pneg %p251
        $region34: #{model_forward.9} parent=31 // pred_check_branch
          %254 = sbr.rel (%p252) target = $region36
        $region35: #{model_forward.9} parent=31 // pred_region
          %255 = vst [vmem:[#allocation2] sm:$0xff] 0.0
          %256 = vst [vmem:[#allocation2 + $0x8] sm:$0xff] 0.0
          %257 = vst [vmem:[#allocation2 + $0x10] sm:$0xff] 0.0
          %258 = vst [vmem:[#allocation2 + $0x18] sm:$0xff] 0.0
          %259 = vst [vmem:[#allocation2 + $0x20] sm:$0xff] 0.0
          %260 = vst [vmem:[#allocation2 + $0x28] sm:$0xff] 0.0
          %261 = vst [vmem:[#allocation2 + $0x30] sm:$0xff] 0.0
          %262 = vst [vmem:[#allocation2 + $0x38] sm:$0xff] 0.0
          %263 = vst [vmem:[#allocation2 + $0x40] sm:$0xff] 0.0
          %264 = vst [vmem:[#allocation2 + $0x48] sm:$0xff] 0.0
          %265 = vst [vmem:[#allocation2 + $0x50] sm:$0xff] 0.0
          %266 = vst [vmem:[#allocation2 + $0x58] sm:$0xff] 0.0
          %267 = vst [vmem:[#allocation2 + $0x60] sm:$0xff] 0.0
          %268 = vst [vmem:[#allocation2 + $0x68] sm:$0xff] 0.0
          %269 = vst [vmem:[#allocation2 + $0x70] sm:$0xff] 0.0
          %270 = vst [vmem:[#allocation2 + $0x78] sm:$0xff] 0.0
        $region36: #{model_forward.9} parent=31 // pred_fallthru
          _
        %v271 = vld [vmem:[%s236] sm:$0xff]
        %v272 = vld [vmem:[%s236 + $0x8] sm:$0xff]
        %v273 = vld [vmem:[%s236 + $0x10] sm:$0xff]
        %v274 = vld [vmem:[%s236 + $0x18] sm:$0xff]
        %v275 = vld [vmem:[%s236 + $0x20] sm:$0xff]
        %v276 = vld [vmem:[%s236 + $0x28] sm:$0xff]
        %v277 = vld [vmem:[%s236 + $0x30] sm:$0xff]
        %v278 = vld [vmem:[%s236 + $0x38] sm:$0xff]
        %v279 = vld [vmem:[%s236 + $0x40] sm:$0xff]
        %v280 = vld [vmem:[%s236 + $0x48] sm:$0xff]
        %v281 = vld [vmem:[%s236 + $0x50] sm:$0xff]
        %v282 = vld [vmem:[%s236 + $0x58] sm:$0xff]
        %v283 = vld [vmem:[%s236 + $0x60] sm:$0xff]
        %v284 = vld [vmem:[%s236 + $0x68] sm:$0xff]
        %v285 = vld [vmem:[%s236 + $0x70] sm:$0xff]
        %v286 = vld [vmem:[%s236 + $0x78] sm:$0xff]
        %v287 = vpack.c.bf16 %v272, %v271
        %v288 = vpack.c.bf16 %v274, %v273
        %v289 = vpack.c.bf16 %v276, %v275
        %v290 = vpack.c.bf16 %v278, %v277
        %v291 = vpack.c.bf16 %v280, %v279
        %v292 = vpack.c.bf16 %v282, %v281
        %v293 = vpack.c.bf16 %v284, %v283
        %v294 = vpack.c.bf16 %v286, %v285
        %v295 = vld [vmem:[#allocation2] sm:$0xff]
        %v296 = vld [vmem:[#allocation2 + $0x8] sm:$0xff]
        %v297 = vld [vmem:[#allocation2 + $0x10] sm:$0xff]
        %v298 = vld [vmem:[#allocation2 + $0x18] sm:$0xff]
        %v299 = vld [vmem:[#allocation2 + $0x20] sm:$0xff]
        %v300 = vld [vmem:[#allocation2 + $0x28] sm:$0xff]
        %v301 = vld [vmem:[#allocation2 + $0x30] sm:$0xff]
        %v302 = vld [vmem:[#allocation2 + $0x38] sm:$0xff]
        %v303 = vld [vmem:[#allocation2 + $0x40] sm:$0xff]
        %v304 = vld [vmem:[#allocation2 + $0x48] sm:$0xff]
        %v305 = vld [vmem:[#allocation2 + $0x50] sm:$0xff]
        %v306 = vld [vmem:[#allocation2 + $0x58] sm:$0xff]
        %v307 = vld [vmem:[#allocation2 + $0x60] sm:$0xff]
        %v308 = vld [vmem:[#allocation2 + $0x68] sm:$0xff]
        %v309 = vld [vmem:[#allocation2 + $0x70] sm:$0xff]
        %v310 = vld [vmem:[#allocation2 + $0x78] sm:$0xff]
        %v311 = vld [vmem:[%s245] sm:$0xf]
        %v312 = vld [vmem:[%s245 + $0x4] sm:$0xf]
        %v313 = vld [vmem:[%s245 + $0x8] sm:$0xf]
        %v314 = vld [vmem:[%s245 + $0xc] sm:$0xf]
        %v315 = vld [vmem:[%s245 + $0x10] sm:$0xf]
        %v316 = vld [vmem:[%s245 + $0x14] sm:$0xf]
        %v317 = vld [vmem:[%s245 + $0x18] sm:$0xf]
        %v318 = vld [vmem:[%s245 + $0x1c] sm:$0xf]
        %v319 = vld [vmem:[%s245 + $0x20] sm:$0xf]
        %v320 = vld [vmem:[%s245 + $0x24] sm:$0xf]
        %v321 = vld [vmem:[%s245 + $0x28] sm:$0xf]
        %v322 = vld [vmem:[%s245 + $0x2c] sm:$0xf]
        %v323 = vld [vmem:[%s245 + $0x30] sm:$0xf]
        %v324 = vld [vmem:[%s245 + $0x34] sm:$0xf]
        %v325 = vld [vmem:[%s245 + $0x38] sm:$0xf]
        %v326 = vld [vmem:[%s245 + $0x3c] sm:$0xf]
        %v343 = vunpack.c.l.b16 %v311
        %v344 = vunpack.c.l.b16 %v312
        %v345 = vunpack.c.l.b16 %v313
        %v346 = vunpack.c.l.b16 %v314
        %v347 = vunpack.c.l.b16 %v315
        %v348 = vunpack.c.l.b16 %v316
        %v349 = vunpack.c.l.b16 %v317
        %v350 = vunpack.c.l.b16 %v318
        %v351 = vunpack.c.l.b16 %v319
        %v352 = vunpack.c.l.b16 %v320
        %v353 = vunpack.c.l.b16 %v321
        %v354 = vunpack.c.l.b16 %v322
        %v355 = vunpack.c.l.b16 %v323
        %v356 = vunpack.c.l.b16 %v324
        %v357 = vunpack.c.l.b16 %v325
        %v358 = vunpack.c.l.b16 %v326
        %v359 = vpack.c.b16 %v344, %v343
        %v360 = vpack.c.b16 %v346, %v345
        %v361 = vpack.c.b16 %v348, %v347
        %v362 = vpack.c.b16 %v350, %v349
        %v363 = vpack.c.b16 %v352, %v351
        %v364 = vpack.c.b16 %v354, %v353
        %v365 = vpack.c.b16 %v356, %v355
        %v366 = vpack.c.b16 %v358, %v357
        %375 = vmatpush.bf16.xpose.msra.mxu0 %v366
        %376 = vmatpush.bf16.xpose.msra.mxu0 %v365
        %377 = vmatpush.bf16.xpose.msra.mxu0 %v364
        %378 = vmatpush.bf16.xpose.msra.mxu0 %v363
        %379 = vmatpush.bf16.xpose.msra.mxu0 %v362
        %380 = vmatpush.bf16.xpose.msra.mxu0 %v361
        %381 = vmatpush.bf16.xpose.msra.mxu0 %v360
        %382 = vmatpush.bf16.xpose.msra.mxu0 %v359
        %383 = vmatmul.bf16.gmra.mxu0 %v287
        %v384 = vpop.f32.mrf.mxu0
        %v385 = vadd.f32 0.0, %v384
        %v386 = vpop.f32.mrf.mxu0
        %v387 = vadd.f32 0.0, %v386
        %388 = vmatmul.bf16.gmra.mxu0 %v288
        %v389 = vpop.f32.mrf.mxu0
        %v390 = vadd.f32 0.0, %v389
        %v391 = vpop.f32.mrf.mxu0
        %v392 = vadd.f32 0.0, %v391
        %393 = vmatmul.bf16.gmra.mxu0 %v289
        %v394 = vpop.f32.mrf.mxu0
        %v395 = vadd.f32 0.0, %v394
        %v396 = vpop.f32.mrf.mxu0
        %v397 = vadd.f32 0.0, %v396
        %398 = vmatmul.bf16.gmra.mxu0 %v290
        %v399 = vpop.f32.mrf.mxu0
        %v400 = vadd.f32 0.0, %v399
        %v401 = vpop.f32.mrf.mxu0
        %v402 = vadd.f32 0.0, %v401
        %403 = vmatmul.bf16.gmra.mxu0 %v291
        %v404 = vpop.f32.mrf.mxu0
        %v405 = vadd.f32 0.0, %v404
        %v406 = vpop.f32.mrf.mxu0
        %v407 = vadd.f32 0.0, %v406
        %408 = vmatmul.bf16.gmra.mxu0 %v292
        %v409 = vpop.f32.mrf.mxu0
        %v410 = vadd.f32 0.0, %v409
        %v411 = vpop.f32.mrf.mxu0
        %v412 = vadd.f32 0.0, %v411
        %413 = vmatmul.bf16.gmra.mxu0 %v293
        %v414 = vpop.f32.mrf.mxu0
        %v415 = vadd.f32 0.0, %v414
        %v416 = vpop.f32.mrf.mxu0
        %v417 = vadd.f32 0.0, %v416
        %418 = vmatmul.bf16.gmra.mxu0 %v294
        %v419 = vpop.f32.mrf.mxu0
        %v420 = vadd.f32 0.0, %v419
        %v421 = vpop.f32.mrf.mxu0
        %v422 = vadd.f32 0.0, %v421
        %423 = vdwg.mxu0
        %v424 = vadd.f32 %v295, %v385
        %v425 = vadd.f32 %v296, %v387
        %v426 = vadd.f32 %v297, %v390
        %v427 = vadd.f32 %v298, %v392
        %v428 = vadd.f32 %v299, %v395
        %v429 = vadd.f32 %v300, %v397
        %v430 = vadd.f32 %v301, %v400
        %v431 = vadd.f32 %v302, %v402
        %v432 = vadd.f32 %v303, %v405
        %v433 = vadd.f32 %v304, %v407
        %v434 = vadd.f32 %v305, %v410
        %v435 = vadd.f32 %v306, %v412
        %v436 = vadd.f32 %v307, %v415
        %v437 = vadd.f32 %v308, %v417
        %v438 = vadd.f32 %v309, %v420
        %v439 = vadd.f32 %v310, %v422
        %440 = vst [vmem:[#allocation2] sm:$0xff] %v424
        %441 = vst [vmem:[#allocation2 + $0x8] sm:$0xff] %v425
        %442 = vst [vmem:[#allocation2 + $0x10] sm:$0xff] %v426
        %443 = vst [vmem:[#allocation2 + $0x18] sm:$0xff] %v427
        %444 = vst [vmem:[#allocation2 + $0x20] sm:$0xff] %v428
        %445 = vst [vmem:[#allocation2 + $0x28] sm:$0xff] %v429
        %446 = vst [vmem:[#allocation2 + $0x30] sm:$0xff] %v430
        %447 = vst [vmem:[#allocation2 + $0x38] sm:$0xff] %v431
        %448 = vst [vmem:[#allocation2 + $0x40] sm:$0xff] %v432
        %449 = vst [vmem:[#allocation2 + $0x48] sm:$0xff] %v433
        %450 = vst [vmem:[#allocation2 + $0x50] sm:$0xff] %v434
        %451 = vst [vmem:[#allocation2 + $0x58] sm:$0xff] %v435
        %452 = vst [vmem:[#allocation2 + $0x60] sm:$0xff] %v436
        %453 = vst [vmem:[#allocation2 + $0x68] sm:$0xff] %v437
        %454 = vst [vmem:[#allocation2 + $0x70] sm:$0xff] %v438
        %455 = vst [vmem:[#allocation2 + $0x78] sm:$0xff] %v439
        // Predicated region
        $region37: #{model_forward.9} parent=31 // pred_check
          %p456 = pneg %p251
        $region38: #{model_forward.9} parent=31 // pred_check_branch
          %458 = sbr.rel (%p456) target = $region40
        $region39: #{model_forward.9} parent=31 // pred_region
          %v459 = vld [vmem:[#allocation2] sm:$0xff]
          %v460 = vld [vmem:[#allocation2 + $0x8] sm:$0xff]
          %v461 = vld [vmem:[#allocation2 + $0x10] sm:$0xff]
          %v462 = vld [vmem:[#allocation2 + $0x18] sm:$0xff]
          %v463 = vld [vmem:[#allocation2 + $0x20] sm:$0xff]
          %v464 = vld [vmem:[#allocation2 + $0x28] sm:$0xff]
          %v465 = vld [vmem:[#allocation2 + $0x30] sm:$0xff]
          %v466 = vld [vmem:[#allocation2 + $0x38] sm:$0xff]
          %v467 = vld [vmem:[#allocation2 + $0x40] sm:$0xff]
          %v468 = vld [vmem:[#allocation2 + $0x48] sm:$0xff]
          %v469 = vld [vmem:[#allocation2 + $0x50] sm:$0xff]
          %v470 = vld [vmem:[#allocation2 + $0x58] sm:$0xff]
          %v471 = vld [vmem:[#allocation2 + $0x60] sm:$0xff]
          %v472 = vld [vmem:[#allocation2 + $0x68] sm:$0xff]
          %v473 = vld [vmem:[#allocation2 + $0x70] sm:$0xff]
          %v474 = vld [vmem:[#allocation2 + $0x78] sm:$0xff]
          %v475 = vld [vmem:[%s249] sm:$0x1]
          %v477 = vperm.slane %v475, 0
          %v479 = vadd.f32 %v459, %v477
          %v480 = vadd.f32 %v460, %v477
          %v481 = vadd.f32 %v461, %v477
          %v482 = vadd.f32 %v462, %v477
          %v483 = vadd.f32 %v463, %v477
          %v484 = vadd.f32 %v464, %v477
          %v485 = vadd.f32 %v465, %v477
          %v486 = vadd.f32 %v466, %v477
          %v487 = vadd.f32 %v467, %v477
          %v488 = vadd.f32 %v468, %v477
          %v489 = vadd.f32 %v469, %v477
          %v490 = vadd.f32 %v470, %v477
          %v491 = vadd.f32 %v471, %v477
          %v492 = vadd.f32 %v472, %v477
          %v493 = vadd.f32 %v473, %v477
          %v494 = vadd.f32 %v474, %v477
          %495 = vst [vmem:[%s228] sm:$0xff] %v479
          %496 = vst [vmem:[%s228 + $0x8] sm:$0xff] %v480
          %497 = vst [vmem:[%s228 + $0x10] sm:$0xff] %v481
          %498 = vst [vmem:[%s228 + $0x18] sm:$0xff] %v482
          %499 = vst [vmem:[%s228 + $0x20] sm:$0xff] %v483
          %500 = vst [vmem:[%s228 + $0x28] sm:$0xff] %v484
          %501 = vst [vmem:[%s228 + $0x30] sm:$0xff] %v485
          %502 = vst [vmem:[%s228 + $0x38] sm:$0xff] %v486
          %503 = vst [vmem:[%s228 + $0x40] sm:$0xff] %v487
          %504 = vst [vmem:[%s228 + $0x48] sm:$0xff] %v488
          %505 = vst [vmem:[%s228 + $0x50] sm:$0xff] %v489
          %506 = vst [vmem:[%s228 + $0x58] sm:$0xff] %v490
          %507 = vst [vmem:[%s228 + $0x60] sm:$0xff] %v491
          %508 = vst [vmem:[%s228 + $0x68] sm:$0xff] %v492
          %509 = vst [vmem:[%s228 + $0x70] sm:$0xff] %v493
          %510 = vst [vmem:[%s228 + $0x78] sm:$0xff] %v494
        $region40: #{model_forward.9} parent=31 // pred_fallthru
          _
        %s511 = sand.u32 %s128, 1
        %s512 = scalar_lea.sflag [#allocation4], %s511
        %s513 = sand.u32 %s128, 1
        %s514 = smul.addr %s513, 128
        %s515 = scalar_lea.vmem [#allocation3], %s514
        // Predicated region
        $region41: #{model_forward.9} parent=31 // pred_check
          %p516 = pneg %p138
        $region42: #{model_forward.9} parent=31 // pred_check_branch
          %518 = sbr.rel (%p516) target = $region44
        $region43: #{model_forward.9} parent=31 // pred_region
          %s519 = smul.u32 16, %s22
          %521 = vsyncadd %s512, 0
          %s522 = smul.addr %s519, 2
          %s523 = sadd.s32 %s23, %s522
          %s524 = smul.addr %s523, 8
          %s525 = scalar_lea.hbm %s3, %s524
          %s526 = sshll.u32 %s515, 4
          %s527 = int_to_ptr.vmem [resolvable:$true] %s526
          %s528 = sshll.u32 %s525, 4
          %s529 = int_to_ptr.hbm [resolvable:$true] %s528
          %534 = dma.vmem_to_hbm [thread:$0]  %s527, 2048, %s529, %s512, 128, 256, 8
        $region44: #{model_forward.9} parent=31 // pred_fallthru
          _
      $region32: #{model_forward.9} parent=5 // pred_fallthru
        _
      %p535 = scmp.le.s32.totalorder 2, %s12
      // Predicated region
      $region45: #{model_forward.9} parent=5 // pred_check
        %p536 = pneg %p535
      $region46: #{model_forward.9} parent=5 // pred_check_branch
        %538 = sbr.rel (%p536) target = $region48
      $region47: #{model_forward.9} parent=5 // pred_region
        %s539 = ssub.s32 %s12, 2
        // Predicated region
        $region49: #{model_forward.9} parent=47 // pred_check
          %p540 = pneg %p144
        $region50: #{model_forward.9} parent=47 // pred_check_branch
          %542 = sbr.rel (%p540) target = $region52
        $region51: #{model_forward.9} parent=47 // pred_region
          %s543 = sand.u32 %s129, 1
          %s544 = scalar_lea.sflag [#allocation4], %s543
          %s545 = sand.u32 %s129, 1
          %s546 = smul.addr %s545, 128
          %s547 = scalar_lea.vmem [#allocation3], %s546
          %549 = dma.done %s544, 2048
        $region52: #{model_forward.9} parent=47 // pred_fallthru
          _
      $region48: #{model_forward.9} parent=5 // pred_fallthru
        _
    $region6: #{model_forward.9} parent=1 // loop_footer
      %s16 = sadd.s32 1, %s12
    $region7: #{model_forward.9} parent=1 // loop_footer_branch
      %11 = sbr.rel target = $region3
    $region8: #{model_forward.9} parent=1 // loop_exit
      _
    %550 = vsyncpa [#allocation4], 1
    %s551 = scalar_lea.sflag [#allocation4], 1
    %552 = vsyncpa %s551, 1

// kernel: model_forward.6
$region0: #{model_forward.6}
  #allocation0 [shape = 'u32[]', space=smem, size = 0x4, offset = 0x4, fixed_abs, tag = 'smem constant byte address 0x4 - core index']
  #allocation1 [shape = 'u32[72,128]{1,0:T(1,128)}', space=vmem, size = 0x9000, scoped, tag = 'internal scratch']
  #allocation2 [shape = 'f32[8,128]{1,0:T(8,128)}', space=vmem, size = 0x1000, scoped, tag = 'scratch operand']
  #allocation3 [shape = 'f32[8,128]{1,0:T(8,128)}', space=vmem, size = 0x1000, scoped, tag = 'scratch operand']
  #allocation4 [shape = 'bf16[128,512]{1,0:T(8,128)(2,1)}', space=vmem, size = 0x20000, scoped, tag = 'scratch operand']
  #allocation5 [shape = 's32[1]{0}', space=sflag, size = 0x4, scoped, tag = 'scratch operand']
  #allocation8 [shape = 's32[]', space=sflag, size = 0x4, offset = 0, fixed_abs, tag = 'sflag constant byte address 0x0 - dummy sync flag']
  %s0 = inlined_call_operand.vmem [shape: f32[16,16,512], index: 0, kind: input, shape index: {}]
  %s1 = inlined_call_operand.vmem [shape: f32[16,128], index: 1, kind: input, shape index: {}]
  %s2 = inlined_call_operand.vmem [shape: f32[16,128], index: 2, kind: input, shape index: {}]
  %s3 = inlined_call_operand.vmem [shape: bf16[128,512], index: 3, kind: input, shape index: {}]
  %s4 = inlined_call_operand.vmem [shape: f32[16,16,128], index: 4, kind: output, shape index: {0}]
  %s5 = inlined_call_operand.vmem [shape: f32[16,128], index: 5, kind: output, shape index: {1}]
  %s6 = inlined_call_operand.vmem [shape: f32[16,128], index: 6, kind: output, shape index: {2}]
  %7 = xla_tuple %s4, %s5, %s6
  %s8 = sld [smem:[#allocation0]]
  $region145: #{model_forward.6} parent=0
    _
  %s10 = ssub.s32 1, %s8
  %s11 = scalar_select 0, %s10, %s8
  $region1: #{model_forward.6} parent=0
    #allocation6 [shape = 'u8[262144]{0}', space=vmem, size = 0x40000, scoped, tag = 'input window, operand 0']
    #allocation7 [shape = 'u8[65536]{0}', space=vmem, size = 0x10000, scoped, tag = 'output window, operand 0']
    loop: start=0, step=1, limit=6
    $region2: #{model_forward.6} parent=1 // loop_pre_header
      _
    $region3: #{model_forward.6} parent=1 // loop_header
      %s13 = sphi 0, %s17
      %p14 = scmp.ge.s32.totalorder %s13, 6
      %s20 = sphi 0, %s32
      %s21 = sphi 0, %s28
      %s22 = sphi 0, %s20
      %s23 = sphi 0, %s21
      %s24 = sphi 0, %s22
      %s25 = sphi 0, %s23
      %s37 = sphi 0, %s39
      %s40 = sphi 0, %s37
      %s41 = sphi 0, %s40
      %s57 = sphi 0, %s41
      %s63 = sphi 0, %s65
      %s66 = sphi 0, %s63
      %s67 = sphi 0, %s66
      %s83 = sphi 0, %s67
      %s89 = sphi 0, %s91
      %s92 = sphi 0, %s89
      %s93 = sphi 0, %s92
      %s109 = sphi 0, %s93
      %s117 = sphi 0, %s119
      %s120 = sphi 0, %s117
      %s121 = sphi 0, %s120
      %s137 = sphi 0, %s121
      %s143 = sphi 0, %s145
      %s146 = sphi 0, %s143
      %s147 = sphi 0, %s146
      %s163 = sphi 0, %s147
      %s169 = sphi 0, %s171
      %s172 = sphi 0, %s169
      %s173 = sphi 0, %s172
      %s189 = sphi 0, %s173
    $region4: #{model_forward.6} parent=1 // loop_header_branch
      %16 = sbr.rel (%p14) target = $region8
    $region5: #{model_forward.6} parent=1 // loop_body
      %s18 = ssub.s32 %s13, 1
      %s19 = ssub.s32 %s13, 2
      %s26 = sadd.s32 1, %s21
      %p27 = scmp.ge.s32.totalorder %s26, 2
      %s28 = scalar_select %p27, 0, %s26
      %s29 = sadd.s32 1, %s20
      %s30 = scalar_select %p27, %s29, %s20
      %p31 = scmp.ge.s32.totalorder %s30, 2
      %s32 = scalar_select %p31, 0, %s30
      %s33 = ssub.s32 %s21, %s28
      %s34 = ssub.s32 %s20, %s32
      %s35 = sor.u32 %s33, %s34
      %p36 = scmp.eq.s32.totalorder %s35, 0
      %s38 = sadd.s32 %s37, 1
      %s39 = scalar_select %p36, %s37, %s38
      %p42 = pneg %p36
      %p43 = scmp.eq.s32.totalorder %s13, 3
      %p44 = por %p42, %p43
      %p45 = scmp.ne.s32.totalorder %s37, %s40
      %p46 = scmp.eq.s32.totalorder %s13, 0
      %p47 = por %p45, %p46
      %p48 = scmp.ne.s32.totalorder %s37, %s40
      %p49 = scmp.eq.s32.totalorder %s18, 3
      %p50 = por %p48, %p49
      %p51 = scmp.ne.s32.totalorder %s40, %s41
      %p52 = scmp.eq.s32.totalorder %s18, 0
      %p53 = por %p51, %p52
      %p54 = scmp.ne.s32.totalorder %s40, %s41
      %p55 = scmp.eq.s32.totalorder %s19, 3
      %p56 = por %p54, %p55
      %p58 = scmp.ne.s32.totalorder %s41, %s57
      %p59 = scmp.eq.s32.totalorder %s19, 0
      %p60 = por %p58, %p59
      %s61 = ssub.s32 %s20, %s32
      %p62 = scmp.eq.s32.totalorder %s61, 0
      %s64 = sadd.s32 %s63, 1
      %s65 = scalar_select %p62, %s63, %s64
      %p68 = pneg %p62
      %p69 = scmp.eq.s32.totalorder %s13, 3
      %p70 = por %p68, %p69
      %p71 = scmp.ne.s32.totalorder %s63, %s66
      %p72 = scmp.eq.s32.totalorder %s13, 0
      %p73 = por %p71, %p72
      %p74 = scmp.ne.s32.totalorder %s63, %s66
      %p75 = scmp.eq.s32.totalorder %s18, 3
      %p76 = por %p74, %p75
      %p77 = scmp.ne.s32.totalorder %s66, %s67
      %p78 = scmp.eq.s32.totalorder %s18, 0
      %p79 = por %p77, %p78
      %p80 = scmp.ne.s32.totalorder %s66, %s67
      %p81 = scmp.eq.s32.totalorder %s19, 3
      %p82 = por %p80, %p81
      %p84 = scmp.ne.s32.totalorder %s67, %s83
      %p85 = scmp.eq.s32.totalorder %s19, 0
      %p86 = por %p84, %p85
      %s87 = ssub.s32 %s20, %s32
      %p88 = scmp.eq.s32.totalorder %s87, 0
      %s90 = sadd.s32 %s89, 1
      %s91 = scalar_select %p88, %s89, %s90
      %p94 = pneg %p88
      %p95 = scmp.eq.s32.totalorder %s13, 3
      %p96 = por %p94, %p95
      %p97 = scmp.ne.s32.totalorder %s89, %s92
      %p98 = scmp.eq.s32.totalorder %s13, 0
      %p99 = por %p97, %p98
      %p100 = scmp.ne.s32.totalorder %s89, %s92
      %p101 = scmp.eq.s32.totalorder %s18, 3
      %p102 = por %p100, %p101
      %p103 = scmp.ne.s32.totalorder %s92, %s93
      %p104 = scmp.eq.s32.totalorder %s18, 0
      %p105 = por %p103, %p104
      %p106 = scmp.ne.s32.totalorder %s92, %s93
      %p107 = scmp.eq.s32.totalorder %s19, 3
      %p108 = por %p106, %p107
      %p110 = scmp.ne.s32.totalorder %s93, %s109
      %p111 = scmp.eq.s32.totalorder %s19, 0
      %p112 = por %p110, %p111
      %s113 = ssub.s32 %s21, %s28
      %s114 = ssub.s32 %s20, %s32
      %s115 = sor.u32 %s113, %s114
      %p116 = scmp.eq.s32.totalorder %s115, 0
      %s118 = sadd.s32 %s117, 1
      %s119 = scalar_select %p116, %s117, %s118
      %p122 = pneg %p116
      %p123 = scmp.eq.s32.totalorder %s13, 3
      %p124 = por %p122, %p123
      %p125 = scmp.ne.s32.totalorder %s117, %s120
      %p126 = scmp.eq.s32.totalorder %s13, 0
      %p127 = por %p125, %p126
      %p128 = scmp.ne.s32.totalorder %s117, %s120
      %p129 = scmp.eq.s32.totalorder %s18, 3
      %p130 = por %p128, %p129
      %p131 = scmp.ne.s32.totalorder %s120, %s121
      %p132 = scmp.eq.s32.totalorder %s18, 0
      %p133 = por %p131, %p132
      %p134 = scmp.ne.s32.totalorder %s120, %s121
      %p135 = scmp.eq.s32.totalorder %s19, 3
      %p136 = por %p134, %p135
      %p138 = scmp.ne.s32.totalorder %s121, %s137
      %p139 = scmp.eq.s32.totalorder %s19, 0
      %p140 = por %p138, %p139
      %s141 = ssub.s32 %s20, %s32
      %p142 = scmp.eq.s32.totalorder %s141, 0
      %s144 = sadd.s32 %s143, 1
      %s145 = scalar_select %p142, %s143, %s144
      %p148 = pneg %p142
      %p149 = scmp.eq.s32.totalorder %s13, 3
      %p150 = por %p148, %p149
      %p151 = scmp.ne.s32.totalorder %s143, %s146
      %p152 = scmp.eq.s32.totalorder %s13, 0
      %p153 = por %p151, %p152
      %p154 = scmp.ne.s32.totalorder %s143, %s146
      %p155 = scmp.eq.s32.totalorder %s18, 3
      %p156 = por %p154, %p155
      %p157 = scmp.ne.s32.totalorder %s146, %s147
      %p158 = scmp.eq.s32.totalorder %s18, 0
      %p159 = por %p157, %p158
      %p160 = scmp.ne.s32.totalorder %s146, %s147
      %p161 = scmp.eq.s32.totalorder %s19, 3
      %p162 = por %p160, %p161
      %p164 = scmp.ne.s32.totalorder %s147, %s163
      %p165 = scmp.eq.s32.totalorder %s19, 0
      %p166 = por %p164, %p165
      %s167 = ssub.s32 %s20, %s32
      %p168 = scmp.eq.s32.totalorder %s167, 0
      %s170 = sadd.s32 %s169, 1
      %s171 = scalar_select %p168, %s169, %s170
      %p174 = pneg %p168
      %p175 = scmp.eq.s32.totalorder %s13, 3
      %p176 = por %p174, %p175
      %p177 = scmp.ne.s32.totalorder %s169, %s172
      %p178 = scmp.eq.s32.totalorder %s13, 0
      %p179 = por %p177, %p178
      %p180 = scmp.ne.s32.totalorder %s169, %s172
      %p181 = scmp.eq.s32.totalorder %s18, 3
      %p182 = por %p180, %p181
      %p183 = scmp.ne.s32.totalorder %s172, %s173
      %p184 = scmp.eq.s32.totalorder %s18, 0
      %p185 = por %p183, %p184
      %p186 = scmp.ne.s32.totalorder %s172, %s173
      %p187 = scmp.eq.s32.totalorder %s19, 3
      %p188 = por %p186, %p187
      %p190 = scmp.ne.s32.totalorder %s173, %s189
      %p191 = scmp.eq.s32.totalorder %s19, 0
      %p192 = por %p190, %p191
      %p193 = scmp.le.s32.totalorder 1, %s13
      %p194 = scmp.lt.s32.totalorder %s13, 5
      %p195 = pnand %p193, %p194
      %p196 = pneg %p195
      // Predicated region
      $region9: #{model_forward.6} parent=5 // pred_check
        _
      $region10: #{model_forward.6} parent=5 // pred_check_branch
        %198 = sbr.rel (%p195) target = $region12
      $region11: #{model_forward.6} parent=5 // pred_region
        %s199 = ssub.s32 %s13, 1
      $region12: #{model_forward.6} parent=5 // pred_fallthru
        _
      %p200 = scmp.lt.s32.totalorder %s13, 4
      // Predicated region
      $region13: #{model_forward.6} parent=5 // pred_check
        %p201 = pneg %p200
      $region14: #{model_forward.6} parent=5 // pred_check_branch
        %203 = sbr.rel (%p201) target = $region16
      $region15: #{model_forward.6} parent=5 // pred_region
        // Predicated region
        $region17: #{model_forward.6} parent=15 // pred_check
          %p204 = pneg %p47
        $region18: #{model_forward.6} parent=15 // pred_check_branch
          %206 = sbr.rel (%p204) target = $region20
        $region19: #{model_forward.6} parent=15 // pred_region
          %s207 = sand.u32 %s37, 1
          %s208 = sand.u32 %s37, 1
          %s209 = smul.addr %s208, 256
          %s210 = scalar_lea.vmem [#allocation6], %s209
          %s211 = smul.u32 8, %s21
          %s212 = smul.addr %s20, 4
          %s213 = smul.addr %s211, 8
          %s214 = sadd.s32 %s212, %s213
          %s215 = smul.addr %s214, 8
          %s216 = scalar_lea.vmem %s0, %s215
          // Predicated region
          $region21: #{model_forward.6} parent=19 // pred_check
            _
          $region22: #{model_forward.6} parent=19 // pred_check_branch
            %218 = sbr.rel (0) target = $region24
          $region23: #{model_forward.6} parent=19 // pred_region
            // Predicated region
            $region25: #{model_forward.6} parent=23 // pred_check
              _
            $region26: #{model_forward.6} parent=23 // pred_check_branch
              %220 = sbr.rel (0) target = $region28
            $region27: #{model_forward.6} parent=23 // pred_region
              loop: start=0, step=1, limit=1
              $region29: #{model_forward.6} parent=27 // loop_pre_header
                _
              $region30: #{model_forward.6} parent=27 // loop_header
                %s222 = sphi 0, %s226
                %p223 = scmp.ge.s32.totalorder %s222, 1
                %s227 = sphi %s216, %s216
                %s228 = sphi %s210, %s210
              $region31: #{model_forward.6} parent=27 // loop_header_branch
                %225 = sbr.rel (%p223) target = $region35
              $region32: #{model_forward.6} parent=27 // loop_body
                %v229 = vld [vmem:[%s227] sm:$0xff]
                %230 = vst [vmem:[%s228] sm:$0xff] %v229
                %v231 = vld [vmem:[%s227 + $0x8] sm:$0xff]
                %232 = vst [vmem:[%s228 + $0x8] sm:$0xff] %v231
                %v233 = vld [vmem:[%s227 + $0x10] sm:$0xff]
                %234 = vst [vmem:[%s228 + $0x10] sm:$0xff] %v233
                %v235 = vld [vmem:[%s227 + $0x18] sm:$0xff]
                %236 = vst [vmem:[%s228 + $0x18] sm:$0xff] %v235
                %v237 = vld [vmem:[%s227 + $0x40] sm:$0xff]
                %238 = vst [vmem:[%s228 + $0x20] sm:$0xff] %v237
                %v239 = vld [vmem:[%s227 + $0x48] sm:$0xff]
                %240 = vst [vmem:[%s228 + $0x28] sm:$0xff] %v239
                %v241 = vld [vmem:[%s227 + $0x50] sm:$0xff]
                %242 = vst [vmem:[%s228 + $0x30] sm:$0xff] %v241
                %v243 = vld [vmem:[%s227 + $0x58] sm:$0xff]
                %244 = vst [vmem:[%s228 + $0x38] sm:$0xff] %v243
                %v245 = vld [vmem:[%s227 + $0x80] sm:$0xff]
                %246 = vst [vmem:[%s228 + $0x40] sm:$0xff] %v245
                %v247 = vld [vmem:[%s227 + $0x88] sm:$0xff]
                %248 = vst [vmem:[%s228 + $0x48] sm:$0xff] %v247
                %v249 = vld [vmem:[%s227 + $0x90] sm:$0xff]
                %250 = vst [vmem:[%s228 + $0x50] sm:$0xff] %v249
                %v251 = vld [vmem:[%s227 + $0x98] sm:$0xff]
                %252 = vst [vmem:[%s228 + $0x58] sm:$0xff] %v251
                %v253 = vld [vmem:[%s227 + $0xc0] sm:$0xff]
                %254 = vst [vmem:[%s228 + $0x60] sm:$0xff] %v253
                %v255 = vld [vmem:[%s227 + $0xc8] sm:$0xff]
                %256 = vst [vmem:[%s228 + $0x68] sm:$0xff] %v255
                %v257 = vld [vmem:[%s227 + $0xd0] sm:$0xff]
                %258 = vst [vmem:[%s228 + $0x70] sm:$0xff] %v257
                %v259 = vld [vmem:[%s227 + $0xd8] sm:$0xff]
                %260 = vst [vmem:[%s228 + $0x78] sm:$0xff] %v259
                %v261 = vld [vmem:[%s227 + $0x100] sm:$0xff]
                %262 = vst [vmem:[%s228 + $0x80] sm:$0xff] %v261
                %v263 = vld [vmem:[%s227 + $0x108] sm:$0xff]
                %264 = vst [vmem:[%s228 + $0x88] sm:$0xff] %v263
                %v265 = vld [vmem:[%s227 + $0x110] sm:$0xff]
                %266 = vst [vmem:[%s228 + $0x90] sm:$0xff] %v265
                %v267 = vld [vmem:[%s227 + $0x118] sm:$0xff]
                %268 = vst [vmem:[%s228 + $0x98] sm:$0xff] %v267
                %v269 = vld [vmem:[%s227 + $0x140] sm:$0xff]
                %270 = vst [vmem:[%s228 + $0xa0] sm:$0xff] %v269
                %v271 = vld [vmem:[%s227 + $0x148] sm:$0xff]
                %272 = vst [vmem:[%s228 + $0xa8] sm:$0xff] %v271
                %v273 = vld [vmem:[%s227 + $0x150] sm:$0xff]
                %274 = vst [vmem:[%s228 + $0xb0] sm:$0xff] %v273
                %v275 = vld [vmem:[%s227 + $0x158] sm:$0xff]
                %276 = vst [vmem:[%s228 + $0xb8] sm:$0xff] %v275
                %v277 = vld [vmem:[%s227 + $0x180] sm:$0xff]
                %278 = vst [vmem:[%s228 + $0xc0] sm:$0xff] %v277
                %v279 = vld [vmem:[%s227 + $0x188] sm:$0xff]
                %280 = vst [vmem:[%s228 + $0xc8] sm:$0xff] %v279
                %v281 = vld [vmem:[%s227 + $0x190] sm:$0xff]
                %282 = vst [vmem:[%s228 + $0xd0] sm:$0xff] %v281
                %v283 = vld [vmem:[%s227 + $0x198] sm:$0xff]
                %284 = vst [vmem:[%s228 + $0xd8] sm:$0xff] %v283
                %v285 = vld [vmem:[%s227 + $0x1c0] sm:$0xff]
                %286 = vst [vmem:[%s228 + $0xe0] sm:$0xff] %v285
                %v287 = vld [vmem:[%s227 + $0x1c8] sm:$0xff]
                %288 = vst [vmem:[%s228 + $0xe8] sm:$0xff] %v287
                %v289 = vld [vmem:[%s227 + $0x1d0] sm:$0xff]
                %290 = vst [vmem:[%s228 + $0xf0] sm:$0xff] %v289
                %v291 = vld [vmem:[%s227 + $0x1d8] sm:$0xff]
                %292 = vst [vmem:[%s228 + $0xf8] sm:$0xff] %v291
              $region33: #{model_forward.6} parent=27 // loop_footer
                %s226 = sadd.s32 1, %s222
              $region34: #{model_forward.6} parent=27 // loop_footer_branch
                %221 = sbr.rel target = $region30
              $region35: #{model_forward.6} parent=27 // loop_exit
                _
            $region28: #{model_forward.6} parent=23 // pred_fallthru
              _
            // Predicated region
            $region36: #{model_forward.6} parent=23 // pred_check
              _
            $region37: #{model_forward.6} parent=23 // pred_check_branch
              %294 = sbr.rel target = $region39
            $region38: #{model_forward.6} parent=23 // pred_region
              _
            $region39: #{model_forward.6} parent=23 // pred_fallthru
              _
          $region24: #{model_forward.6} parent=19 // pred_fallthru
            _
          %295 = vnop
        $region20: #{model_forward.6} parent=15 // pred_fallthru
          _
        // Predicated region
        $region40: #{model_forward.6} parent=15 // pred_check
          %p296 = pneg %p73
        $region41: #{model_forward.6} parent=15 // pred_check_branch
          %298 = sbr.rel (%p296) target = $region43
        $region42: #{model_forward.6} parent=15 // pred_region
          %p299 = scmp.lt.s32.totalorder %s20, 1
          %s300 = scalar_select %p299, %s20, 1
          %s301 = smul.addr %s300, 8
          %s302 = scalar_lea.vmem %s1, %s301
        $region43: #{model_forward.6} parent=15 // pred_fallthru
          _
        // Predicated region
        $region44: #{model_forward.6} parent=15 // pred_check
          %p303 = pneg %p99
        $region45: #{model_forward.6} parent=15 // pred_check_branch
          %305 = sbr.rel (%p303) target = $region47
        $region46: #{model_forward.6} parent=15 // pred_region
          %p306 = scmp.lt.s32.totalorder %s20, 1
          %s307 = scalar_select %p306, %s20, 1
          %s308 = smul.addr %s307, 8
          %s309 = scalar_lea.vmem %s2, %s308
        $region47: #{model_forward.6} parent=15 // pred_fallthru
          _
      $region16: #{model_forward.6} parent=5 // pred_fallthru
        _
      %p310 = scmp.le.s32.totalorder 1, %s13
      %p311 = scmp.lt.s32.totalorder %s13, 5
      %p312 = pnand %p310, %p311
      %p313 = pneg %p312
      // Predicated region
      $region48: #{model_forward.6} parent=5 // pred_check
        _
      $region49: #{model_forward.6} parent=5 // pred_check_branch
        %315 = sbr.rel (%p312) target = $region51
      $region50: #{model_forward.6} parent=5 // pred_region
        %s316 = ssub.s32 %s13, 1
        %s317 = sand.u32 %s40, 1
        %s318 = sand.u32 %s40, 1
        %s319 = smul.addr %s318, 256
        %s320 = scalar_lea.vmem [#allocation6], %s319
        // Predicated region
        $region52: #{model_forward.6} parent=50 // pred_check
          %p321 = pneg %p53
        $region53: #{model_forward.6} parent=50 // pred_check_branch
          %323 = sbr.rel (%p321) target = $region55
        $region54: #{model_forward.6} parent=50 // pred_region
          _
        $region55: #{model_forward.6} parent=50 // pred_fallthru
          _
        %s324 = sand.u32 %s40, 1
        %s325 = sand.u32 %s40, 1
        %s326 = smul.addr %s325, 256
        %s327 = scalar_lea.vmem [#allocation6], %s326
        %p328 = pneg %p53
        %p329 = pneg %p50
        %p330 = scmp.lt.s32.totalorder %s22, 1
        %s331 = scalar_select %p330, %s22, 1
        %s332 = smul.addr %s331, 8
        %s333 = scalar_lea.vmem %s1, %s332
        %p334 = pneg %p79
        %p335 = pneg %p76
        %p336 = scmp.lt.s32.totalorder %s22, 1
        %s337 = scalar_select %p336, %s22, 1
        %s338 = smul.addr %s337, 8
        %s339 = scalar_lea.vmem %s2, %s338
        %p340 = pneg %p105
        %p341 = pneg %p102
        %p342 = pneg %p133
        %p343 = pneg %p130
        %s344 = sand.u32 %s120, 1
        %s345 = sand.u32 %s120, 1
        %s346 = smul.addr %s345, 64
        %s347 = scalar_lea.vmem [#allocation7], %s346
        %p348 = pneg %p159
        %p349 = pneg %p156
        %p350 = scmp.lt.s32.totalorder %s22, 1
        %s351 = scalar_select %p350, %s22, 1
        %s352 = smul.addr %s351, 8
        %s353 = scalar_lea.vmem %s5, %s352
        %p354 = pneg %p185
        %p355 = pneg %p182
        %p356 = scmp.lt.s32.totalorder %s22, 1
        %s357 = scalar_select %p356, %s22, 1
        %s358 = smul.addr %s357, 8
        %s359 = scalar_lea.vmem %s6, %s358
        %s360 = smul.u32 8, %s23
        %p361 = scmp.lt.s32.totalorder %s22, 1
        %s362 = scalar_select %p361, %s22, 1
        %s363 = smul.addr %s362, 8
        %s364 = scalar_lea.vmem %s1, %s363
        %p365 = scmp.lt.s32.totalorder %s22, 1
        %s366 = scalar_select %p365, %s22, 1
        %s367 = smul.addr %s366, 8
        %s368 = scalar_lea.vmem %s2, %s367
        %s369 = smul.u32 8, %s23
        %p370 = scmp.lt.s32.totalorder %s22, 1
        %s371 = scalar_select %p370, %s22, 1
        %s372 = smul.addr %s371, 8
        %s373 = scalar_lea.vmem %s5, %s372
        %p374 = scmp.lt.s32.totalorder %s22, 1
        %s375 = scalar_select %p374, %s22, 1
        %s376 = smul.addr %s375, 8
        %s377 = scalar_lea.vmem %s6, %s376
        %p378 = scmp.eq.s32.totalorder %s23, 0
        // Predicated region
        $region56: #{model_forward.6} parent=50 // pred_check
          %p379 = pneg %p378
        $region57: #{model_forward.6} parent=50 // pred_check_branch
          %381 = sbr.rel (%p379) target = $region59
        $region58: #{model_forward.6} parent=50 // pred_region
          // Predicated region
          $region60: #{model_forward.6} parent=58 // pred_check
            _
          $region61: #{model_forward.6} parent=58 // pred_check_branch
            %383 = sbr.rel (0) target = $region63
          $region62: #{model_forward.6} parent=58 // pred_region
            loop: start=0, step=1, limit=1
            $region64: #{model_forward.6} parent=62 // loop_pre_header
              _
            $region65: #{model_forward.6} parent=62 // loop_header
              %s385 = sphi 0, %s389
              %p386 = scmp.ge.s32.totalorder %s385, 1
              %s390 = sphi %s3, %s3
              %s391 = sphi [#allocation4], [#allocation4]
            $region66: #{model_forward.6} parent=62 // loop_header_branch
              %388 = sbr.rel (%p386) target = $region70
            $region67: #{model_forward.6} parent=62 // loop_body
              %v392 = vld [vmem:[%s390] sm:$0xff]
              %393 = vst [vmem:[%s391] sm:$0xff] %v392
              %v394 = vld [vmem:[%s390 + $0x8] sm:$0xff]
              %395 = vst [vmem:[%s391 + $0x8] sm:$0xff] %v394
              %v396 = vld [vmem:[%s390 + $0x10] sm:$0xff]
              %397 = vst [vmem:[%s391 + $0x10] sm:$0xff] %v396
              %v398 = vld [vmem:[%s390 + $0x18] sm:$0xff]
              %399 = vst [vmem:[%s391 + $0x18] sm:$0xff] %v398
              %v400 = vld [vmem:[%s390 + $0x20] sm:$0xff]
              %401 = vst [vmem:[%s391 + $0x20] sm:$0xff] %v400
              %v402 = vld [vmem:[%s390 + $0x28] sm:$0xff]
              %403 = vst [vmem:[%s391 + $0x28] sm:$0xff] %v402
              %v404 = vld [vmem:[%s390 + $0x30] sm:$0xff]
              %405 = vst [vmem:[%s391 + $0x30] sm:$0xff] %v404
              %v406 = vld [vmem:[%s390 + $0x38] sm:$0xff]
              %407 = vst [vmem:[%s391 + $0x38] sm:$0xff] %v406
              %v408 = vld [vmem:[%s390 + $0x40] sm:$0xff]
              %409 = vst [vmem:[%s391 + $0x40] sm:$0xff] %v408
              %v410 = vld [vmem:[%s390 + $0x48] sm:$0xff]
              %411 = vst [vmem:[%s391 + $0x48] sm:$0xff] %v410
              %v412 = vld [vmem:[%s390 + $0x50] sm:$0xff]
              %413 = vst [vmem:[%s391 + $0x50] sm:$0xff] %v412
              %v414 = vld [vmem:[%s390 + $0x58] sm:$0xff]
              %415 = vst [vmem:[%s391 + $0x58] sm:$0xff] %v414
              %v416 = vld [vmem:[%s390 + $0x60] sm:$0xff]
              %417 = vst [vmem:[%s391 + $0x60] sm:$0xff] %v416
              %v418 = vld [vmem:[%s390 + $0x68] sm:$0xff]
              %419 = vst [vmem:[%s391 + $0x68] sm:$0xff] %v418
              %v420 = vld [vmem:[%s390 + $0x70] sm:$0xff]
              %421 = vst [vmem:[%s391 + $0x70] sm:$0xff] %v420
              %v422 = vld [vmem:[%s390 + $0x78] sm:$0xff]
              %423 = vst [vmem:[%s391 + $0x78] sm:$0xff] %v422
              %v424 = vld [vmem:[%s390 + $0x80] sm:$0xff]
              %425 = vst [vmem:[%s391 + $0x80] sm:$0xff] %v424
              %v426 = vld [vmem:[%s390 + $0x88] sm:$0xff]
              %427 = vst [vmem:[%s391 + $0x88] sm:$0xff] %v426
              %v428 = vld [vmem:[%s390 + $0x90] sm:$0xff]
              %429 = vst [vmem:[%s391 + $0x90] sm:$0xff] %v428
              %v430 = vld [vmem:[%s390 + $0x98] sm:$0xff]
              %431 = vst [vmem:[%s391 + $0x98] sm:$0xff] %v430
              %v432 = vld [vmem:[%s390 + $0xa0] sm:$0xff]
              %433 = vst [vmem:[%s391 + $0xa0] sm:$0xff] %v432
              %v434 = vld [vmem:[%s390 + $0xa8] sm:$0xff]
              %435 = vst [vmem:[%s391 + $0xa8] sm:$0xff] %v434
              %v436 = vld [vmem:[%s390 + $0xb0] sm:$0xff]
              %437 = vst [vmem:[%s391 + $0xb0] sm:$0xff] %v436
              %v438 = vld [vmem:[%s390 + $0xb8] sm:$0xff]
              %439 = vst [vmem:[%s391 + $0xb8] sm:$0xff] %v438
              %v440 = vld [vmem:[%s390 + $0xc0] sm:$0xff]
              %441 = vst [vmem:[%s391 + $0xc0] sm:$0xff] %v440
              %v442 = vld [vmem:[%s390 + $0xc8] sm:$0xff]
              %443 = vst [vmem:[%s391 + $0xc8] sm:$0xff] %v442
              %v444 = vld [vmem:[%s390 + $0xd0] sm:$0xff]
              %445 = vst [vmem:[%s391 + $0xd0] sm:$0xff] %v444
              %v446 = vld [vmem:[%s390 + $0xd8] sm:$0xff]
              %447 = vst [vmem:[%s391 + $0xd8] sm:$0xff] %v446
              %v448 = vld [vmem:[%s390 + $0xe0] sm:$0xff]
              %449 = vst [vmem:[%s391 + $0xe0] sm:$0xff] %v448
              %v450 = vld [vmem:[%s390 + $0xe8] sm:$0xff]
              %451 = vst [vmem:[%s391 + $0xe8] sm:$0xff] %v450
              %v452 = vld [vmem:[%s390 + $0xf0] sm:$0xff]
              %453 = vst [vmem:[%s391 + $0xf0] sm:$0xff] %v452
              %v454 = vld [vmem:[%s390 + $0xf8] sm:$0xff]
              %455 = vst [vmem:[%s391 + $0xf8] sm:$0xff] %v454
            $region68: #{model_forward.6} parent=62 // loop_footer
              %s389 = sadd.s32 1, %s385
            $region69: #{model_forward.6} parent=62 // loop_footer_branch
              %384 = sbr.rel target = $region65
            $region70: #{model_forward.6} parent=62 // loop_exit
              _
          $region63: #{model_forward.6} parent=58 // pred_fallthru
            _
          // Predicated region
          $region71: #{model_forward.6} parent=58 // pred_check
            _
          $region72: #{model_forward.6} parent=58 // pred_check_branch
            %457 = sbr.rel target = $region74
          $region73: #{model_forward.6} parent=58 // pred_region
            _
          $region74: #{model_forward.6} parent=58 // pred_fallthru
            _
          // Predicated region
          $region75: #{model_forward.6} parent=58 // pred_check
            _
          $region76: #{model_forward.6} parent=58 // pred_check_branch
            %460 = sbr.rel (0) target = $region78
          $region77: #{model_forward.6} parent=58 // pred_region
            %461 = vsyncadd [#allocation5], 4096
          $region78: #{model_forward.6} parent=58 // pred_fallthru
            _
          %s462 = smul.u32 4, 16
          %s463 = smul.u32 %s462, 4
          %s464 = sshll.u32 %s463, 4
          %465 = dma.done [#allocation5], %s464
          %v466 = vld [vmem:[%s364] sm:$0xff]
          %467 = vst [vmem:[#allocation2] sm:$0xff] %v466
          %v468 = vld [vmem:[%s368] sm:$0xff]
          %469 = vst [vmem:[#allocation3] sm:$0xff] %v468
        $region59: #{model_forward.6} parent=50 // pred_fallthru
          _
        %v470 = vld [vmem:[#allocation2] sm:$0xff]
        %v471 = vld [vmem:[#allocation3] sm:$0xff]
        %v472 = vld [vmem:[%s320] sm:$0xff]
        %v473 = vld [vmem:[%s320 + $0x8] sm:$0xff]
        %v474 = vld [vmem:[%s320 + $0x10] sm:$0xff]
        %v475 = vld [vmem:[%s320 + $0x18] sm:$0xff]
        %v476 = vpack.c.bf16 %v470, %v470
        %v477 = vld [vmem:[#allocation4] sm:$0xff]
        %v478 = vld [vmem:[#allocation4 + $0x8] sm:$0xff]
        %v479 = vld [vmem:[#allocation4 + $0x10] sm:$0xff]
        %v480 = vld [vmem:[#allocation4 + $0x18] sm:$0xff]
        %v481 = vld [vmem:[#allocation4 + $0x20] sm:$0xff]
        %v482 = vld [vmem:[#allocation4 + $0x28] sm:$0xff]
        %v483 = vld [vmem:[#allocation4 + $0x30] sm:$0xff]
        %v484 = vld [vmem:[#allocation4 + $0x38] sm:$0xff]
        %v485 = vld [vmem:[#allocation4 + $0x40] sm:$0xff]
        %v486 = vld [vmem:[#allocation4 + $0x48] sm:$0xff]
        %v487 = vld [vmem:[#allocation4 + $0x50] sm:$0xff]
        %v488 = vld [vmem:[#allocation4 + $0x58] sm:$0xff]
        %v489 = vld [vmem:[#allocation4 + $0x60] sm:$0xff]
        %v490 = vld [vmem:[#allocation4 + $0x68] sm:$0xff]
        %v491 = vld [vmem:[#allocation4 + $0x70] sm:$0xff]
        %v492 = vld [vmem:[#allocation4 + $0x78] sm:$0xff]
        %v493 = vld [vmem:[#allocation4 + $0x80] sm:$0xff]
        %v494 = vld [vmem:[#allocation4 + $0x88] sm:$0xff]
        %v495 = vld [vmem:[#allocation4 + $0x90] sm:$0xff]
        %v496 = vld [vmem:[#allocation4 + $0x98] sm:$0xff]
        %v497 = vld [vmem:[#allocation4 + $0xa0] sm:$0xff]
        %v498 = vld [vmem:[#allocation4 + $0xa8] sm:$0xff]
        %v499 = vld [vmem:[#allocation4 + $0xb0] sm:$0xff]
        %v500 = vld [vmem:[#allocation4 + $0xb8] sm:$0xff]
        %v501 = vld [vmem:[#allocation4 + $0xc0] sm:$0xff]
        %v502 = vld [vmem:[#allocation4 + $0xc8] sm:$0xff]
        %v503 = vld [vmem:[#allocation4 + $0xd0] sm:$0xff]
        %v504 = vld [vmem:[#allocation4 + $0xd8] sm:$0xff]
        %v505 = vld [vmem:[#allocation4 + $0xe0] sm:$0xff]
        %v506 = vld [vmem:[#allocation4 + $0xe8] sm:$0xff]
        %v507 = vld [vmem:[#allocation4 + $0xf0] sm:$0xff]
        %v508 = vld [vmem:[#allocation4 + $0xf8] sm:$0xff]
        %v541 = vunpack.c.l.b16 %v477
        %v542 = vunpack.c.h.b16 %v477
        %v543 = vunpack.c.l.b16 %v478
        %v544 = vunpack.c.h.b16 %v478
        %v545 = vunpack.c.l.b16 %v479
        %v546 = vunpack.c.h.b16 %v479
        %v547 = vunpack.c.l.b16 %v480
        %v548 = vunpack.c.h.b16 %v480
        %v549 = vunpack.c.l.b16 %v481
        %v550 = vunpack.c.h.b16 %v481
        %v551 = vunpack.c.l.b16 %v482
        %v552 = vunpack.c.h.b16 %v482
        %v553 = vunpack.c.l.b16 %v483
        %v554 = vunpack.c.h.b16 %v483
        %v555 = vunpack.c.l.b16 %v484
        %v556 = vunpack.c.h.b16 %v484
        %v557 = vunpack.c.l.b16 %v485
        %v558 = vunpack.c.h.b16 %v485
        %v559 = vunpack.c.l.b16 %v486
        %v560 = vunpack.c.h.b16 %v486
        %v561 = vunpack.c.l.b16 %v487
        %v562 = vunpack.c.h.b16 %v487
        %v563 = vunpack.c.l.b16 %v488
        %v564 = vunpack.c.h.b16 %v488
        %v565 = vunpack.c.l.b16 %v489
        %v566 = vunpack.c.h.b16 %v489
        %v567 = vunpack.c.l.b16 %v490
        %v568 = vunpack.c.h.b16 %v490
        %v569 = vunpack.c.l.b16 %v491
        %v570 = vunpack.c.h.b16 %v491
        %v571 = vunpack.c.l.b16 %v492
        %v572 = vunpack.c.h.b16 %v492
        %v573 = vunpack.c.l.b16 %v493
        %v574 = vunpack.c.h.b16 %v493
        %v575 = vunpack.c.l.b16 %v494
        %v576 = vunpack.c.h.b16 %v494
        %v577 = vunpack.c.l.b16 %v495
        %v578 = vunpack.c.h.b16 %v495
        %v579 = vunpack.c.l.b16 %v496
        %v580 = vunpack.c.h.b16 %v496
        %v581 = vunpack.c.l.b16 %v497
        %v582 = vunpack.c.h.b16 %v497
        %v583 = vunpack.c.l.b16 %v498
        %v584 = vunpack.c.h.b16 %v498
        %v585 = vunpack.c.l.b16 %v499
        %v586 = vunpack.c.h.b16 %v499
        %v587 = vunpack.c.l.b16 %v500
        %v588 = vunpack.c.h.b16 %v500
        %v589 = vunpack.c.l.b16 %v501
        %v590 = vunpack.c.h.b16 %v501
        %v591 = vunpack.c.l.b16 %v502
        %v592 = vunpack.c.h.b16 %v502
        %v593 = vunpack.c.l.b16 %v503
        %v594 = vunpack.c.h.b16 %v503
        %v595 = vunpack.c.l.b16 %v504
        %v596 = vunpack.c.h.b16 %v504
        %v597 = vunpack.c.l.b16 %v505
        %v598 = vunpack.c.h.b16 %v505
        %v599 = vunpack.c.l.b16 %v506
        %v600 = vunpack.c.h.b16 %v506
        %v601 = vunpack.c.l.b16 %v507
        %v602 = vunpack.c.h.b16 %v507
        %v603 = vunpack.c.l.b16 %v508
        %v604 = vunpack.c.h.b16 %v508
        %v605 = vpack.c.b16 %v545, %v541
        %v606 = vpack.c.b16 %v546, %v542
        %v607 = vpack.c.b16 %v547, %v543
        %v608 = vpack.c.b16 %v548, %v544
        %v609 = vpack.c.b16 %v553, %v549
        %v610 = vpack.c.b16 %v554, %v550
        %v611 = vpack.c.b16 %v555, %v551
        %v612 = vpack.c.b16 %v556, %v552
        %v613 = vpack.c.b16 %v561, %v557
        %v614 = vpack.c.b16 %v562, %v558
        %v615 = vpack.c.b16 %v563, %v559
        %v616 = vpack.c.b16 %v564, %v560
        %v617 = vpack.c.b16 %v569, %v565
        %v618 = vpack.c.b16 %v570, %v566
        %v619 = vpack.c.b16 %v571, %v567
        %v620 = vpack.c.b16 %v572, %v568
        %v621 = vpack.c.b16 %v577, %v573
        %v622 = vpack.c.b16 %v578, %v574
        %v623 = vpack.c.b16 %v579, %v575
        %v624 = vpack.c.b16 %v580, %v576
        %v625 = vpack.c.b16 %v585, %v581
        %v626 = vpack.c.b16 %v586, %v582
        %v627 = vpack.c.b16 %v587, %v583
        %v628 = vpack.c.b16 %v588, %v584
        %v629 = vpack.c.b16 %v593, %v589
        %v630 = vpack.c.b16 %v594, %v590
        %v631 = vpack.c.b16 %v595, %v591
        %v632 = vpack.c.b16 %v596, %v592
        %v633 = vpack.c.b16 %v601, %v597
        %v634 = vpack.c.b16 %v602, %v598
        %v635 = vpack.c.b16 %v603, %v599
        %v636 = vpack.c.b16 %v604, %v600
        %669 = vmatpush.bf16.msra.mxu0 %v633
        %670 = vmatpush.bf16.msra.mxu0 %v629
        %671 = vmatpush.bf16.msra.mxu0 %v625
        %672 = vmatpush.bf16.msra.mxu0 %v621
        %673 = vmatpush.bf16.msra.mxu0 %v617
        %674 = vmatpush.bf16.msra.mxu0 %v613
        %675 = vmatpush.bf16.msra.mxu0 %v609
        %676 = vmatpush.bf16.msra.mxu0 %v605
        %677 = vmatmul.bf16.gmra.mxu0 %v476
        %v678 = vpop.f32.mrf.mxu0
        %v679 = vadd.f32 0.0, %v678
        %v680 = vpop.f32.mrf.mxu0
        %681 = vdwg.mxu0
        %682 = vmatpush.bf16.msra.mxu0 %v634
        %683 = vmatpush.bf16.msra.mxu0 %v630
        %684 = vmatpush.bf16.msra.mxu0 %v626
        %685 = vmatpush.bf16.msra.mxu0 %v622
        %686 = vmatpush.bf16.msra.mxu0 %v618
        %687 = vmatpush.bf16.msra.mxu0 %v614
        %688 = vmatpush.bf16.msra.mxu0 %v610
        %689 = vmatpush.bf16.msra.mxu0 %v606
        %690 = vmatmul.bf16.gmra.mxu0 %v476
        %v691 = vpop.f32.mrf.mxu0
        %v692 = vadd.f32 0.0, %v691
        %v693 = vpop.f32.mrf.mxu0
        %694 = vdwg.mxu0
        %695 = vmatpush.bf16.msra.mxu0 %v635
        %696 = vmatpush.bf16.msra.mxu0 %v631
        %697 = vmatpush.bf16.msra.mxu0 %v627
        %698 = vmatpush.bf16.msra.mxu0 %v623
        %699 = vmatpush.bf16.msra.mxu0 %v619
        %700 = vmatpush.bf16.msra.mxu0 %v615
        %701 = vmatpush.bf16.msra.mxu0 %v611
        %702 = vmatpush.bf16.msra.mxu0 %v607
        %703 = vmatmul.bf16.gmra.mxu0 %v476
        %v704 = vpop.f32.mrf.mxu0
        %v705 = vadd.f32 0.0, %v704
        %v706 = vpop.f32.mrf.mxu0
        %707 = vdwg.mxu0
        %708 = vmatpush.bf16.msra.mxu0 %v636
        %709 = vmatpush.bf16.msra.mxu0 %v632
        %710 = vmatpush.bf16.msra.mxu0 %v628
        %711 = vmatpush.bf16.msra.mxu0 %v624
        %712 = vmatpush.bf16.msra.mxu0 %v620
        %713 = vmatpush.bf16.msra.mxu0 %v616
        %714 = vmatpush.bf16.msra.mxu0 %v612
        %715 = vmatpush.bf16.msra.mxu0 %v608
        %716 = vmatmul.bf16.gmra.mxu0 %v476
        %v717 = vpop.f32.mrf.mxu0
        %v718 = vadd.f32 0.0, %v717
        %v719 = vpop.f32.mrf.mxu0
        %720 = vdwg.mxu0
        %v721 = vadd.f32 %v472, %v679
        %v722 = vadd.f32 %v473, %v692
        %v723 = vadd.f32 %v474, %v705
        %v724 = vadd.f32 %v475, %v718
        %v725 = vxor.u32 %v721, 2147483648
        %v726 = vmul.f32 %v725, 1.442695
        %v727 = vpow.pop %v726
        %v728 = vadd.f32 %v727, 1.0
        %v729 = vrcp.pop %v728
        %v730 = vmul.f32 %v728, %v729
        %v731 = vsub.f32 1.0, %v730
        %v732 = vmul.f32 %v729, %v731
        %v733 = vadd.f32 %v729, %v732
        %vm734 = vweird.f32 %v728
        %vm735 = vweird.f32 %v729
        %vm736 = vmor %vm734, %vm735
        %v737 = vsel %vm736, %v729, %v733
        %v738 = vand.u32 2147483647, %v728
        %vm739 = vcmp.eq.f32.partialorder %v738, 8.507059e+37
        %v740 = vand.u32 %v728, 2147483648
        %v741 = vor.u32 1.1754944e-38, %v740
        %v742 = vsel %vm739, %v741, %v737
        %v743 = vmul.f32 1.0, %v742
        %v744 = vxor.u32 %v722, 2147483648
        %v745 = vmul.f32 %v744, 1.442695
        %v746 = vpow.pop %v745
        %v747 = vadd.f32 %v746, 1.0
        %v748 = vrcp.pop %v747
        %v749 = vmul.f32 %v747, %v748
        %v750 = vsub.f32 1.0, %v749
        %v751 = vmul.f32 %v748, %v750
        %v752 = vadd.f32 %v748, %v751
        %vm753 = vweird.f32 %v747
        %vm754 = vweird.f32 %v748
        %vm755 = vmor %vm753, %vm754
        %v756 = vsel %vm755, %v748, %v752
        %v757 = vand.u32 2147483647, %v747
        %vm758 = vcmp.eq.f32.partialorder %v757, 8.507059e+37
        %v759 = vand.u32 %v747, 2147483648
        %v760 = vor.u32 1.1754944e-38, %v759
        %v761 = vsel %vm758, %v760, %v756
        %v762 = vmul.f32 1.0, %v761
        %v763 = vtanh.pop %v723
        %v764 = vxor.u32 %v724, 2147483648
        %v765 = vmul.f32 %v764, 1.442695
        %v766 = vpow.pop %v765
        %v767 = vadd.f32 %v766, 1.0
        %v768 = vrcp.pop %v767
        %v769 = vmul.f32 %v767, %v768
        %v770 = vsub.f32 1.0, %v769
        %v771 = vmul.f32 %v768, %v770
        %v772 = vadd.f32 %v768, %v771
        %vm773 = vweird.f32 %v767
        %vm774 = vweird.f32 %v768
        %vm775 = vmor %vm773, %vm774
        %v776 = vsel %vm775, %v768, %v772
        %v777 = vand.u32 2147483647, %v767
        %vm778 = vcmp.eq.f32.partialorder %v777, 8.507059e+37
        %v779 = vand.u32 %v767, 2147483648
        %v780 = vor.u32 1.1754944e-38, %v779
        %v781 = vsel %vm778, %v780, %v776
        %v782 = vmul.f32 1.0, %v781
        %v783 = vmul.f32 %v762, %v471
        %v784 = vmul.f32 %v743, %v763
        %v785 = vadd.f32 %v783, %v784
        %v786 = vtanh.pop %v785
        %v787 = vmul.f32 %v782, %v786
        %788 = vst [vmem:[%s347] sm:$0xff] %v787
        %s789 = scalar_lea.vmem %s320, 32 [#allocation6]
        %v790 = vld [vmem:[%s789] sm:$0xff]
        %v791 = vld [vmem:[%s789 + $0x8] sm:$0xff]
        %v792 = vld [vmem:[%s789 + $0x10] sm:$0xff]
        %v793 = vld [vmem:[%s789 + $0x18] sm:$0xff]
        %v794 = vpack.c.bf16 %v787, %v787
        %v795 = vld [vmem:[#allocation4] sm:$0xff]
        %v796 = vld [vmem:[#allocation4 + $0x8] sm:$0xff]
        %v797 = vld [vmem:[#allocation4 + $0x10] sm:$0xff]
        %v798 = vld [vmem:[#allocation4 + $0x18] sm:$0xff]
        %v799 = vld [vmem:[#allocation4 + $0x20] sm:$0xff]
        %v800 = vld [vmem:[#allocation4 + $0x28] sm:$0xff]
        %v801 = vld [vmem:[#allocation4 + $0x30] sm:$0xff]
        %v802 = vld [vmem:[#allocation4 + $0x38] sm:$0xff]
        %v803 = vld [vmem:[#allocation4 + $0x40] sm:$0xff]
        %v804 = vld [vmem:[#allocation4 + $0x48] sm:$0xff]
        %v805 = vld [vmem:[#allocation4 + $0x50] sm:$0xff]
        %v806 = vld [vmem:[#allocation4 + $0x58] sm:$0xff]
        %v807 = vld [vmem:[#allocation4 + $0x60] sm:$0xff]
        %v808 = vld [vmem:[#allocation4 + $0x68] sm:$0xff]
        %v809 = vld [vmem:[#allocation4 + $0x70] sm:$0xff]
        %v810 = vld [vmem:[#allocation4 + $0x78] sm:$0xff]
        %v811 = vld [vmem:[#allocation4 + $0x80] sm:$0xff]
        %v812 = vld [vmem:[#allocation4 + $0x88] sm:$0xff]
        %v813 = vld [vmem:[#allocation4 + $0x90] sm:$0xff]
        %v814 = vld [vmem:[#allocation4 + $0x98] sm:$0xff]
        %v815 = vld [vmem:[#allocation4 + $0xa0] sm:$0xff]
        %v816 = vld [vmem:[#allocation4 + $0xa8] sm:$0xff]
        %v817 = vld [vmem:[#allocation4 + $0xb0] sm:$0xff]
        %v818 = vld [vmem:[#allocation4 + $0xb8] sm:$0xff]
        %v819 = vld [vmem:[#allocation4 + $0xc0] sm:$0xff]
        %v820 = vld [vmem:[#allocation4 + $0xc8] sm:$0xff]
        %v821 = vld [vmem:[#allocation4 + $0xd0] sm:$0xff]
        %v822 = vld [vmem:[#allocation4 + $0xd8] sm:$0xff]
        %v823 = vld [vmem:[#allocation4 + $0xe0] sm:$0xff]
        %v824 = vld [vmem:[#allocation4 + $0xe8] sm:$0xff]
        %v825 = vld [vmem:[#allocation4 + $0xf0] sm:$0xff]
        %v826 = vld [vmem:[#allocation4 + $0xf8] sm:$0xff]
        %v859 = vunpack.c.l.b16 %v795
        %v860 = vunpack.c.h.b16 %v795
        %v861 = vunpack.c.l.b16 %v796
        %v862 = vunpack.c.h.b16 %v796
        %v863 = vunpack.c.l.b16 %v797
        %v864 = vunpack.c.h.b16 %v797
        %v865 = vunpack.c.l.b16 %v798
        %v866 = vunpack.c.h.b16 %v798
        %v867 = vunpack.c.l.b16 %v799
        %v868 = vunpack.c.h.b16 %v799
        %v869 = vunpack.c.l.b16 %v800
        %v870 = vunpack.c.h.b16 %v800
        %v871 = vunpack.c.l.b16 %v801
        %v872 = vunpack.c.h.b16 %v801
        %v873 = vunpack.c.l.b16 %v802
        %v874 = vunpack.c.h.b16 %v802
        %v875 = vunpack.c.l.b16 %v803
        %v876 = vunpack.c.h.b16 %v803
        %v877 = vunpack.c.l.b16 %v804
        %v878 = vunpack.c.h.b16 %v804
        %v879 = vunpack.c.l.b16 %v805
        %v880 = vunpack.c.h.b16 %v805
        %v881 = vunpack.c.l.b16 %v806
        %v882 = vunpack.c.h.b16 %v806
        %v883 = vunpack.c.l.b16 %v807
        %v884 = vunpack.c.h.b16 %v807
        %v885 = vunpack.c.l.b16 %v808
        %v886 = vunpack.c.h.b16 %v808
        %v887 = vunpack.c.l.b16 %v809
        %v888 = vunpack.c.h.b16 %v809
        %v889 = vunpack.c.l.b16 %v810
        %v890 = vunpack.c.h.b16 %v810
        %v891 = vunpack.c.l.b16 %v811
        %v892 = vunpack.c.h.b16 %v811
        %v893 = vunpack.c.l.b16 %v812
        %v894 = vunpack.c.h.b16 %v812
        %v895 = vunpack.c.l.b16 %v813
        %v896 = vunpack.c.h.b16 %v813
        %v897 = vunpack.c.l.b16 %v814
        %v898 = vunpack.c.h.b16 %v814
        %v899 = vunpack.c.l.b16 %v815
        %v900 = vunpack.c.h.b16 %v815
        %v901 = vunpack.c.l.b16 %v816
        %v902 = vunpack.c.h.b16 %v816
        %v903 = vunpack.c.l.b16 %v817
        %v904 = vunpack.c.h.b16 %v817
        %v905 = vunpack.c.l.b16 %v818
        %v906 = vunpack.c.h.b16 %v818
        %v907 = vunpack.c.l.b16 %v819
        %v908 = vunpack.c.h.b16 %v819
        %v909 = vunpack.c.l.b16 %v820
        %v910 = vunpack.c.h.b16 %v820
        %v911 = vunpack.c.l.b16 %v821
        %v912 = vunpack.c.h.b16 %v821
        %v913 = vunpack.c.l.b16 %v822
        %v914 = vunpack.c.h.b16 %v822
        %v915 = vunpack.c.l.b16 %v823
        %v916 = vunpack.c.h.b16 %v823
        %v917 = vunpack.c.l.b16 %v824
        %v918 = vunpack.c.h.b16 %v824
        %v919 = vunpack.c.l.b16 %v825
        %v920 = vunpack.c.h.b16 %v825
        %v921 = vunpack.c.l.b16 %v826
        %v922 = vunpack.c.h.b16 %v826
        %v923 = vpack.c.b16 %v863, %v859
        %v924 = vpack.c.b16 %v864, %v860
        %v925 = vpack.c.b16 %v865, %v861
        %v926 = vpack.c.b16 %v866, %v862
        %v927 = vpack.c.b16 %v871, %v867
        %v928 = vpack.c.b16 %v872, %v868
        %v929 = vpack.c.b16 %v873, %v869
        %v930 = vpack.c.b16 %v874, %v870
        %v931 = vpack.c.b16 %v879, %v875
        %v932 = vpack.c.b16 %v880, %v876
        %v933 = vpack.c.b16 %v881, %v877
        %v934 = vpack.c.b16 %v882, %v878
        %v935 = vpack.c.b16 %v887, %v883
        %v936 = vpack.c.b16 %v888, %v884
        %v937 = vpack.c.b16 %v889, %v885
        %v938 = vpack.c.b16 %v890, %v886
        %v939 = vpack.c.b16 %v895, %v891
        %v940 = vpack.c.b16 %v896, %v892
        %v941 = vpack.c.b16 %v897, %v893
        %v942 = vpack.c.b16 %v898, %v894
        %v943 = vpack.c.b16 %v903, %v899
        %v944 = vpack.c.b16 %v904, %v900
        %v945 = vpack.c.b16 %v905, %v901
        %v946 = vpack.c.b16 %v906, %v902
        %v947 = vpack.c.b16 %v911, %v907
        %v948 = vpack.c.b16 %v912, %v908
        %v949 = vpack.c.b16 %v913, %v909
        %v950 = vpack.c.b16 %v914, %v910
        %v951 = vpack.c.b16 %v919, %v915
        %v952 = vpack.c.b16 %v920, %v916
        %v953 = vpack.c.b16 %v921, %v917
        %v954 = vpack.c.b16 %v922, %v918
        %987 = vmatpush.bf16.msra.mxu0 %v951
        %988 = vmatpush.bf16.msra.mxu0 %v947
        %989 = vmatpush.bf16.msra.mxu0 %v943
        %990 = vmatpush.bf16.msra.mxu0 %v939
        %991 = vmatpush.bf16.msra.mxu0 %v935
        %992 = vmatpush.bf16.msra.mxu0 %v931
        %993 = vmatpush.bf16.msra.mxu0 %v927
        %994 = vmatpush.bf16.msra.mxu0 %v923
        %995 = vmatmul.bf16.gmra.mxu0 %v794
        %v996 = vpop.f32.mrf.mxu0
        %v997 = vadd.f32 0.0, %v996
        %v998 = vpop.f32.mrf.mxu0
        %999 = vdwg.mxu0
        %1000 = vmatpush.bf16.msra.mxu0 %v952
        %1001 = vmatpush.bf16.msra.mxu0 %v948
        %1002 = vmatpush.bf16.msra.mxu0 %v944
        %1003 = vmatpush.bf16.msra.mxu0 %v940
        %1004 = vmatpush.bf16.msra.mxu0 %v936
        %1005 = vmatpush.bf16.msra.mxu0 %v932
        %1006 = vmatpush.bf16.msra.mxu0 %v928
        %1007 = vmatpush.bf16.msra.mxu0 %v924
        %1008 = vmatmul.bf16.gmra.mxu0 %v794
        %v1009 = vpop.f32.mrf.mxu0
        %v1010 = vadd.f32 0.0, %v1009
        %v1011 = vpop.f32.mrf.mxu0
        %1012 = vdwg.mxu0
        %1013 = vmatpush.bf16.msra.mxu0 %v953
        %1014 = vmatpush.bf16.msra.mxu0 %v949
        %1015 = vmatpush.bf16.msra.mxu0 %v945
        %1016 = vmatpush.bf16.msra.mxu0 %v941
        %1017 = vmatpush.bf16.msra.mxu0 %v937
        %1018 = vmatpush.bf16.msra.mxu0 %v933
        %1019 = vmatpush.bf16.msra.mxu0 %v929
        %1020 = vmatpush.bf16.msra.mxu0 %v925
        %1021 = vmatmul.bf16.gmra.mxu0 %v794
        %v1022 = vpop.f32.mrf.mxu0
        %v1023 = vadd.f32 0.0, %v1022
        %v1024 = vpop.f32.mrf.mxu0
        %1025 = vdwg.mxu0
        %1026 = vmatpush.bf16.msra.mxu0 %v954
        %1027 = vmatpush.bf16.msra.mxu0 %v950
        %1028 = vmatpush.bf16.msra.mxu0 %v946
        %1029 = vmatpush.bf16.msra.mxu0 %v942
        %1030 = vmatpush.bf16.msra.mxu0 %v938
        %1031 = vmatpush.bf16.msra.mxu0 %v934
        %1032 = vmatpush.bf16.msra.mxu0 %v930
        %1033 = vmatpush.bf16.msra.mxu0 %v926
        %1034 = vmatmul.bf16.gmra.mxu0 %v794
        %v1035 = vpop.f32.mrf.mxu0
        %v1036 = vadd.f32 0.0, %v1035
        %v1037 = vpop.f32.mrf.mxu0
        %1038 = vdwg.mxu0
        %v1039 = vadd.f32 %v790, %v997
        %v1040 = vadd.f32 %v791, %v1010
        %v1041 = vadd.f32 %v792, %v1023
        %v1042 = vadd.f32 %v793, %v1036
        %v1043 = vxor.u32 %v1039, 2147483648
        %v1044 = vmul.f32 %v1043, 1.442695
        %v1045 = vpow.pop %v1044
        %v1046 = vadd.f32 %v1045, 1.0
        %v1047 = vrcp.pop %v1046
        %v1048 = vmul.f32 %v1046, %v1047
        %v1049 = vsub.f32 1.0, %v1048
        %v1050 = vmul.f32 %v1047, %v1049
        %v1051 = vadd.f32 %v1047, %v1050
        %vm1052 = vweird.f32 %v1046
        %vm1053 = vweird.f32 %v1047
        %vm1054 = vmor %vm1052, %vm1053
        %v1055 = vsel %vm1054, %v1047, %v1051
        %v1056 = vand.u32 2147483647, %v1046
        %vm1057 = vcmp.eq.f32.partialorder %v1056, 8.507059e+37
        %v1058 = vand.u32 %v1046, 2147483648
        %v1059 = vor.u32 1.1754944e-38, %v1058
        %v1060 = vsel %vm1057, %v1059, %v1055
        %v1061 = vmul.f32 1.0, %v1060
        %v1062 = vxor.u32 %v1040, 2147483648
        %v1063 = vmul.f32 %v1062, 1.442695
        %v1064 = vpow.pop %v1063
        %v1065 = vadd.f32 %v1064, 1.0
        %v1066 = vrcp.pop %v1065
        %v1067 = vmul.f32 %v1065, %v1066
        %v1068 = vsub.f32 1.0, %v1067
        %v1069 = vmul.f32 %v1066, %v1068
        %v1070 = vadd.f32 %v1066, %v1069
        %vm1071 = vweird.f32 %v1065
        %vm1072 = vweird.f32 %v1066
        %vm1073 = vmor %vm1071, %vm1072
        %v1074 = vsel %vm1073, %v1066, %v1070
        %v1075 = vand.u32 2147483647, %v1065
        %vm1076 = vcmp.eq.f32.partialorder %v1075, 8.507059e+37
        %v1077 = vand.u32 %v1065, 2147483648
        %v1078 = vor.u32 1.1754944e-38, %v1077
        %v1079 = vsel %vm1076, %v1078, %v1074
        %v1080 = vmul.f32 1.0, %v1079
        %v1081 = vtanh.pop %v1041
        %v1082 = vxor.u32 %v1042, 2147483648
        %v1083 = vmul.f32 %v1082, 1.442695
        %v1084 = vpow.pop %v1083
        %v1085 = vadd.f32 %v1084, 1.0
        %v1086 = vrcp.pop %v1085
        %v1087 = vmul.f32 %v1085, %v1086
        %v1088 = vsub.f32 1.0, %v1087
        %v1089 = vmul.f32 %v1086, %v1088
        %v1090 = vadd.f32 %v1086, %v1089
        %vm1091 = vweird.f32 %v1085
        %vm1092 = vweird.f32 %v1086
        %vm1093 = vmor %vm1091, %vm1092
        %v1094 = vsel %vm1093, %v1086, %v1090
        %v1095 = vand.u32 2147483647, %v1085
        %vm1096 = vcmp.eq.f32.partialorder %v1095, 8.507059e+37
        %v1097 = vand.u32 %v1085, 2147483648
        %v1098 = vor.u32 1.1754944e-38, %v1097
        %v1099 = vsel %vm1096, %v1098, %v1094
        %v1100 = vmul.f32 1.0, %v1099
        %v1101 = vmul.f32 %v1080, %v785
        %v1102 = vmul.f32 %v1061, %v1081
        %v1103 = vadd.f32 %v1101, %v1102
        %v1104 = vtanh.pop %v1103
        %v1105 = vmul.f32 %v1100, %v1104
        %s1106 = scalar_lea.vmem %s347, 8 [#allocation7]
        %1107 = vst [vmem:[%s1106] sm:$0xff] %v1105
        %s1108 = scalar_lea.vmem %s320, 64 [#allocation6]
        %v1109 = vld [vmem:[%s1108] sm:$0xff]
        %v1110 = vld [vmem:[%s1108 + $0x8] sm:$0xff]
        %v1111 = vld [vmem:[%s1108 + $0x10] sm:$0xff]
        %v1112 = vld [vmem:[%s1108 + $0x18] sm:$0xff]
        %v1113 = vpack.c.bf16 %v1105, %v1105
        %v1114 = vld [vmem:[#allocation4] sm:$0xff]
        %v1115 = vld [vmem:[#allocation4 + $0x8] sm:$0xff]
        %v1116 = vld [vmem:[#allocation4 + $0x10] sm:$0xff]
        %v1117 = vld [vmem:[#allocation4 + $0x18] sm:$0xff]
        %v1118 = vld [vmem:[#allocation4 + $0x20] sm:$0xff]
        %v1119 = vld [vmem:[#allocation4 + $0x28] sm:$0xff]
        %v1120 = vld [vmem:[#allocation4 + $0x30] sm:$0xff]
        %v1121 = vld [vmem:[#allocation4 + $0x38] sm:$0xff]
        %v1122 = vld [vmem:[#allocation4 + $0x40] sm:$0xff]
        %v1123 = vld [vmem:[#allocation4 + $0x48] sm:$0xff]
        %v1124 = vld [vmem:[#allocation4 + $0x50] sm:$0xff]
        %v1125 = vld [vmem:[#allocation4 + $0x58] sm:$0xff]
        %v1126 = vld [vmem:[#allocation4 + $0x60] sm:$0xff]
        %v1127 = vld [vmem:[#allocation4 + $0x68] sm:$0xff]
        %v1128 = vld [vmem:[#allocation4 + $0x70] sm:$0xff]
        %v1129 = vld [vmem:[#allocation4 + $0x78] sm:$0xff]
        %v1130 = vld [vmem:[#allocation4 + $0x80] sm:$0xff]
        %v1131 = vld [vmem:[#allocation4 + $0x88] sm:$0xff]
        %v1132 = vld [vmem:[#allocation4 + $0x90] sm:$0xff]
        %v1133 = vld [vmem:[#allocation4 + $0x98] sm:$0xff]
        %v1134 = vld [vmem:[#allocation4 + $0xa0] sm:$0xff]
        %v1135 = vld [vmem:[#allocation4 + $0xa8] sm:$0xff]
        %v1136 = vld [vmem:[#allocation4 + $0xb0] sm:$0xff]
        %v1137 = vld [vmem:[#allocation4 + $0xb8] sm:$0xff]
        %v1138 = vld [vmem:[#allocation4 + $0xc0] sm:$0xff]
        %v1139 = vld [vmem:[#allocation4 + $0xc8] sm:$0xff]
        %v1140 = vld [vmem:[#allocation4 + $0xd0] sm:$0xff]
        %v1141 = vld [vmem:[#allocation4 + $0xd8] sm:$0xff]
        %v1142 = vld [vmem:[#allocation4 + $0xe0] sm:$0xff]
        %v1143 = vld [vmem:[#allocation4 + $0xe8] sm:$0xff]
        %v1144 = vld [vmem:[#allocation4 + $0xf0] sm:$0xff]
        %v1145 = vld [vmem:[#allocation4 + $0xf8] sm:$0xff]
        %v1178 = vunpack.c.l.b16 %v1114
        %v1179 = vunpack.c.h.b16 %v1114
        %v1180 = vunpack.c.l.b16 %v1115
        %v1181 = vunpack.c.h.b16 %v1115
        %v1182 = vunpack.c.l.b16 %v1116
        %v1183 = vunpack.c.h.b16 %v1116
        %v1184 = vunpack.c.l.b16 %v1117
        %v1185 = vunpack.c.h.b16 %v1117
        %v1186 = vunpack.c.l.b16 %v1118
        %v1187 = vunpack.c.h.b16 %v1118
        %v1188 = vunpack.c.l.b16 %v1119
        %v1189 = vunpack.c.h.b16 %v1119
        %v1190 = vunpack.c.l.b16 %v1120
        %v1191 = vunpack.c.h.b16 %v1120
        %v1192 = vunpack.c.l.b16 %v1121
        %v1193 = vunpack.c.h.b16 %v1121
        %v1194 = vunpack.c.l.b16 %v1122
        %v1195 = vunpack.c.h.b16 %v1122
        %v1196 = vunpack.c.l.b16 %v1123
        %v1197 = vunpack.c.h.b16 %v1123
        %v1198 = vunpack.c.l.b16 %v1124
        %v1199 = vunpack.c.h.b16 %v1124
        %v1200 = vunpack.c.l.b16 %v1125
        %v1201 = vunpack.c.h.b16 %v1125
        %v1202 = vunpack.c.l.b16 %v1126
        %v1203 = vunpack.c.h.b16 %v1126
        %v1204 = vunpack.c.l.b16 %v1127
        %v1205 = vunpack.c.h.b16 %v1127
        %v1206 = vunpack.c.l.b16 %v1128
        %v1207 = vunpack.c.h.b16 %v1128
        %v1208 = vunpack.c.l.b16 %v1129
        %v1209 = vunpack.c.h.b16 %v1129
        %v1210 = vunpack.c.l.b16 %v1130
        %v1211 = vunpack.c.h.b16 %v1130
        %v1212 = vunpack.c.l.b16 %v1131
        %v1213 = vunpack.c.h.b16 %v1131
        %v1214 = vunpack.c.l.b16 %v1132
        %v1215 = vunpack.c.h.b16 %v1132
        %v1216 = vunpack.c.l.b16 %v1133
        %v1217 = vunpack.c.h.b16 %v1133
        %v1218 = vunpack.c.l.b16 %v1134
        %v1219 = vunpack.c.h.b16 %v1134
        %v1220 = vunpack.c.l.b16 %v1135
        %v1221 = vunpack.c.h.b16 %v1135
        %v1222 = vunpack.c.l.b16 %v1136
        %v1223 = vunpack.c.h.b16 %v1136
        %v1224 = vunpack.c.l.b16 %v1137
        %v1225 = vunpack.c.h.b16 %v1137
        %v1226 = vunpack.c.l.b16 %v1138
        %v1227 = vunpack.c.h.b16 %v1138
        %v1228 = vunpack.c.l.b16 %v1139
        %v1229 = vunpack.c.h.b16 %v1139
        %v1230 = vunpack.c.l.b16 %v1140
        %v1231 = vunpack.c.h.b16 %v1140
        %v1232 = vunpack.c.l.b16 %v1141
        %v1233 = vunpack.c.h.b16 %v1141
        %v1234 = vunpack.c.l.b16 %v1142
        %v1235 = vunpack.c.h.b16 %v1142
        %v1236 = vunpack.c.l.b16 %v1143
        %v1237 = vunpack.c.h.b16 %v1143
        %v1238 = vunpack.c.l.b16 %v1144
        %v1239 = vunpack.c.h.b16 %v1144
        %v1240 = vunpack.c.l.b16 %v1145
        %v1241 = vunpack.c.h.b16 %v1145
        %v1242 = vpack.c.b16 %v1182, %v1178
        %v1243 = vpack.c.b16 %v1183, %v1179
        %v1244 = vpack.c.b16 %v1184, %v1180
        %v1245 = vpack.c.b16 %v1185, %v1181
        %v1246 = vpack.c.b16 %v1190, %v1186
        %v1247 = vpack.c.b16 %v1191, %v1187
        %v1248 = vpack.c.b16 %v1192, %v1188
        %v1249 = vpack.c.b16 %v1193, %v1189
        %v1250 = vpack.c.b16 %v1198, %v1194
        %v1251 = vpack.c.b16 %v1199, %v1195
        %v1252 = vpack.c.b16 %v1200, %v1196
        %v1253 = vpack.c.b16 %v1201, %v1197
        %v1254 = vpack.c.b16 %v1206, %v1202
        %v1255 = vpack.c.b16 %v1207, %v1203
        %v1256 = vpack.c.b16 %v1208, %v1204
        %v1257 = vpack.c.b16 %v1209, %v1205
        %v1258 = vpack.c.b16 %v1214, %v1210
        %v1259 = vpack.c.b16 %v1215, %v1211
        %v1260 = vpack.c.b16 %v1216, %v1212
        %v1261 = vpack.c.b16 %v1217, %v1213
        %v1262 = vpack.c.b16 %v1222, %v1218
        %v1263 = vpack.c.b16 %v1223, %v1219
        %v1264 = vpack.c.b16 %v1224, %v1220
        %v1265 = vpack.c.b16 %v1225, %v1221
        %v1266 = vpack.c.b16 %v1230, %v1226
        %v1267 = vpack.c.b16 %v1231, %v1227
        %v1268 = vpack.c.b16 %v1232, %v1228
        %v1269 = vpack.c.b16 %v1233, %v1229
        %v1270 = vpack.c.b16 %v1238, %v1234
        %v1271 = vpack.c.b16 %v1239, %v1235
        %v1272 = vpack.c.b16 %v1240, %v1236
        %v1273 = vpack.c.b16 %v1241, %v1237
        %1306 = vmatpush.bf16.msra.mxu0 %v1270
        %1307 = vmatpush.bf16.msra.mxu0 %v1266
        %1308 = vmatpush.bf16.msra.mxu0 %v1262
        %1309 = vmatpush.bf16.msra.mxu0 %v1258
        %1310 = vmatpush.bf16.msra.mxu0 %v1254
        %1311 = vmatpush.bf16.msra.mxu0 %v1250
        %1312 = vmatpush.bf16.msra.mxu0 %v1246
        %1313 = vmatpush.bf16.msra.mxu0 %v1242
        %1314 = vmatmul.bf16.gmra.mxu0 %v1113
        %v1315 = vpop.f32.mrf.mxu0
        %v1316 = vadd.f32 0.0, %v1315
        %v1317 = vpop.f32.mrf.mxu0
        %1318 = vdwg.mxu0
        %1319 = vmatpush.bf16.msra.mxu0 %v1271
        %1320 = vmatpush.bf16.msra.mxu0 %v1267
        %1321 = vmatpush.bf16.msra.mxu0 %v1263
        %1322 = vmatpush.bf16.msra.mxu0 %v1259
        %1323 = vmatpush.bf16.msra.mxu0 %v1255
        %1324 = vmatpush.bf16.msra.mxu0 %v1251
        %1325 = vmatpush.bf16.msra.mxu0 %v1247
        %1326 = vmatpush.bf16.msra.mxu0 %v1243
        %1327 = vmatmul.bf16.gmra.mxu0 %v1113
        %v1328 = vpop.f32.mrf.mxu0
        %v1329 = vadd.f32 0.0, %v1328
        %v1330 = vpop.f32.mrf.mxu0
        %1331 = vdwg.mxu0
        %1332 = vmatpush.bf16.msra.mxu0 %v1272
        %1333 = vmatpush.bf16.msra.mxu0 %v1268
        %1334 = vmatpush.bf16.msra.mxu0 %v1264
        %1335 = vmatpush.bf16.msra.mxu0 %v1260
        %1336 = vmatpush.bf16.msra.mxu0 %v1256
        %1337 = vmatpush.bf16.msra.mxu0 %v1252
        %1338 = vmatpush.bf16.msra.mxu0 %v1248
        %1339 = vmatpush.bf16.msra.mxu0 %v1244
        %1340 = vmatmul.bf16.gmra.mxu0 %v1113
        %v1341 = vpop.f32.mrf.mxu0
        %v1342 = vadd.f32 0.0, %v1341
        %v1343 = vpop.f32.mrf.mxu0
        %1344 = vdwg.mxu0
        %1345 = vmatpush.bf16.msra.mxu0 %v1273
        %1346 = vmatpush.bf16.msra.mxu0 %v1269
        %1347 = vmatpush.bf16.msra.mxu0 %v1265
        %1348 = vmatpush.bf16.msra.mxu0 %v1261
        %1349 = vmatpush.bf16.msra.mxu0 %v1257
        %1350 = vmatpush.bf16.msra.mxu0 %v1253
        %1351 = vmatpush.bf16.msra.mxu0 %v1249
        %1352 = vmatpush.bf16.msra.mxu0 %v1245
        %1353 = vmatmul.bf16.gmra.mxu0 %v1113
        %v1354 = vpop.f32.mrf.mxu0
        %v1355 = vadd.f32 0.0, %v1354
        %v1356 = vpop.f32.mrf.mxu0
        %1357 = vdwg.mxu0
        %v1358 = vadd.f32 %v1109, %v1316
        %v1359 = vadd.f32 %v1110, %v1329
        %v1360 = vadd.f32 %v1111, %v1342
        %v1361 = vadd.f32 %v1112, %v1355
        %v1362 = vxor.u32 %v1358, 2147483648
        %v1363 = vmul.f32 %v1362, 1.442695
        %v1364 = vpow.pop %v1363
        %v1365 = vadd.f32 %v1364, 1.0
        %v1366 = vrcp.pop %v1365
        %v1367 = vmul.f32 %v1365, %v1366
        %v1368 = vsub.f32 1.0, %v1367
        %v1369 = vmul.f32 %v1366, %v1368
        %v1370 = vadd.f32 %v1366, %v1369
        %vm1371 = vweird.f32 %v1365
        %vm1372 = vweird.f32 %v1366
        %vm1373 = vmor %vm1371, %vm1372
        %v1374 = vsel %vm1373, %v1366, %v1370
        %v1375 = vand.u32 2147483647, %v1365
        %vm1376 = vcmp.eq.f32.partialorder %v1375, 8.507059e+37
        %v1377 = vand.u32 %v1365, 2147483648
        %v1378 = vor.u32 1.1754944e-38, %v1377
        %v1379 = vsel %vm1376, %v1378, %v1374
        %v1380 = vmul.f32 1.0, %v1379
        %v1381 = vxor.u32 %v1359, 2147483648
        %v1382 = vmul.f32 %v1381, 1.442695
        %v1383 = vpow.pop %v1382
        %v1384 = vadd.f32 %v1383, 1.0
        %v1385 = vrcp.pop %v1384
        %v1386 = vmul.f32 %v1384, %v1385
        %v1387 = vsub.f32 1.0, %v1386
        %v1388 = vmul.f32 %v1385, %v1387
        %v1389 = vadd.f32 %v1385, %v1388
        %vm1390 = vweird.f32 %v1384
        %vm1391 = vweird.f32 %v1385
        %vm1392 = vmor %vm1390, %vm1391
        %v1393 = vsel %vm1392, %v1385, %v1389
        %v1394 = vand.u32 2147483647, %v1384
        %vm1395 = vcmp.eq.f32.partialorder %v1394, 8.507059e+37
        %v1396 = vand.u32 %v1384, 2147483648
        %v1397 = vor.u32 1.1754944e-38, %v1396
        %v1398 = vsel %vm1395, %v1397, %v1393
        %v1399 = vmul.f32 1.0, %v1398
        %v1400 = vtanh.pop %v1360
        %v1401 = vxor.u32 %v1361, 2147483648
        %v1402 = vmul.f32 %v1401, 1.442695
        %v1403 = vpow.pop %v1402
        %v1404 = vadd.f32 %v1403, 1.0
        %v1405 = vrcp.pop %v1404
        %v1406 = vmul.f32 %v1404, %v1405
        %v1407 = vsub.f32 1.0, %v1406
        %v1408 = vmul.f32 %v1405, %v1407
        %v1409 = vadd.f32 %v1405, %v1408
        %vm1410 = vweird.f32 %v1404
        %vm1411 = vweird.f32 %v1405
        %vm1412 = vmor %vm1410, %vm1411
        %v1413 = vsel %vm1412, %v1405, %v1409
        %v1414 = vand.u32 2147483647, %v1404
        %vm1415 = vcmp.eq.f32.partialorder %v1414, 8.507059e+37
        %v1416 = vand.u32 %v1404, 2147483648
        %v1417 = vor.u32 1.1754944e-38, %v1416
        %v1418 = vsel %vm1415, %v1417, %v1413
        %v1419 = vmul.f32 1.0, %v1418
        %v1420 = vmul.f32 %v1399, %v1103
        %v1421 = vmul.f32 %v1380, %v1400
        %v1422 = vadd.f32 %v1420, %v1421
        %v1423 = vtanh.pop %v1422
        %v1424 = vmul.f32 %v1419, %v1423
        %s1425 = scalar_lea.vmem %s347, 16 [#allocation7]
        %1426 = vst [vmem:[%s1425] sm:$0xff] %v1424
        %s1427 = scalar_lea.vmem %s320, 96 [#allocation6]
        %v1428 = vld [vmem:[%s1427] sm:$0xff]
        %v1429 = vld [vmem:[%s1427 + $0x8] sm:$0xff]
        %v1430 = vld [vmem:[%s1427 + $0x10] sm:$0xff]
        %v1431 = vld [vmem:[%s1427 + $0x18] sm:$0xff]
        %v1432 = vpack.c.bf16 %v1424, %v1424
        %v1433 = vld [vmem:[#allocation4] sm:$0xff]
        %v1434 = vld [vmem:[#allocation4 + $0x8] sm:$0xff]
        %v1435 = vld [vmem:[#allocation4 + $0x10] sm:$0xff]
        %v1436 = vld [vmem:[#allocation4 + $0x18] sm:$0xff]
        %v1437 = vld [vmem:[#allocation4 + $0x20] sm:$0xff]
        %v1438 = vld [vmem:[#allocation4 + $0x28] sm:$0xff]
        %v1439 = vld [vmem:[#allocation4 + $0x30] sm:$0xff]
        %v1440 = vld [vmem:[#allocation4 + $0x38] sm:$0xff]
        %v1441 = vld [vmem:[#allocation4 + $0x40] sm:$0xff]
        %v1442 = vld [vmem:[#allocation4 + $0x48] sm:$0xff]
        %v1443 = vld [vmem:[#allocation4 + $0x50] sm:$0xff]
        %v1444 = vld [vmem:[#allocation4 + $0x58] sm:$0xff]
        %v1445 = vld [vmem:[#allocation4 + $0x60] sm:$0xff]
        %v1446 = vld [vmem:[#allocation4 + $0x68] sm:$0xff]
        %v1447 = vld [vmem:[#allocation4 + $0x70] sm:$0xff]
        %v1448 = vld [vmem:[#allocation4 + $0x78] sm:$0xff]
        %v1449 = vld [vmem:[#allocation4 + $0x80] sm:$0xff]
        %v1450 = vld [vmem:[#allocation4 + $0x88] sm:$0xff]
        %v1451 = vld [vmem:[#allocation4 + $0x90] sm:$0xff]
        %v1452 = vld [vmem:[#allocation4 + $0x98] sm:$0xff]
        %v1453 = vld [vmem:[#allocation4 + $0xa0] sm:$0xff]
        %v1454 = vld [vmem:[#allocation4 + $0xa8] sm:$0xff]
        %v1455 = vld [vmem:[#allocation4 + $0xb0] sm:$0xff]
        %v1456 = vld [vmem:[#allocation4 + $0xb8] sm:$0xff]
        %v1457 = vld [vmem:[#allocation4 + $0xc0] sm:$0xff]
        %v1458 = vld [vmem:[#allocation4 + $0xc8] sm:$0xff]
        %v1459 = vld [vmem:[#allocation4 + $0xd0] sm:$0xff]
        %v1460 = vld [vmem:[#allocation4 + $0xd8] sm:$0xff]
        %v1461 = vld [vmem:[#allocation4 + $0xe0] sm:$0xff]
        %v1462 = vld [vmem:[#allocation4 + $0xe8] sm:$0xff]
        %v1463 = vld [vmem:[#allocation4 + $0xf0] sm:$0xff]
        %v1464 = vld [vmem:[#allocation4 + $0xf8] sm:$0xff]
        %v1497 = vunpack.c.l.b16 %v1433
        %v1498 = vunpack.c.h.b16 %v1433
        %v1499 = vunpack.c.l.b16 %v1434
        %v1500 = vunpack.c.h.b16 %v1434
        %v1501 = vunpack.c.l.b16 %v1435
        %v1502 = vunpack.c.h.b16 %v1435
        %v1503 = vunpack.c.l.b16 %v1436
        %v1504 = vunpack.c.h.b16 %v1436
        %v1505 = vunpack.c.l.b16 %v1437
        %v1506 = vunpack.c.h.b16 %v1437
        %v1507 = vunpack.c.l.b16 %v1438
        %v1508 = vunpack.c.h.b16 %v1438
        %v1509 = vunpack.c.l.b16 %v1439
        %v1510 = vunpack.c.h.b16 %v1439
        %v1511 = vunpack.c.l.b16 %v1440
        %v1512 = vunpack.c.h.b16 %v1440
        %v1513 = vunpack.c.l.b16 %v1441
        %v1514 = vunpack.c.h.b16 %v1441
        %v1515 = vunpack.c.l.b16 %v1442
        %v1516 = vunpack.c.h.b16 %v1442
        %v1517 = vunpack.c.l.b16 %v1443
        %v1518 = vunpack.c.h.b16 %v1443
        %v1519 = vunpack.c.l.b16 %v1444
        %v1520 = vunpack.c.h.b16 %v1444
        %v1521 = vunpack.c.l.b16 %v1445
        %v1522 = vunpack.c.h.b16 %v1445
        %v1523 = vunpack.c.l.b16 %v1446
        %v1524 = vunpack.c.h.b16 %v1446
        %v1525 = vunpack.c.l.b16 %v1447
        %v1526 = vunpack.c.h.b16 %v1447
        %v1527 = vunpack.c.l.b16 %v1448
        %v1528 = vunpack.c.h.b16 %v1448
        %v1529 = vunpack.c.l.b16 %v1449
        %v1530 = vunpack.c.h.b16 %v1449
        %v1531 = vunpack.c.l.b16 %v1450
        %v1532 = vunpack.c.h.b16 %v1450
        %v1533 = vunpack.c.l.b16 %v1451
        %v1534 = vunpack.c.h.b16 %v1451
        %v1535 = vunpack.c.l.b16 %v1452
        %v1536 = vunpack.c.h.b16 %v1452
        %v1537 = vunpack.c.l.b16 %v1453
        %v1538 = vunpack.c.h.b16 %v1453
        %v1539 = vunpack.c.l.b16 %v1454
        %v1540 = vunpack.c.h.b16 %v1454
        %v1541 = vunpack.c.l.b16 %v1455
        %v1542 = vunpack.c.h.b16 %v1455
        %v1543 = vunpack.c.l.b16 %v1456
        %v1544 = vunpack.c.h.b16 %v1456
        %v1545 = vunpack.c.l.b16 %v1457
        %v1546 = vunpack.c.h.b16 %v1457
        %v1547 = vunpack.c.l.b16 %v1458
        %v1548 = vunpack.c.h.b16 %v1458
        %v1549 = vunpack.c.l.b16 %v1459
        %v1550 = vunpack.c.h.b16 %v1459
        %v1551 = vunpack.c.l.b16 %v1460
        %v1552 = vunpack.c.h.b16 %v1460
        %v1553 = vunpack.c.l.b16 %v1461
        %v1554 = vunpack.c.h.b16 %v1461
        %v1555 = vunpack.c.l.b16 %v1462
        %v1556 = vunpack.c.h.b16 %v1462
        %v1557 = vunpack.c.l.b16 %v1463
        %v1558 = vunpack.c.h.b16 %v1463
        %v1559 = vunpack.c.l.b16 %v1464
        %v1560 = vunpack.c.h.b16 %v1464
        %v1561 = vpack.c.b16 %v1501, %v1497
        %v1562 = vpack.c.b16 %v1502, %v1498
        %v1563 = vpack.c.b16 %v1503, %v1499
        %v1564 = vpack.c.b16 %v1504, %v1500
        %v1565 = vpack.c.b16 %v1509, %v1505
        %v1566 = vpack.c.b16 %v1510, %v1506
        %v1567 = vpack.c.b16 %v1511, %v1507
        %v1568 = vpack.c.b16 %v1512, %v1508
        %v1569 = vpack.c.b16 %v1517, %v1513
        %v1570 = vpack.c.b16 %v1518, %v1514
        %v1571 = vpack.c.b16 %v1519, %v1515
        %v1572 = vpack.c.b16 %v1520, %v1516
        %v1573 = vpack.c.b16 %v1525, %v1521
        %v1574 = vpack.c.b16 %v1526, %v1522
        %v1575 = vpack.c.b16 %v1527, %v1523
        %v1576 = vpack.c.b16 %v1528, %v1524
        %v1577 = vpack.c.b16 %v1533, %v1529
        %v1578 = vpack.c.b16 %v1534, %v1530
        %v1579 = vpack.c.b16 %v1535, %v1531
        %v1580 = vpack.c.b16 %v1536, %v1532
        %v1581 = vpack.c.b16 %v1541, %v1537
        %v1582 = vpack.c.b16 %v1542, %v1538
        %v1583 = vpack.c.b16 %v1543, %v1539
        %v1584 = vpack.c.b16 %v1544, %v1540
        %v1585 = vpack.c.b16 %v1549, %v1545
        %v1586 = vpack.c.b16 %v1550, %v1546
        %v1587 = vpack.c.b16 %v1551, %v1547
        %v1588 = vpack.c.b16 %v1552, %v1548
        %v1589 = vpack.c.b16 %v1557, %v1553
        %v1590 = vpack.c.b16 %v1558, %v1554
        %v1591 = vpack.c.b16 %v1559, %v1555
        %v1592 = vpack.c.b16 %v1560, %v1556
        %1625 = vmatpush.bf16.msra.mxu0 %v1589
        %1626 = vmatpush.bf16.msra.mxu0 %v1585
        %1627 = vmatpush.bf16.msra.mxu0 %v1581
        %1628 = vmatpush.bf16.msra.mxu0 %v1577
        %1629 = vmatpush.bf16.msra.mxu0 %v1573
        %1630 = vmatpush.bf16.msra.mxu0 %v1569
        %1631 = vmatpush.bf16.msra.mxu0 %v1565
        %1632 = vmatpush.bf16.msra.mxu0 %v1561
        %1633 = vmatmul.bf16.gmra.mxu0 %v1432
        %v1634 = vpop.f32.mrf.mxu0
        %v1635 = vadd.f32 0.0, %v1634
        %v1636 = vpop.f32.mrf.mxu0
        %1637 = vdwg.mxu0
        %1638 = vmatpush.bf16.msra.mxu0 %v1590
        %1639 = vmatpush.bf16.msra.mxu0 %v1586
        %1640 = vmatpush.bf16.msra.mxu0 %v1582
        %1641 = vmatpush.bf16.msra.mxu0 %v1578
        %1642 = vmatpush.bf16.msra.mxu0 %v1574
        %1643 = vmatpush.bf16.msra.mxu0 %v1570
        %1644 = vmatpush.bf16.msra.mxu0 %v1566
        %1645 = vmatpush.bf16.msra.mxu0 %v1562
        %1646 = vmatmul.bf16.gmra.mxu0 %v1432
        %v1647 = vpop.f32.mrf.mxu0
        %v1648 = vadd.f32 0.0, %v1647
        %v1649 = vpop.f32.mrf.mxu0
        %1650 = vdwg.mxu0
        %1651 = vmatpush.bf16.msra.mxu0 %v1591
        %1652 = vmatpush.bf16.msra.mxu0 %v1587
        %1653 = vmatpush.bf16.msra.mxu0 %v1583
        %1654 = vmatpush.bf16.msra.mxu0 %v1579
        %1655 = vmatpush.bf16.msra.mxu0 %v1575
        %1656 = vmatpush.bf16.msra.mxu0 %v1571
        %1657 = vmatpush.bf16.msra.mxu0 %v1567
        %1658 = vmatpush.bf16.msra.mxu0 %v1563
        %1659 = vmatmul.bf16.gmra.mxu0 %v1432
        %v1660 = vpop.f32.mrf.mxu0
        %v1661 = vadd.f32 0.0, %v1660
        %v1662 = vpop.f32.mrf.mxu0
        %1663 = vdwg.mxu0
        %1664 = vmatpush.bf16.msra.mxu0 %v1592
        %1665 = vmatpush.bf16.msra.mxu0 %v1588
        %1666 = vmatpush.bf16.msra.mxu0 %v1584
        %1667 = vmatpush.bf16.msra.mxu0 %v1580
        %1668 = vmatpush.bf16.msra.mxu0 %v1576
        %1669 = vmatpush.bf16.msra.mxu0 %v1572
        %1670 = vmatpush.bf16.msra.mxu0 %v1568
        %1671 = vmatpush.bf16.msra.mxu0 %v1564
        %1672 = vmatmul.bf16.gmra.mxu0 %v1432
        %v1673 = vpop.f32.mrf.mxu0
        %v1674 = vadd.f32 0.0, %v1673
        %v1675 = vpop.f32.mrf.mxu0
        %1676 = vdwg.mxu0
        %v1677 = vadd.f32 %v1428, %v1635
        %v1678 = vadd.f32 %v1429, %v1648
        %v1679 = vadd.f32 %v1430, %v1661
        %v1680 = vadd.f32 %v1431, %v1674
        %v1681 = vxor.u32 %v1677, 2147483648
        %v1682 = vmul.f32 %v1681, 1.442695
        %v1683 = vpow.pop %v1682
        %v1684 = vadd.f32 %v1683, 1.0
        %v1685 = vrcp.pop %v1684
        %v1686 = vmul.f32 %v1684, %v1685
        %v1687 = vsub.f32 1.0, %v1686
        %v1688 = vmul.f32 %v1685, %v1687
        %v1689 = vadd.f32 %v1685, %v1688
        %vm1690 = vweird.f32 %v1684
        %vm1691 = vweird.f32 %v1685
        %vm1692 = vmor %vm1690, %vm1691
        %v1693 = vsel %vm1692, %v1685, %v1689
        %v1694 = vand.u32 2147483647, %v1684
        %vm1695 = vcmp.eq.f32.partialorder %v1694, 8.507059e+37
        %v1696 = vand.u32 %v1684, 2147483648
        %v1697 = vor.u32 1.1754944e-38, %v1696
        %v1698 = vsel %vm1695, %v1697, %v1693
        %v1699 = vmul.f32 1.0, %v1698
        %v1700 = vxor.u32 %v1678, 2147483648
        %v1701 = vmul.f32 %v1700, 1.442695
        %v1702 = vpow.pop %v1701
        %v1703 = vadd.f32 %v1702, 1.0
        %v1704 = vrcp.pop %v1703
        %v1705 = vmul.f32 %v1703, %v1704
        %v1706 = vsub.f32 1.0, %v1705
        %v1707 = vmul.f32 %v1704, %v1706
        %v1708 = vadd.f32 %v1704, %v1707
        %vm1709 = vweird.f32 %v1703
        %vm1710 = vweird.f32 %v1704
        %vm1711 = vmor %vm1709, %vm1710
        %v1712 = vsel %vm1711, %v1704, %v1708
        %v1713 = vand.u32 2147483647, %v1703
        %vm1714 = vcmp.eq.f32.partialorder %v1713, 8.507059e+37
        %v1715 = vand.u32 %v1703, 2147483648
        %v1716 = vor.u32 1.1754944e-38, %v1715
        %v1717 = vsel %vm1714, %v1716, %v1712
        %v1718 = vmul.f32 1.0, %v1717
        %v1719 = vtanh.pop %v1679
        %v1720 = vxor.u32 %v1680, 2147483648
        %v1721 = vmul.f32 %v1720, 1.442695
        %v1722 = vpow.pop %v1721
        %v1723 = vadd.f32 %v1722, 1.0
        %v1724 = vrcp.pop %v1723
        %v1725 = vmul.f32 %v1723, %v1724
        %v1726 = vsub.f32 1.0, %v1725
        %v1727 = vmul.f32 %v1724, %v1726
        %v1728 = vadd.f32 %v1724, %v1727
        %vm1729 = vweird.f32 %v1723
        %vm1730 = vweird.f32 %v1724
        %vm1731 = vmor %vm1729, %vm1730
        %v1732 = vsel %vm1731, %v1724, %v1728
        %v1733 = vand.u32 2147483647, %v1723
        %vm1734 = vcmp.eq.f32.partialorder %v1733, 8.507059e+37
        %v1735 = vand.u32 %v1723, 2147483648
        %v1736 = vor.u32 1.1754944e-38, %v1735
        %v1737 = vsel %vm1734, %v1736, %v1732
        %v1738 = vmul.f32 1.0, %v1737
        %v1739 = vmul.f32 %v1718, %v1422
        %v1740 = vmul.f32 %v1699, %v1719
        %v1741 = vadd.f32 %v1739, %v1740
        %v1742 = vtanh.pop %v1741
        %v1743 = vmul.f32 %v1738, %v1742
        %s1744 = scalar_lea.vmem %s347, 24 [#allocation7]
        %1745 = vst [vmem:[%s1744] sm:$0xff] %v1743
        %s1746 = scalar_lea.vmem %s320, 128 [#allocation6]
        %v1747 = vld [vmem:[%s1746] sm:$0xff]
        %v1748 = vld [vmem:[%s1746 + $0x8] sm:$0xff]
        %v1749 = vld [vmem:[%s1746 + $0x10] sm:$0xff]
        %v1750 = vld [vmem:[%s1746 + $0x18] sm:$0xff]
        %v1751 = vpack.c.bf16 %v1743, %v1743
        %v1752 = vld [vmem:[#allocation4] sm:$0xff]
        %v1753 = vld [vmem:[#allocation4 + $0x8] sm:$0xff]
        %v1754 = vld [vmem:[#allocation4 + $0x10] sm:$0xff]
        %v1755 = vld [vmem:[#allocation4 + $0x18] sm:$0xff]
        %v1756 = vld [vmem:[#allocation4 + $0x20] sm:$0xff]
        %v1757 = vld [vmem:[#allocation4 + $0x28] sm:$0xff]
        %v1758 = vld [vmem:[#allocation4 + $0x30] sm:$0xff]
        %v1759 = vld [vmem:[#allocation4 + $0x38] sm:$0xff]
        %v1760 = vld [vmem:[#allocation4 + $0x40] sm:$0xff]
        %v1761 = vld [vmem:[#allocation4 + $0x48] sm:$0xff]
        %v1762 = vld [vmem:[#allocation4 + $0x50] sm:$0xff]
        %v1763 = vld [vmem:[#allocation4 + $0x58] sm:$0xff]
        %v1764 = vld [vmem:[#allocation4 + $0x60] sm:$0xff]
        %v1765 = vld [vmem:[#allocation4 + $0x68] sm:$0xff]
        %v1766 = vld [vmem:[#allocation4 + $0x70] sm:$0xff]
        %v1767 = vld [vmem:[#allocation4 + $0x78] sm:$0xff]
        %v1768 = vld [vmem:[#allocation4 + $0x80] sm:$0xff]
        %v1769 = vld [vmem:[#allocation4 + $0x88] sm:$0xff]
        %v1770 = vld [vmem:[#allocation4 + $0x90] sm:$0xff]
        %v1771 = vld [vmem:[#allocation4 + $0x98] sm:$0xff]
        %v1772 = vld [vmem:[#allocation4 + $0xa0] sm:$0xff]
        %v1773 = vld [vmem:[#allocation4 + $0xa8] sm:$0xff]
        %v1774 = vld [vmem:[#allocation4 + $0xb0] sm:$0xff]
        %v1775 = vld [vmem:[#allocation4 + $0xb8] sm:$0xff]
        %v1776 = vld [vmem:[#allocation4 + $0xc0] sm:$0xff]
        %v1777 = vld [vmem:[#allocation4 + $0xc8] sm:$0xff]
        %v1778 = vld [vmem:[#allocation4 + $0xd0] sm:$0xff]
        %v1779 = vld [vmem:[#allocation4 + $0xd8] sm:$0xff]
        %v1780 = vld [vmem:[#allocation4 + $0xe0] sm:$0xff]
        %v1781 = vld [vmem:[#allocation4 + $0xe8] sm:$0xff]
        %v1782 = vld [vmem:[#allocation4 + $0xf0] sm:$0xff]
        %v1783 = vld [vmem:[#allocation4 + $0xf8] sm:$0xff]
        %v1816 = vunpack.c.l.b16 %v1752
        %v1817 = vunpack.c.h.b16 %v1752
        %v1818 = vunpack.c.l.b16 %v1753
        %v1819 = vunpack.c.h.b16 %v1753
        %v1820 = vunpack.c.l.b16 %v1754
        %v1821 = vunpack.c.h.b16 %v1754
        %v1822 = vunpack.c.l.b16 %v1755
        %v1823 = vunpack.c.h.b16 %v1755
        %v1824 = vunpack.c.l.b16 %v1756
        %v1825 = vunpack.c.h.b16 %v1756
        %v1826 = vunpack.c.l.b16 %v1757
        %v1827 = vunpack.c.h.b16 %v1757
        %v1828 = vunpack.c.l.b16 %v1758
        %v1829 = vunpack.c.h.b16 %v1758
        %v1830 = vunpack.c.l.b16 %v1759
        %v1831 = vunpack.c.h.b16 %v1759
        %v1832 = vunpack.c.l.b16 %v1760
        %v1833 = vunpack.c.h.b16 %v1760
        %v1834 = vunpack.c.l.b16 %v1761
        %v1835 = vunpack.c.h.b16 %v1761
        %v1836 = vunpack.c.l.b16 %v1762
        %v1837 = vunpack.c.h.b16 %v1762
        %v1838 = vunpack.c.l.b16 %v1763
        %v1839 = vunpack.c.h.b16 %v1763
        %v1840 = vunpack.c.l.b16 %v1764
        %v1841 = vunpack.c.h.b16 %v1764
        %v1842 = vunpack.c.l.b16 %v1765
        %v1843 = vunpack.c.h.b16 %v1765
        %v1844 = vunpack.c.l.b16 %v1766
        %v1845 = vunpack.c.h.b16 %v1766
        %v1846 = vunpack.c.l.b16 %v1767
        %v1847 = vunpack.c.h.b16 %v1767
        %v1848 = vunpack.c.l.b16 %v1768
        %v1849 = vunpack.c.h.b16 %v1768
        %v1850 = vunpack.c.l.b16 %v1769
        %v1851 = vunpack.c.h.b16 %v1769
        %v1852 = vunpack.c.l.b16 %v1770
        %v1853 = vunpack.c.h.b16 %v1770
        %v1854 = vunpack.c.l.b16 %v1771
        %v1855 = vunpack.c.h.b16 %v1771
        %v1856 = vunpack.c.l.b16 %v1772
        %v1857 = vunpack.c.h.b16 %v1772
        %v1858 = vunpack.c.l.b16 %v1773
        %v1859 = vunpack.c.h.b16 %v1773
        %v1860 = vunpack.c.l.b16 %v1774
        %v1861 = vunpack.c.h.b16 %v1774
        %v1862 = vunpack.c.l.b16 %v1775
        %v1863 = vunpack.c.h.b16 %v1775
        %v1864 = vunpack.c.l.b16 %v1776
        %v1865 = vunpack.c.h.b16 %v1776
        %v1866 = vunpack.c.l.b16 %v1777
        %v1867 = vunpack.c.h.b16 %v1777
        %v1868 = vunpack.c.l.b16 %v1778
        %v1869 = vunpack.c.h.b16 %v1778
        %v1870 = vunpack.c.l.b16 %v1779
        %v1871 = vunpack.c.h.b16 %v1779
        %v1872 = vunpack.c.l.b16 %v1780
        %v1873 = vunpack.c.h.b16 %v1780
        %v1874 = vunpack.c.l.b16 %v1781
        %v1875 = vunpack.c.h.b16 %v1781
        %v1876 = vunpack.c.l.b16 %v1782
        %v1877 = vunpack.c.h.b16 %v1782
        %v1878 = vunpack.c.l.b16 %v1783
        %v1879 = vunpack.c.h.b16 %v1783
        %v1880 = vpack.c.b16 %v1820, %v1816
        %v1881 = vpack.c.b16 %v1821, %v1817
        %v1882 = vpack.c.b16 %v1822, %v1818
        %v1883 = vpack.c.b16 %v1823, %v1819
        %v1884 = vpack.c.b16 %v1828, %v1824
        %v1885 = vpack.c.b16 %v1829, %v1825
        %v1886 = vpack.c.b16 %v1830, %v1826
        %v1887 = vpack.c.b16 %v1831, %v1827
        %v1888 = vpack.c.b16 %v1836, %v1832
        %v1889 = vpack.c.b16 %v1837, %v1833
        %v1890 = vpack.c.b16 %v1838, %v1834
        %v1891 = vpack.c.b16 %v1839, %v1835
        %v1892 = vpack.c.b16 %v1844, %v1840
        %v1893 = vpack.c.b16 %v1845, %v1841
        %v1894 = vpack.c.b16 %v1846, %v1842
        %v1895 = vpack.c.b16 %v1847, %v1843
        %v1896 = vpack.c.b16 %v1852, %v1848
        %v1897 = vpack.c.b16 %v1853, %v1849
        %v1898 = vpack.c.b16 %v1854, %v1850
        %v1899 = vpack.c.b16 %v1855, %v1851
        %v1900 = vpack.c.b16 %v1860, %v1856
        %v1901 = vpack.c.b16 %v1861, %v1857
        %v1902 = vpack.c.b16 %v1862, %v1858
        %v1903 = vpack.c.b16 %v1863, %v1859
        %v1904 = vpack.c.b16 %v1868, %v1864
        %v1905 = vpack.c.b16 %v1869, %v1865
        %v1906 = vpack.c.b16 %v1870, %v1866
        %v1907 = vpack.c.b16 %v1871, %v1867
        %v1908 = vpack.c.b16 %v1876, %v1872
        %v1909 = vpack.c.b16 %v1877, %v1873
        %v1910 = vpack.c.b16 %v1878, %v1874
        %v1911 = vpack.c.b16 %v1879, %v1875
        %1944 = vmatpush.bf16.msra.mxu0 %v1908
        %1945 = vmatpush.bf16.msra.mxu0 %v1904
        %1946 = vmatpush.bf16.msra.mxu0 %v1900
        %1947 = vmatpush.bf16.msra.mxu0 %v1896
        %1948 = vmatpush.bf16.msra.mxu0 %v1892
        %1949 = vmatpush.bf16.msra.mxu0 %v1888
        %1950 = vmatpush.bf16.msra.mxu0 %v1884
        %1951 = vmatpush.bf16.msra.mxu0 %v1880
        %1952 = vmatmul.bf16.gmra.mxu0 %v1751
        %v1953 = vpop.f32.mrf.mxu0
        %v1954 = vadd.f32 0.0, %v1953
        %v1955 = vpop.f32.mrf.mxu0
        %1956 = vdwg.mxu0
        %1957 = vmatpush.bf16.msra.mxu0 %v1909
        %1958 = vmatpush.bf16.msra.mxu0 %v1905
        %1959 = vmatpush.bf16.msra.mxu0 %v1901
        %1960 = vmatpush.bf16.msra.mxu0 %v1897
        %1961 = vmatpush.bf16.msra.mxu0 %v1893
        %1962 = vmatpush.bf16.msra.mxu0 %v1889
        %1963 = vmatpush.bf16.msra.mxu0 %v1885
        %1964 = vmatpush.bf16.msra.mxu0 %v1881
        %1965 = vmatmul.bf16.gmra.mxu0 %v1751
        %v1966 = vpop.f32.mrf.mxu0
        %v1967 = vadd.f32 0.0, %v1966
        %v1968 = vpop.f32.mrf.mxu0
        %1969 = vdwg.mxu0
        %1970 = vmatpush.bf16.msra.mxu0 %v1910
        %1971 = vmatpush.bf16.msra.mxu0 %v1906
        %1972 = vmatpush.bf16.msra.mxu0 %v1902
        %1973 = vmatpush.bf16.msra.mxu0 %v1898
        %1974 = vmatpush.bf16.msra.mxu0 %v1894
        %1975 = vmatpush.bf16.msra.mxu0 %v1890
        %1976 = vmatpush.bf16.msra.mxu0 %v1886
        %1977 = vmatpush.bf16.msra.mxu0 %v1882
        %1978 = vmatmul.bf16.gmra.mxu0 %v1751
        %v1979 = vpop.f32.mrf.mxu0
        %v1980 = vadd.f32 0.0, %v1979
        %v1981 = vpop.f32.mrf.mxu0
        %1982 = vdwg.mxu0
        %1983 = vmatpush.bf16.msra.mxu0 %v1911
        %1984 = vmatpush.bf16.msra.mxu0 %v1907
        %1985 = vmatpush.bf16.msra.mxu0 %v1903
        %1986 = vmatpush.bf16.msra.mxu0 %v1899
        %1987 = vmatpush.bf16.msra.mxu0 %v1895
        %1988 = vmatpush.bf16.msra.mxu0 %v1891
        %1989 = vmatpush.bf16.msra.mxu0 %v1887
        %1990 = vmatpush.bf16.msra.mxu0 %v1883
        %1991 = vmatmul.bf16.gmra.mxu0 %v1751
        %v1992 = vpop.f32.mrf.mxu0
        %v1993 = vadd.f32 0.0, %v1992
        %v1994 = vpop.f32.mrf.mxu0
        %1995 = vdwg.mxu0
        %v1996 = vadd.f32 %v1747, %v1954
        %v1997 = vadd.f32 %v1748, %v1967
        %v1998 = vadd.f32 %v1749, %v1980
        %v1999 = vadd.f32 %v1750, %v1993
        %v2000 = vxor.u32 %v1996, 2147483648
        %v2001 = vmul.f32 %v2000, 1.442695
        %v2002 = vpow.pop %v2001
        %v2003 = vadd.f32 %v2002, 1.0
        %v2004 = vrcp.pop %v2003
        %v2005 = vmul.f32 %v2003, %v2004
        %v2006 = vsub.f32 1.0, %v2005
        %v2007 = vmul.f32 %v2004, %v2006
        %v2008 = vadd.f32 %v2004, %v2007
        %vm2009 = vweird.f32 %v2003
        %vm2010 = vweird.f32 %v2004
        %vm2011 = vmor %vm2009, %vm2010
        %v2012 = vsel %vm2011, %v2004, %v2008
        %v2013 = vand.u32 2147483647, %v2003
        %vm2014 = vcmp.eq.f32.partialorder %v2013, 8.507059e+37
        %v2015 = vand.u32 %v2003, 2147483648
        %v2016 = vor.u32 1.1754944e-38, %v2015
        %v2017 = vsel %vm2014, %v2016, %v2012
        %v2018 = vmul.f32 1.0, %v2017
        %v2019 = vxor.u32 %v1997, 2147483648
        %v2020 = vmul.f32 %v2019, 1.442695
        %v2021 = vpow.pop %v2020
        %v2022 = vadd.f32 %v2021, 1.0
        %v2023 = vrcp.pop %v2022
        %v2024 = vmul.f32 %v2022, %v2023
        %v2025 = vsub.f32 1.0, %v2024
        %v2026 = vmul.f32 %v2023, %v2025
        %v2027 = vadd.f32 %v2023, %v2026
        %vm2028 = vweird.f32 %v2022
        %vm2029 = vweird.f32 %v2023
        %vm2030 = vmor %vm2028, %vm2029
        %v2031 = vsel %vm2030, %v2023, %v2027
        %v2032 = vand.u32 2147483647, %v2022
        %vm2033 = vcmp.eq.f32.partialorder %v2032, 8.507059e+37
        %v2034 = vand.u32 %v2022, 2147483648
        %v2035 = vor.u32 1.1754944e-38, %v2034
        %v2036 = vsel %vm2033, %v2035, %v2031
        %v2037 = vmul.f32 1.0, %v2036
        %v2038 = vtanh.pop %v1998
        %v2039 = vxor.u32 %v1999, 2147483648
        %v2040 = vmul.f32 %v2039, 1.442695
        %v2041 = vpow.pop %v2040
        %v2042 = vadd.f32 %v2041, 1.0
        %v2043 = vrcp.pop %v2042
        %v2044 = vmul.f32 %v2042, %v2043
        %v2045 = vsub.f32 1.0, %v2044
        %v2046 = vmul.f32 %v2043, %v2045
        %v2047 = vadd.f32 %v2043, %v2046
        %vm2048 = vweird.f32 %v2042
        %vm2049 = vweird.f32 %v2043
        %vm2050 = vmor %vm2048, %vm2049
        %v2051 = vsel %vm2050, %v2043, %v2047
        %v2052 = vand.u32 2147483647, %v2042
        %vm2053 = vcmp.eq.f32.partialorder %v2052, 8.507059e+37
        %v2054 = vand.u32 %v2042, 2147483648
        %v2055 = vor.u32 1.1754944e-38, %v2054
        %v2056 = vsel %vm2053, %v2055, %v2051
        %v2057 = vmul.f32 1.0, %v2056
        %v2058 = vmul.f32 %v2037, %v1741
        %v2059 = vmul.f32 %v2018, %v2038
        %v2060 = vadd.f32 %v2058, %v2059
        %v2061 = vtanh.pop %v2060
        %v2062 = vmul.f32 %v2057, %v2061
        %s2063 = scalar_lea.vmem %s347, 32 [#allocation7]
        %2064 = vst [vmem:[%s2063] sm:$0xff] %v2062
        %s2065 = scalar_lea.vmem %s320, 160 [#allocation6]
        %v2066 = vld [vmem:[%s2065] sm:$0xff]
        %v2067 = vld [vmem:[%s2065 + $0x8] sm:$0xff]
        %v2068 = vld [vmem:[%s2065 + $0x10] sm:$0xff]
        %v2069 = vld [vmem:[%s2065 + $0x18] sm:$0xff]
        %v2070 = vpack.c.bf16 %v2062, %v2062
        %v2071 = vld [vmem:[#allocation4] sm:$0xff]
        %v2072 = vld [vmem:[#allocation4 + $0x8] sm:$0xff]
        %v2073 = vld [vmem:[#allocation4 + $0x10] sm:$0xff]
        %v2074 = vld [vmem:[#allocation4 + $0x18] sm:$0xff]
        %v2075 = vld [vmem:[#allocation4 + $0x20] sm:$0xff]
        %v2076 = vld [vmem:[#allocation4 + $0x28] sm:$0xff]
        %v2077 = vld [vmem:[#allocation4 + $0x30] sm:$0xff]
        %v2078 = vld [vmem:[#allocation4 + $0x38] sm:$0xff]
        %v2079 = vld [vmem:[#allocation4 + $0x40] sm:$0xff]
        %v2080 = vld [vmem:[#allocation4 + $0x48] sm:$0xff]
        %v2081 = vld [vmem:[#allocation4 + $0x50] sm:$0xff]
        %v2082 = vld [vmem:[#allocation4 + $0x58] sm:$0xff]
        %v2083 = vld [vmem:[#allocation4 + $0x60] sm:$0xff]
        %v2084 = vld [vmem:[#allocation4 + $0x68] sm:$0xff]
        %v2085 = vld [vmem:[#allocation4 + $0x70] sm:$0xff]
        %v2086 = vld [vmem:[#allocation4 + $0x78] sm:$0xff]
        %v2087 = vld [vmem:[#allocation4 + $0x80] sm:$0xff]
        %v2088 = vld [vmem:[#allocation4 + $0x88] sm:$0xff]
        %v2089 = vld [vmem:[#allocation4 + $0x90] sm:$0xff]
        %v2090 = vld [vmem:[#allocation4 + $0x98] sm:$0xff]
        %v2091 = vld [vmem:[#allocation4 + $0xa0] sm:$0xff]
        %v2092 = vld [vmem:[#allocation4 + $0xa8] sm:$0xff]
        %v2093 = vld [vmem:[#allocation4 + $0xb0] sm:$0xff]
        %v2094 = vld [vmem:[#allocation4 + $0xb8] sm:$0xff]
        %v2095 = vld [vmem:[#allocation4 + $0xc0] sm:$0xff]
        %v2096 = vld [vmem:[#allocation4 + $0xc8] sm:$0xff]
        %v2097 = vld [vmem:[#allocation4 + $0xd0] sm:$0xff]
        %v2098 = vld [vmem:[#allocation4 + $0xd8] sm:$0xff]
        %v2099 = vld [vmem:[#allocation4 + $0xe0] sm:$0xff]
        %v2100 = vld [vmem:[#allocation4 + $0xe8] sm:$0xff]
        %v2101 = vld [vmem:[#allocation4 + $0xf0] sm:$0xff]
        %v2102 = vld [vmem:[#allocation4 + $0xf8] sm:$0xff]
        %v2135 = vunpack.c.l.b16 %v2071
        %v2136 = vunpack.c.h.b16 %v2071
        %v2137 = vunpack.c.l.b16 %v2072
        %v2138 = vunpack.c.h.b16 %v2072
        %v2139 = vunpack.c.l.b16 %v2073
        %v2140 = vunpack.c.h.b16 %v2073
        %v2141 = vunpack.c.l.b16 %v2074
        %v2142 = vunpack.c.h.b16 %v2074
        %v2143 = vunpack.c.l.b16 %v2075
        %v2144 = vunpack.c.h.b16 %v2075
        %v2145 = vunpack.c.l.b16 %v2076
        %v2146 = vunpack.c.h.b16 %v2076
        %v2147 = vunpack.c.l.b16 %v2077
        %v2148 = vunpack.c.h.b16 %v2077
        %v2149 = vunpack.c.l.b16 %v2078
        %v2150 = vunpack.c.h.b16 %v2078
        %v2151 = vunpack.c.l.b16 %v2079
        %v2152 = vunpack.c.h.b16 %v2079
        %v2153 = vunpack.c.l.b16 %v2080
        %v2154 = vunpack.c.h.b16 %v2080
        %v2155 = vunpack.c.l.b16 %v2081
        %v2156 = vunpack.c.h.b16 %v2081
        %v2157 = vunpack.c.l.b16 %v2082
        %v2158 = vunpack.c.h.b16 %v2082
        %v2159 = vunpack.c.l.b16 %v2083
        %v2160 = vunpack.c.h.b16 %v2083
        %v2161 = vunpack.c.l.b16 %v2084
        %v2162 = vunpack.c.h.b16 %v2084
        %v2163 = vunpack.c.l.b16 %v2085
        %v2164 = vunpack.c.h.b16 %v2085
        %v2165 = vunpack.c.l.b16 %v2086
        %v2166 = vunpack.c.h.b16 %v2086
        %v2167 = vunpack.c.l.b16 %v2087
        %v2168 = vunpack.c.h.b16 %v2087
        %v2169 = vunpack.c.l.b16 %v2088
        %v2170 = vunpack.c.h.b16 %v2088
        %v2171 = vunpack.c.l.b16 %v2089
        %v2172 = vunpack.c.h.b16 %v2089
        %v2173 = vunpack.c.l.b16 %v2090
        %v2174 = vunpack.c.h.b16 %v2090
        %v2175 = vunpack.c.l.b16 %v2091
        %v2176 = vunpack.c.h.b16 %v2091
        %v2177 = vunpack.c.l.b16 %v2092
        %v2178 = vunpack.c.h.b16 %v2092
        %v2179 = vunpack.c.l.b16 %v2093
        %v2180 = vunpack.c.h.b16 %v2093
        %v2181 = vunpack.c.l.b16 %v2094
        %v2182 = vunpack.c.h.b16 %v2094
        %v2183 = vunpack.c.l.b16 %v2095
        %v2184 = vunpack.c.h.b16 %v2095
        %v2185 = vunpack.c.l.b16 %v2096
        %v2186 = vunpack.c.h.b16 %v2096
        %v2187 = vunpack.c.l.b16 %v2097
        %v2188 = vunpack.c.h.b16 %v2097
        %v2189 = vunpack.c.l.b16 %v2098
        %v2190 = vunpack.c.h.b16 %v2098
        %v2191 = vunpack.c.l.b16 %v2099
        %v2192 = vunpack.c.h.b16 %v2099
        %v2193 = vunpack.c.l.b16 %v2100
        %v2194 = vunpack.c.h.b16 %v2100
        %v2195 = vunpack.c.l.b16 %v2101
        %v2196 = vunpack.c.h.b16 %v2101
        %v2197 = vunpack.c.l.b16 %v2102
        %v2198 = vunpack.c.h.b16 %v2102
        %v2199 = vpack.c.b16 %v2139, %v2135
        %v2200 = vpack.c.b16 %v2140, %v2136
        %v2201 = vpack.c.b16 %v2141, %v2137
        %v2202 = vpack.c.b16 %v2142, %v2138
        %v2203 = vpack.c.b16 %v2147, %v2143
        %v2204 = vpack.c.b16 %v2148, %v2144
        %v2205 = vpack.c.b16 %v2149, %v2145
        %v2206 = vpack.c.b16 %v2150, %v2146
        %v2207 = vpack.c.b16 %v2155, %v2151
        %v2208 = vpack.c.b16 %v2156, %v2152
        %v2209 = vpack.c.b16 %v2157, %v2153
        %v2210 = vpack.c.b16 %v2158, %v2154
        %v2211 = vpack.c.b16 %v2163, %v2159
        %v2212 = vpack.c.b16 %v2164, %v2160
        %v2213 = vpack.c.b16 %v2165, %v2161
        %v2214 = vpack.c.b16 %v2166, %v2162
        %v2215 = vpack.c.b16 %v2171, %v2167
        %v2216 = vpack.c.b16 %v2172, %v2168
        %v2217 = vpack.c.b16 %v2173, %v2169
        %v2218 = vpack.c.b16 %v2174, %v2170
        %v2219 = vpack.c.b16 %v2179, %v2175
        %v2220 = vpack.c.b16 %v2180, %v2176
        %v2221 = vpack.c.b16 %v2181, %v2177
        %v2222 = vpack.c.b16 %v2182, %v2178
        %v2223 = vpack.c.b16 %v2187, %v2183
        %v2224 = vpack.c.b16 %v2188, %v2184
        %v2225 = vpack.c.b16 %v2189, %v2185
        %v2226 = vpack.c.b16 %v2190, %v2186
        %v2227 = vpack.c.b16 %v2195, %v2191
        %v2228 = vpack.c.b16 %v2196, %v2192
        %v2229 = vpack.c.b16 %v2197, %v2193
        %v2230 = vpack.c.b16 %v2198, %v2194
        %2263 = vmatpush.bf16.msra.mxu0 %v2227
        %2264 = vmatpush.bf16.msra.mxu0 %v2223
        %2265 = vmatpush.bf16.msra.mxu0 %v2219
        %2266 = vmatpush.bf16.msra.mxu0 %v2215
        %2267 = vmatpush.bf16.msra.mxu0 %v2211
        %2268 = vmatpush.bf16.msra.mxu0 %v2207
        %2269 = vmatpush.bf16.msra.mxu0 %v2203
        %2270 = vmatpush.bf16.msra.mxu0 %v2199
        %2271 = vmatmul.bf16.gmra.mxu0 %v2070
        %v2272 = vpop.f32.mrf.mxu0
        %v2273 = vadd.f32 0.0, %v2272
        %v2274 = vpop.f32.mrf.mxu0
        %2275 = vdwg.mxu0
        %2276 = vmatpush.bf16.msra.mxu0 %v2228
        %2277 = vmatpush.bf16.msra.mxu0 %v2224
        %2278 = vmatpush.bf16.msra.mxu0 %v2220
        %2279 = vmatpush.bf16.msra.mxu0 %v2216
        %2280 = vmatpush.bf16.msra.mxu0 %v2212
        %2281 = vmatpush.bf16.msra.mxu0 %v2208
        %2282 = vmatpush.bf16.msra.mxu0 %v2204
        %2283 = vmatpush.bf16.msra.mxu0 %v2200
        %2284 = vmatmul.bf16.gmra.mxu0 %v2070
        %v2285 = vpop.f32.mrf.mxu0
        %v2286 = vadd.f32 0.0, %v2285
        %v2287 = vpop.f32.mrf.mxu0
        %2288 = vdwg.mxu0
        %2289 = vmatpush.bf16.msra.mxu0 %v2229
        %2290 = vmatpush.bf16.msra.mxu0 %v2225
        %2291 = vmatpush.bf16.msra.mxu0 %v2221
        %2292 = vmatpush.bf16.msra.mxu0 %v2217
        %2293 = vmatpush.bf16.msra.mxu0 %v2213
        %2294 = vmatpush.bf16.msra.mxu0 %v2209
        %2295 = vmatpush.bf16.msra.mxu0 %v2205
        %2296 = vmatpush.bf16.msra.mxu0 %v2201
        %2297 = vmatmul.bf16.gmra.mxu0 %v2070
        %v2298 = vpop.f32.mrf.mxu0
        %v2299 = vadd.f32 0.0, %v2298
        %v2300 = vpop.f32.mrf.mxu0
        %2301 = vdwg.mxu0
        %2302 = vmatpush.bf16.msra.mxu0 %v2230
        %2303 = vmatpush.bf16.msra.mxu0 %v2226
        %2304 = vmatpush.bf16.msra.mxu0 %v2222
        %2305 = vmatpush.bf16.msra.mxu0 %v2218
        %2306 = vmatpush.bf16.msra.mxu0 %v2214
        %2307 = vmatpush.bf16.msra.mxu0 %v2210
        %2308 = vmatpush.bf16.msra.mxu0 %v2206
        %2309 = vmatpush.bf16.msra.mxu0 %v2202
        %2310 = vmatmul.bf16.gmra.mxu0 %v2070
        %v2311 = vpop.f32.mrf.mxu0
        %v2312 = vadd.f32 0.0, %v2311
        %v2313 = vpop.f32.mrf.mxu0
        %2314 = vdwg.mxu0
        %v2315 = vadd.f32 %v2066, %v2273
        %v2316 = vadd.f32 %v2067, %v2286
        %v2317 = vadd.f32 %v2068, %v2299
        %v2318 = vadd.f32 %v2069, %v2312
        %v2319 = vxor.u32 %v2315, 2147483648
        %v2320 = vmul.f32 %v2319, 1.442695
        %v2321 = vpow.pop %v2320
        %v2322 = vadd.f32 %v2321, 1.0
        %v2323 = vrcp.pop %v2322
        %v2324 = vmul.f32 %v2322, %v2323
        %v2325 = vsub.f32 1.0, %v2324
        %v2326 = vmul.f32 %v2323, %v2325
        %v2327 = vadd.f32 %v2323, %v2326
        %vm2328 = vweird.f32 %v2322
        %vm2329 = vweird.f32 %v2323
        %vm2330 = vmor %vm2328, %vm2329
        %v2331 = vsel %vm2330, %v2323, %v2327
        %v2332 = vand.u32 2147483647, %v2322
        %vm2333 = vcmp.eq.f32.partialorder %v2332, 8.507059e+37
        %v2334 = vand.u32 %v2322, 2147483648
        %v2335 = vor.u32 1.1754944e-38, %v2334
        %v2336 = vsel %vm2333, %v2335, %v2331
        %v2337 = vmul.f32 1.0, %v2336
        %v2338 = vxor.u32 %v2316, 2147483648
        %v2339 = vmul.f32 %v2338, 1.442695
        %v2340 = vpow.pop %v2339
        %v2341 = vadd.f32 %v2340, 1.0
        %v2342 = vrcp.pop %v2341
        %v2343 = vmul.f32 %v2341, %v2342
        %v2344 = vsub.f32 1.0, %v2343
        %v2345 = vmul.f32 %v2342, %v2344
        %v2346 = vadd.f32 %v2342, %v2345
        %vm2347 = vweird.f32 %v2341
        %vm2348 = vweird.f32 %v2342
        %vm2349 = vmor %vm2347, %vm2348
        %v2350 = vsel %vm2349, %v2342, %v2346
        %v2351 = vand.u32 2147483647, %v2341
        %vm2352 = vcmp.eq.f32.partialorder %v2351, 8.507059e+37
        %v2353 = vand.u32 %v2341, 2147483648
        %v2354 = vor.u32 1.1754944e-38, %v2353
        %v2355 = vsel %vm2352, %v2354, %v2350
        %v2356 = vmul.f32 1.0, %v2355
        %v2357 = vtanh.pop %v2317
        %v2358 = vxor.u32 %v2318, 2147483648
        %v2359 = vmul.f32 %v2358, 1.442695
        %v2360 = vpow.pop %v2359
        %v2361 = vadd.f32 %v2360, 1.0
        %v2362 = vrcp.pop %v2361
        %v2363 = vmul.f32 %v2361, %v2362
        %v2364 = vsub.f32 1.0, %v2363
        %v2365 = vmul.f32 %v2362, %v2364
        %v2366 = vadd.f32 %v2362, %v2365
        %vm2367 = vweird.f32 %v2361
        %vm2368 = vweird.f32 %v2362
        %vm2369 = vmor %vm2367, %vm2368
        %v2370 = vsel %vm2369, %v2362, %v2366
        %v2371 = vand.u32 2147483647, %v2361
        %vm2372 = vcmp.eq.f32.partialorder %v2371, 8.507059e+37
        %v2373 = vand.u32 %v2361, 2147483648
        %v2374 = vor.u32 1.1754944e-38, %v2373
        %v2375 = vsel %vm2372, %v2374, %v2370
        %v2376 = vmul.f32 1.0, %v2375
        %v2377 = vmul.f32 %v2356, %v2060
        %v2378 = vmul.f32 %v2337, %v2357
        %v2379 = vadd.f32 %v2377, %v2378
        %v2380 = vtanh.pop %v2379
        %v2381 = vmul.f32 %v2376, %v2380
        %s2382 = scalar_lea.vmem %s347, 40 [#allocation7]
        %2383 = vst [vmem:[%s2382] sm:$0xff] %v2381
        %s2384 = scalar_lea.vmem %s320, 192 [#allocation6]
        %v2385 = vld [vmem:[%s2384] sm:$0xff]
        %v2386 = vld [vmem:[%s2384 + $0x8] sm:$0xff]
        %v2387 = vld [vmem:[%s2384 + $0x10] sm:$0xff]
        %v2388 = vld [vmem:[%s2384 + $0x18] sm:$0xff]
        %v2389 = vpack.c.bf16 %v2381, %v2381
        %v2390 = vld [vmem:[#allocation4] sm:$0xff]
        %v2391 = vld [vmem:[#allocation4 + $0x8] sm:$0xff]
        %v2392 = vld [vmem:[#allocation4 + $0x10] sm:$0xff]
        %v2393 = vld [vmem:[#allocation4 + $0x18] sm:$0xff]
        %v2394 = vld [vmem:[#allocation4 + $0x20] sm:$0xff]
        %v2395 = vld [vmem:[#allocation4 + $0x28] sm:$0xff]
        %v2396 = vld [vmem:[#allocation4 + $0x30] sm:$0xff]
        %v2397 = vld [vmem:[#allocation4 + $0x38] sm:$0xff]
        %v2398 = vld [vmem:[#allocation4 + $0x40] sm:$0xff]
        %v2399 = vld [vmem:[#allocation4 + $0x48] sm:$0xff]
        %v2400 = vld [vmem:[#allocation4 + $0x50] sm:$0xff]
        %v2401 = vld [vmem:[#allocation4 + $0x58] sm:$0xff]
        %v2402 = vld [vmem:[#allocation4 + $0x60] sm:$0xff]
        %v2403 = vld [vmem:[#allocation4 + $0x68] sm:$0xff]
        %v2404 = vld [vmem:[#allocation4 + $0x70] sm:$0xff]
        %v2405 = vld [vmem:[#allocation4 + $0x78] sm:$0xff]
        %v2406 = vld [vmem:[#allocation4 + $0x80] sm:$0xff]
        %v2407 = vld [vmem:[#allocation4 + $0x88] sm:$0xff]
        %v2408 = vld [vmem:[#allocation4 + $0x90] sm:$0xff]
        %v2409 = vld [vmem:[#allocation4 + $0x98] sm:$0xff]
        %v2410 = vld [vmem:[#allocation4 + $0xa0] sm:$0xff]
        %v2411 = vld [vmem:[#allocation4 + $0xa8] sm:$0xff]
        %v2412 = vld [vmem:[#allocation4 + $0xb0] sm:$0xff]
        %v2413 = vld [vmem:[#allocation4 + $0xb8] sm:$0xff]
        %v2414 = vld [vmem:[#allocation4 + $0xc0] sm:$0xff]
        %v2415 = vld [vmem:[#allocation4 + $0xc8] sm:$0xff]
        %v2416 = vld [vmem:[#allocation4 + $0xd0] sm:$0xff]
        %v2417 = vld [vmem:[#allocation4 + $0xd8] sm:$0xff]
        %v2418 = vld [vmem:[#allocation4 + $0xe0] sm:$0xff]
        %v2419 = vld [vmem:[#allocation4 + $0xe8] sm:$0xff]
        %v2420 = vld [vmem:[#allocation4 + $0xf0] sm:$0xff]
        %v2421 = vld [vmem:[#allocation4 + $0xf8] sm:$0xff]
        %v2454 = vunpack.c.l.b16 %v2390
        %v2455 = vunpack.c.h.b16 %v2390
        %v2456 = vunpack.c.l.b16 %v2391
        %v2457 = vunpack.c.h.b16 %v2391
        %v2458 = vunpack.c.l.b16 %v2392
        %v2459 = vunpack.c.h.b16 %v2392
        %v2460 = vunpack.c.l.b16 %v2393
        %v2461 = vunpack.c.h.b16 %v2393
        %v2462 = vunpack.c.l.b16 %v2394
        %v2463 = vunpack.c.h.b16 %v2394
        %v2464 = vunpack.c.l.b16 %v2395
        %v2465 = vunpack.c.h.b16 %v2395
        %v2466 = vunpack.c.l.b16 %v2396
        %v2467 = vunpack.c.h.b16 %v2396
        %v2468 = vunpack.c.l.b16 %v2397
        %v2469 = vunpack.c.h.b16 %v2397
        %v2470 = vunpack.c.l.b16 %v2398
        %v2471 = vunpack.c.h.b16 %v2398
        %v2472 = vunpack.c.l.b16 %v2399
        %v2473 = vunpack.c.h.b16 %v2399
        %v2474 = vunpack.c.l.b16 %v2400
        %v2475 = vunpack.c.h.b16 %v2400
        %v2476 = vunpack.c.l.b16 %v2401
        %v2477 = vunpack.c.h.b16 %v2401
        %v2478 = vunpack.c.l.b16 %v2402
        %v2479 = vunpack.c.h.b16 %v2402
        %v2480 = vunpack.c.l.b16 %v2403
        %v2481 = vunpack.c.h.b16 %v2403
        %v2482 = vunpack.c.l.b16 %v2404
        %v2483 = vunpack.c.h.b16 %v2404
        %v2484 = vunpack.c.l.b16 %v2405
        %v2485 = vunpack.c.h.b16 %v2405
        %v2486 = vunpack.c.l.b16 %v2406
        %v2487 = vunpack.c.h.b16 %v2406
        %v2488 = vunpack.c.l.b16 %v2407
        %v2489 = vunpack.c.h.b16 %v2407
        %v2490 = vunpack.c.l.b16 %v2408
        %v2491 = vunpack.c.h.b16 %v2408
        %v2492 = vunpack.c.l.b16 %v2409
        %v2493 = vunpack.c.h.b16 %v2409
        %v2494 = vunpack.c.l.b16 %v2410
        %v2495 = vunpack.c.h.b16 %v2410
        %v2496 = vunpack.c.l.b16 %v2411
        %v2497 = vunpack.c.h.b16 %v2411
        %v2498 = vunpack.c.l.b16 %v2412
        %v2499 = vunpack.c.h.b16 %v2412
        %v2500 = vunpack.c.l.b16 %v2413
        %v2501 = vunpack.c.h.b16 %v2413
        %v2502 = vunpack.c.l.b16 %v2414
        %v2503 = vunpack.c.h.b16 %v2414
        %v2504 = vunpack.c.l.b16 %v2415
        %v2505 = vunpack.c.h.b16 %v2415
        %v2506 = vunpack.c.l.b16 %v2416
        %v2507 = vunpack.c.h.b16 %v2416
        %v2508 = vunpack.c.l.b16 %v2417
        %v2509 = vunpack.c.h.b16 %v2417
        %v2510 = vunpack.c.l.b16 %v2418
        %v2511 = vunpack.c.h.b16 %v2418
        %v2512 = vunpack.c.l.b16 %v2419
        %v2513 = vunpack.c.h.b16 %v2419
        %v2514 = vunpack.c.l.b16 %v2420
        %v2515 = vunpack.c.h.b16 %v2420
        %v2516 = vunpack.c.l.b16 %v2421
        %v2517 = vunpack.c.h.b16 %v2421
        %v2518 = vpack.c.b16 %v2458, %v2454
        %v2519 = vpack.c.b16 %v2459, %v2455
        %v2520 = vpack.c.b16 %v2460, %v2456
        %v2521 = vpack.c.b16 %v2461, %v2457
        %v2522 = vpack.c.b16 %v2466, %v2462
        %v2523 = vpack.c.b16 %v2467, %v2463
        %v2524 = vpack.c.b16 %v2468, %v2464
        %v2525 = vpack.c.b16 %v2469, %v2465
        %v2526 = vpack.c.b16 %v2474, %v2470
        %v2527 = vpack.c.b16 %v2475, %v2471
        %v2528 = vpack.c.b16 %v2476, %v2472
        %v2529 = vpack.c.b16 %v2477, %v2473
        %v2530 = vpack.c.b16 %v2482, %v2478
        %v2531 = vpack.c.b16 %v2483, %v2479
        %v2532 = vpack.c.b16 %v2484, %v2480
        %v2533 = vpack.c.b16 %v2485, %v2481
        %v2534 = vpack.c.b16 %v2490, %v2486
        %v2535 = vpack.c.b16 %v2491, %v2487
        %v2536 = vpack.c.b16 %v2492, %v2488
        %v2537 = vpack.c.b16 %v2493, %v2489
        %v2538 = vpack.c.b16 %v2498, %v2494
        %v2539 = vpack.c.b16 %v2499, %v2495
        %v2540 = vpack.c.b16 %v2500, %v2496
        %v2541 = vpack.c.b16 %v2501, %v2497
        %v2542 = vpack.c.b16 %v2506, %v2502
        %v2543 = vpack.c.b16 %v2507, %v2503
        %v2544 = vpack.c.b16 %v2508, %v2504
        %v2545 = vpack.c.b16 %v2509, %v2505
        %v2546 = vpack.c.b16 %v2514, %v2510
        %v2547 = vpack.c.b16 %v2515, %v2511
        %v2548 = vpack.c.b16 %v2516, %v2512
        %v2549 = vpack.c.b16 %v2517, %v2513
        %2582 = vmatpush.bf16.msra.mxu0 %v2546
        %2583 = vmatpush.bf16.msra.mxu0 %v2542
        %2584 = vmatpush.bf16.msra.mxu0 %v2538
        %2585 = vmatpush.bf16.msra.mxu0 %v2534
        %2586 = vmatpush.bf16.msra.mxu0 %v2530
        %2587 = vmatpush.bf16.msra.mxu0 %v2526
        %2588 = vmatpush.bf16.msra.mxu0 %v2522
        %2589 = vmatpush.bf16.msra.mxu0 %v2518
        %2590 = vmatmul.bf16.gmra.mxu0 %v2389
        %v2591 = vpop.f32.mrf.mxu0
        %v2592 = vadd.f32 0.0, %v2591
        %v2593 = vpop.f32.mrf.mxu0
        %2594 = vdwg.mxu0
        %2595 = vmatpush.bf16.msra.mxu0 %v2547
        %2596 = vmatpush.bf16.msra.mxu0 %v2543
        %2597 = vmatpush.bf16.msra.mxu0 %v2539
        %2598 = vmatpush.bf16.msra.mxu0 %v2535
        %2599 = vmatpush.bf16.msra.mxu0 %v2531
        %2600 = vmatpush.bf16.msra.mxu0 %v2527
        %2601 = vmatpush.bf16.msra.mxu0 %v2523
        %2602 = vmatpush.bf16.msra.mxu0 %v2519
        %2603 = vmatmul.bf16.gmra.mxu0 %v2389
        %v2604 = vpop.f32.mrf.mxu0
        %v2605 = vadd.f32 0.0, %v2604
        %v2606 = vpop.f32.mrf.mxu0
        %2607 = vdwg.mxu0
        %2608 = vmatpush.bf16.msra.mxu0 %v2548
        %2609 = vmatpush.bf16.msra.mxu0 %v2544
        %2610 = vmatpush.bf16.msra.mxu0 %v2540
        %2611 = vmatpush.bf16.msra.mxu0 %v2536
        %2612 = vmatpush.bf16.msra.mxu0 %v2532
        %2613 = vmatpush.bf16.msra.mxu0 %v2528
        %2614 = vmatpush.bf16.msra.mxu0 %v2524
        %2615 = vmatpush.bf16.msra.mxu0 %v2520
        %2616 = vmatmul.bf16.gmra.mxu0 %v2389
        %v2617 = vpop.f32.mrf.mxu0
        %v2618 = vadd.f32 0.0, %v2617
        %v2619 = vpop.f32.mrf.mxu0
        %2620 = vdwg.mxu0
        %2621 = vmatpush.bf16.msra.mxu0 %v2549
        %2622 = vmatpush.bf16.msra.mxu0 %v2545
        %2623 = vmatpush.bf16.msra.mxu0 %v2541
        %2624 = vmatpush.bf16.msra.mxu0 %v2537
        %2625 = vmatpush.bf16.msra.mxu0 %v2533
        %2626 = vmatpush.bf16.msra.mxu0 %v2529
        %2627 = vmatpush.bf16.msra.mxu0 %v2525
        %2628 = vmatpush.bf16.msra.mxu0 %v2521
        %2629 = vmatmul.bf16.gmra.mxu0 %v2389
        %v2630 = vpop.f32.mrf.mxu0
        %v2631 = vadd.f32 0.0, %v2630
        %v2632 = vpop.f32.mrf.mxu0
        %2633 = vdwg.mxu0
        %v2634 = vadd.f32 %v2385, %v2592
        %v2635 = vadd.f32 %v2386, %v2605
        %v2636 = vadd.f32 %v2387, %v2618
        %v2637 = vadd.f32 %v2388, %v2631
        %v2638 = vxor.u32 %v2634, 2147483648
        %v2639 = vmul.f32 %v2638, 1.442695
        %v2640 = vpow.pop %v2639
        %v2641 = vadd.f32 %v2640, 1.0
        %v2642 = vrcp.pop %v2641
        %v2643 = vmul.f32 %v2641, %v2642
        %v2644 = vsub.f32 1.0, %v2643
        %v2645 = vmul.f32 %v2642, %v2644
        %v2646 = vadd.f32 %v2642, %v2645
        %vm2647 = vweird.f32 %v2641
        %vm2648 = vweird.f32 %v2642
        %vm2649 = vmor %vm2647, %vm2648
        %v2650 = vsel %vm2649, %v2642, %v2646
        %v2651 = vand.u32 2147483647, %v2641
        %vm2652 = vcmp.eq.f32.partialorder %v2651, 8.507059e+37
        %v2653 = vand.u32 %v2641, 2147483648
        %v2654 = vor.u32 1.1754944e-38, %v2653
        %v2655 = vsel %vm2652, %v2654, %v2650
        %v2656 = vmul.f32 1.0, %v2655
        %v2657 = vxor.u32 %v2635, 2147483648
        %v2658 = vmul.f32 %v2657, 1.442695
        %v2659 = vpow.pop %v2658
        %v2660 = vadd.f32 %v2659, 1.0
        %v2661 = vrcp.pop %v2660
        %v2662 = vmul.f32 %v2660, %v2661
        %v2663 = vsub.f32 1.0, %v2662
        %v2664 = vmul.f32 %v2661, %v2663
        %v2665 = vadd.f32 %v2661, %v2664
        %vm2666 = vweird.f32 %v2660
        %vm2667 = vweird.f32 %v2661
        %vm2668 = vmor %vm2666, %vm2667
        %v2669 = vsel %vm2668, %v2661, %v2665
        %v2670 = vand.u32 2147483647, %v2660
        %vm2671 = vcmp.eq.f32.partialorder %v2670, 8.507059e+37
        %v2672 = vand.u32 %v2660, 2147483648
        %v2673 = vor.u32 1.1754944e-38, %v2672
        %v2674 = vsel %vm2671, %v2673, %v2669
        %v2675 = vmul.f32 1.0, %v2674
        %v2676 = vtanh.pop %v2636
        %v2677 = vxor.u32 %v2637, 2147483648
        %v2678 = vmul.f32 %v2677, 1.442695
        %v2679 = vpow.pop %v2678
        %v2680 = vadd.f32 %v2679, 1.0
        %v2681 = vrcp.pop %v2680
        %v2682 = vmul.f32 %v2680, %v2681
        %v2683 = vsub.f32 1.0, %v2682
        %v2684 = vmul.f32 %v2681, %v2683
        %v2685 = vadd.f32 %v2681, %v2684
        %vm2686 = vweird.f32 %v2680
        %vm2687 = vweird.f32 %v2681
        %vm2688 = vmor %vm2686, %vm2687
        %v2689 = vsel %vm2688, %v2681, %v2685
        %v2690 = vand.u32 2147483647, %v2680
        %vm2691 = vcmp.eq.f32.partialorder %v2690, 8.507059e+37
        %v2692 = vand.u32 %v2680, 2147483648
        %v2693 = vor.u32 1.1754944e-38, %v2692
        %v2694 = vsel %vm2691, %v2693, %v2689
        %v2695 = vmul.f32 1.0, %v2694
        %v2696 = vmul.f32 %v2675, %v2379
        %v2697 = vmul.f32 %v2656, %v2676
        %v2698 = vadd.f32 %v2696, %v2697
        %v2699 = vtanh.pop %v2698
        %v2700 = vmul.f32 %v2695, %v2699
        %s2701 = scalar_lea.vmem %s347, 48 [#allocation7]
        %2702 = vst [vmem:[%s2701] sm:$0xff] %v2700
        %s2703 = scalar_lea.vmem %s320, 224 [#allocation6]
        %v2704 = vld [vmem:[%s2703] sm:$0xff]
        %v2705 = vld [vmem:[%s2703 + $0x8] sm:$0xff]
        %v2706 = vld [vmem:[%s2703 + $0x10] sm:$0xff]
        %v2707 = vld [vmem:[%s2703 + $0x18] sm:$0xff]
        %v2708 = vpack.c.bf16 %v2700, %v2700
        %v2709 = vld [vmem:[#allocation4] sm:$0xff]
        %v2710 = vld [vmem:[#allocation4 + $0x8] sm:$0xff]
        %v2711 = vld [vmem:[#allocation4 + $0x10] sm:$0xff]
        %v2712 = vld [vmem:[#allocation4 + $0x18] sm:$0xff]
        %v2713 = vld [vmem:[#allocation4 + $0x20] sm:$0xff]
        %v2714 = vld [vmem:[#allocation4 + $0x28] sm:$0xff]
        %v2715 = vld [vmem:[#allocation4 + $0x30] sm:$0xff]
        %v2716 = vld [vmem:[#allocation4 + $0x38] sm:$0xff]
        %v2717 = vld [vmem:[#allocation4 + $0x40] sm:$0xff]
        %v2718 = vld [vmem:[#allocation4 + $0x48] sm:$0xff]
        %v2719 = vld [vmem:[#allocation4 + $0x50] sm:$0xff]
        %v2720 = vld [vmem:[#allocation4 + $0x58] sm:$0xff]
        %v2721 = vld [vmem:[#allocation4 + $0x60] sm:$0xff]
        %v2722 = vld [vmem:[#allocation4 + $0x68] sm:$0xff]
        %v2723 = vld [vmem:[#allocation4 + $0x70] sm:$0xff]
        %v2724 = vld [vmem:[#allocation4 + $0x78] sm:$0xff]
        %v2725 = vld [vmem:[#allocation4 + $0x80] sm:$0xff]
        %v2726 = vld [vmem:[#allocation4 + $0x88] sm:$0xff]
        %v2727 = vld [vmem:[#allocation4 + $0x90] sm:$0xff]
        %v2728 = vld [vmem:[#allocation4 + $0x98] sm:$0xff]
        %v2729 = vld [vmem:[#allocation4 + $0xa0] sm:$0xff]
        %v2730 = vld [vmem:[#allocation4 + $0xa8] sm:$0xff]
        %v2731 = vld [vmem:[#allocation4 + $0xb0] sm:$0xff]
        %v2732 = vld [vmem:[#allocation4 + $0xb8] sm:$0xff]
        %v2733 = vld [vmem:[#allocation4 + $0xc0] sm:$0xff]
        %v2734 = vld [vmem:[#allocation4 + $0xc8] sm:$0xff]
        %v2735 = vld [vmem:[#allocation4 + $0xd0] sm:$0xff]
        %v2736 = vld [vmem:[#allocation4 + $0xd8] sm:$0xff]
        %v2737 = vld [vmem:[#allocation4 + $0xe0] sm:$0xff]
        %v2738 = vld [vmem:[#allocation4 + $0xe8] sm:$0xff]
        %v2739 = vld [vmem:[#allocation4 + $0xf0] sm:$0xff]
        %v2740 = vld [vmem:[#allocation4 + $0xf8] sm:$0xff]
        %v2773 = vunpack.c.l.b16 %v2709
        %v2774 = vunpack.c.h.b16 %v2709
        %v2775 = vunpack.c.l.b16 %v2710
        %v2776 = vunpack.c.h.b16 %v2710
        %v2777 = vunpack.c.l.b16 %v2711
        %v2778 = vunpack.c.h.b16 %v2711
        %v2779 = vunpack.c.l.b16 %v2712
        %v2780 = vunpack.c.h.b16 %v2712
        %v2781 = vunpack.c.l.b16 %v2713
        %v2782 = vunpack.c.h.b16 %v2713
        %v2783 = vunpack.c.l.b16 %v2714
        %v2784 = vunpack.c.h.b16 %v2714
        %v2785 = vunpack.c.l.b16 %v2715
        %v2786 = vunpack.c.h.b16 %v2715
        %v2787 = vunpack.c.l.b16 %v2716
        %v2788 = vunpack.c.h.b16 %v2716
        %v2789 = vunpack.c.l.b16 %v2717
        %v2790 = vunpack.c.h.b16 %v2717
        %v2791 = vunpack.c.l.b16 %v2718
        %v2792 = vunpack.c.h.b16 %v2718
        %v2793 = vunpack.c.l.b16 %v2719
        %v2794 = vunpack.c.h.b16 %v2719
        %v2795 = vunpack.c.l.b16 %v2720
        %v2796 = vunpack.c.h.b16 %v2720
        %v2797 = vunpack.c.l.b16 %v2721
        %v2798 = vunpack.c.h.b16 %v2721
        %v2799 = vunpack.c.l.b16 %v2722
        %v2800 = vunpack.c.h.b16 %v2722
        %v2801 = vunpack.c.l.b16 %v2723
        %v2802 = vunpack.c.h.b16 %v2723
        %v2803 = vunpack.c.l.b16 %v2724
        %v2804 = vunpack.c.h.b16 %v2724
        %v2805 = vunpack.c.l.b16 %v2725
        %v2806 = vunpack.c.h.b16 %v2725
        %v2807 = vunpack.c.l.b16 %v2726
        %v2808 = vunpack.c.h.b16 %v2726
        %v2809 = vunpack.c.l.b16 %v2727
        %v2810 = vunpack.c.h.b16 %v2727
        %v2811 = vunpack.c.l.b16 %v2728
        %v2812 = vunpack.c.h.b16 %v2728
        %v2813 = vunpack.c.l.b16 %v2729
        %v2814 = vunpack.c.h.b16 %v2729
        %v2815 = vunpack.c.l.b16 %v2730
        %v2816 = vunpack.c.h.b16 %v2730
        %v2817 = vunpack.c.l.b16 %v2731
        %v2818 = vunpack.c.h.b16 %v2731
        %v2819 = vunpack.c.l.b16 %v2732
        %v2820 = vunpack.c.h.b16 %v2732
        %v2821 = vunpack.c.l.b16 %v2733
        %v2822 = vunpack.c.h.b16 %v2733
        %v2823 = vunpack.c.l.b16 %v2734
        %v2824 = vunpack.c.h.b16 %v2734
        %v2825 = vunpack.c.l.b16 %v2735
        %v2826 = vunpack.c.h.b16 %v2735
        %v2827 = vunpack.c.l.b16 %v2736
        %v2828 = vunpack.c.h.b16 %v2736
        %v2829 = vunpack.c.l.b16 %v2737
        %v2830 = vunpack.c.h.b16 %v2737
        %v2831 = vunpack.c.l.b16 %v2738
        %v2832 = vunpack.c.h.b16 %v2738
        %v2833 = vunpack.c.l.b16 %v2739
        %v2834 = vunpack.c.h.b16 %v2739
        %v2835 = vunpack.c.l.b16 %v2740
        %v2836 = vunpack.c.h.b16 %v2740
        %v2837 = vpack.c.b16 %v2777, %v2773
        %v2838 = vpack.c.b16 %v2778, %v2774
        %v2839 = vpack.c.b16 %v2779, %v2775
        %v2840 = vpack.c.b16 %v2780, %v2776
        %v2841 = vpack.c.b16 %v2785, %v2781
        %v2842 = vpack.c.b16 %v2786, %v2782
        %v2843 = vpack.c.b16 %v2787, %v2783
        %v2844 = vpack.c.b16 %v2788, %v2784
        %v2845 = vpack.c.b16 %v2793, %v2789
        %v2846 = vpack.c.b16 %v2794, %v2790
        %v2847 = vpack.c.b16 %v2795, %v2791
        %v2848 = vpack.c.b16 %v2796, %v2792
        %v2849 = vpack.c.b16 %v2801, %v2797
        %v2850 = vpack.c.b16 %v2802, %v2798
        %v2851 = vpack.c.b16 %v2803, %v2799
        %v2852 = vpack.c.b16 %v2804, %v2800
        %v2853 = vpack.c.b16 %v2809, %v2805
        %v2854 = vpack.c.b16 %v2810, %v2806
        %v2855 = vpack.c.b16 %v2811, %v2807
        %v2856 = vpack.c.b16 %v2812, %v2808
        %v2857 = vpack.c.b16 %v2817, %v2813
        %v2858 = vpack.c.b16 %v2818, %v2814
        %v2859 = vpack.c.b16 %v2819, %v2815
        %v2860 = vpack.c.b16 %v2820, %v2816
        %v2861 = vpack.c.b16 %v2825, %v2821
        %v2862 = vpack.c.b16 %v2826, %v2822
        %v2863 = vpack.c.b16 %v2827, %v2823
        %v2864 = vpack.c.b16 %v2828, %v2824
        %v2865 = vpack.c.b16 %v2833, %v2829
        %v2866 = vpack.c.b16 %v2834, %v2830
        %v2867 = vpack.c.b16 %v2835, %v2831
        %v2868 = vpack.c.b16 %v2836, %v2832
        %2901 = vmatpush.bf16.msra.mxu0 %v2865
        %2902 = vmatpush.bf16.msra.mxu0 %v2861
        %2903 = vmatpush.bf16.msra.mxu0 %v2857
        %2904 = vmatpush.bf16.msra.mxu0 %v2853
        %2905 = vmatpush.bf16.msra.mxu0 %v2849
        %2906 = vmatpush.bf16.msra.mxu0 %v2845
        %2907 = vmatpush.bf16.msra.mxu0 %v2841
        %2908 = vmatpush.bf16.msra.mxu0 %v2837
        %2909 = vmatmul.bf16.gmra.mxu0 %v2708
        %v2910 = vpop.f32.mrf.mxu0
        %v2911 = vadd.f32 0.0, %v2910
        %v2912 = vpop.f32.mrf.mxu0
        %2913 = vdwg.mxu0
        %2914 = vmatpush.bf16.msra.mxu0 %v2866
        %2915 = vmatpush.bf16.msra.mxu0 %v2862
        %2916 = vmatpush.bf16.msra.mxu0 %v2858
        %2917 = vmatpush.bf16.msra.mxu0 %v2854
        %2918 = vmatpush.bf16.msra.mxu0 %v2850
        %2919 = vmatpush.bf16.msra.mxu0 %v2846
        %2920 = vmatpush.bf16.msra.mxu0 %v2842
        %2921 = vmatpush.bf16.msra.mxu0 %v2838
        %2922 = vmatmul.bf16.gmra.mxu0 %v2708
        %v2923 = vpop.f32.mrf.mxu0
        %v2924 = vadd.f32 0.0, %v2923
        %v2925 = vpop.f32.mrf.mxu0
        %2926 = vdwg.mxu0
        %2927 = vmatpush.bf16.msra.mxu0 %v2867
        %2928 = vmatpush.bf16.msra.mxu0 %v2863
        %2929 = vmatpush.bf16.msra.mxu0 %v2859
        %2930 = vmatpush.bf16.msra.mxu0 %v2855
        %2931 = vmatpush.bf16.msra.mxu0 %v2851
        %2932 = vmatpush.bf16.msra.mxu0 %v2847
        %2933 = vmatpush.bf16.msra.mxu0 %v2843
        %2934 = vmatpush.bf16.msra.mxu0 %v2839
        %2935 = vmatmul.bf16.gmra.mxu0 %v2708
        %v2936 = vpop.f32.mrf.mxu0
        %v2937 = vadd.f32 0.0, %v2936
        %v2938 = vpop.f32.mrf.mxu0
        %2939 = vdwg.mxu0
        %2940 = vmatpush.bf16.msra.mxu0 %v2868
        %2941 = vmatpush.bf16.msra.mxu0 %v2864
        %2942 = vmatpush.bf16.msra.mxu0 %v2860
        %2943 = vmatpush.bf16.msra.mxu0 %v2856
        %2944 = vmatpush.bf16.msra.mxu0 %v2852
        %2945 = vmatpush.bf16.msra.mxu0 %v2848
        %2946 = vmatpush.bf16.msra.mxu0 %v2844
        %2947 = vmatpush.bf16.msra.mxu0 %v2840
        %2948 = vmatmul.bf16.gmra.mxu0 %v2708
        %v2949 = vpop.f32.mrf.mxu0
        %v2950 = vadd.f32 0.0, %v2949
        %v2951 = vpop.f32.mrf.mxu0
        %2952 = vdwg.mxu0
        %v2953 = vadd.f32 %v2704, %v2911
        %v2954 = vadd.f32 %v2705, %v2924
        %v2955 = vadd.f32 %v2706, %v2937
        %v2956 = vadd.f32 %v2707, %v2950
        %v2957 = vxor.u32 %v2953, 2147483648
        %v2958 = vmul.f32 %v2957, 1.442695
        %v2959 = vpow.pop %v2958
        %v2960 = vadd.f32 %v2959, 1.0
        %v2961 = vrcp.pop %v2960
        %v2962 = vmul.f32 %v2960, %v2961
        %v2963 = vsub.f32 1.0, %v2962
        %v2964 = vmul.f32 %v2961, %v2963
        %v2965 = vadd.f32 %v2961, %v2964
        %vm2966 = vweird.f32 %v2960
        %vm2967 = vweird.f32 %v2961
        %vm2968 = vmor %vm2966, %vm2967
        %v2969 = vsel %vm2968, %v2961, %v2965
        %v2970 = vand.u32 2147483647, %v2960
        %vm2971 = vcmp.eq.f32.partialorder %v2970, 8.507059e+37
        %v2972 = vand.u32 %v2960, 2147483648
        %v2973 = vor.u32 1.1754944e-38, %v2972
        %v2974 = vsel %vm2971, %v2973, %v2969
        %v2975 = vmul.f32 1.0, %v2974
        %v2976 = vxor.u32 %v2954, 2147483648
        %v2977 = vmul.f32 %v2976, 1.442695
        %v2978 = vpow.pop %v2977
        %v2979 = vadd.f32 %v2978, 1.0
        %v2980 = vrcp.pop %v2979
        %v2981 = vmul.f32 %v2979, %v2980
        %v2982 = vsub.f32 1.0, %v2981
        %v2983 = vmul.f32 %v2980, %v2982
        %v2984 = vadd.f32 %v2980, %v2983
        %vm2985 = vweird.f32 %v2979
        %vm2986 = vweird.f32 %v2980
        %vm2987 = vmor %vm2985, %vm2986
        %v2988 = vsel %vm2987, %v2980, %v2984
        %v2989 = vand.u32 2147483647, %v2979
        %vm2990 = vcmp.eq.f32.partialorder %v2989, 8.507059e+37
        %v2991 = vand.u32 %v2979, 2147483648
        %v2992 = vor.u32 1.1754944e-38, %v2991
        %v2993 = vsel %vm2990, %v2992, %v2988
        %v2994 = vmul.f32 1.0, %v2993
        %v2995 = vtanh.pop %v2955
        %v2996 = vxor.u32 %v2956, 2147483648
        %v2997 = vmul.f32 %v2996, 1.442695
        %v2998 = vpow.pop %v2997
        %v2999 = vadd.f32 %v2998, 1.0
        %v3000 = vrcp.pop %v2999
        %v3001 = vmul.f32 %v2999, %v3000
        %v3002 = vsub.f32 1.0, %v3001
        %v3003 = vmul.f32 %v3000, %v3002
        %v3004 = vadd.f32 %v3000, %v3003
        %vm3005 = vweird.f32 %v2999
        %vm3006 = vweird.f32 %v3000
        %vm3007 = vmor %vm3005, %vm3006
        %v3008 = vsel %vm3007, %v3000, %v3004
        %v3009 = vand.u32 2147483647, %v2999
        %vm3010 = vcmp.eq.f32.partialorder %v3009, 8.507059e+37
        %v3011 = vand.u32 %v2999, 2147483648
        %v3012 = vor.u32 1.1754944e-38, %v3011
        %v3013 = vsel %vm3010, %v3012, %v3008
        %v3014 = vmul.f32 1.0, %v3013
        %v3015 = vmul.f32 %v2994, %v2698
        %v3016 = vmul.f32 %v2975, %v2995
        %v3017 = vadd.f32 %v3015, %v3016
        %v3018 = vtanh.pop %v3017
        %v3019 = vmul.f32 %v3014, %v3018
        %s3020 = scalar_lea.vmem %s347, 56 [#allocation7]
        %3021 = vst [vmem:[%s3020] sm:$0xff] %v3019
        %3022 = vst [vmem:[#allocation2] sm:$0xff] %v3019
        %3023 = vst [vmem:[#allocation3] sm:$0xff] %v3017
        %p3024 = scmp.eq.s32.totalorder %s23, 1
        // Predicated region
        $region79: #{model_forward.6} parent=50 // pred_check
          %p3025 = pneg %p3024
        $region80: #{model_forward.6} parent=50 // pred_check_branch
          %3027 = sbr.rel (%p3025) target = $region82
        $region81: #{model_forward.6} parent=50 // pred_region
          %3028 = vst [vmem:[%s373] sm:$0xff] %v3019
          %3029 = vst [vmem:[%s377] sm:$0xff] %v3017
        $region82: #{model_forward.6} parent=50 // pred_fallthru
          _
        %s3030 = sand.u32 %s120, 1
        %s3031 = sand.u32 %s120, 1
        %s3032 = smul.addr %s3031, 64
        %s3033 = scalar_lea.vmem [#allocation7], %s3032
        %p3034 = scmp.lt.s32.totalorder %s22, 1
        %s3035 = scalar_select %p3034, %s22, 1
        %s3036 = smul.addr %s3035, 8
        %s3037 = scalar_lea.vmem %s5, %s3036
        %p3038 = scmp.lt.s32.totalorder %s22, 1
        %s3039 = scalar_select %p3038, %s22, 1
        %s3040 = smul.addr %s3039, 8
        %s3041 = scalar_lea.vmem %s6, %s3040
        // Predicated region
        $region83: #{model_forward.6} parent=50 // pred_check
          %p3042 = pneg %p130
        $region84: #{model_forward.6} parent=50 // pred_check_branch
          %3044 = sbr.rel (%p3042) target = $region86
        $region85: #{model_forward.6} parent=50 // pred_region
          %s3045 = smul.u32 8, %s23
          %s3046 = smul.addr %s3045, 2
          %s3047 = sadd.s32 %s22, %s3046
          %s3048 = smul.addr %s3047, 8
          %s3049 = scalar_lea.vmem %s4, %s3048
          // Predicated region
          $region87: #{model_forward.6} parent=85 // pred_check
            _
          $region88: #{model_forward.6} parent=85 // pred_check_branch
            %3051 = sbr.rel (0) target = $region90
          $region89: #{model_forward.6} parent=85 // pred_region
            // Predicated region
            $region91: #{model_forward.6} parent=89 // pred_check
              _
            $region92: #{model_forward.6} parent=89 // pred_check_branch
              %3053 = sbr.rel (0) target = $region94
            $region93: #{model_forward.6} parent=89 // pred_region
              // Predicated region
              $region106: #{model_forward.6} parent=93 // pred_check
                _
              $region107: #{model_forward.6} parent=93 // pred_check_branch
                %3083 = sbr.rel (0) target = $region109
              $region108: #{model_forward.6} parent=93 // pred_region
                loop: start=0, step=1, limit=1
                $region110: #{model_forward.6} parent=108 // loop_pre_header
                  _
                $region111: #{model_forward.6} parent=108 // loop_header
                  %s3085 = sphi 0, %s3089
                  %p3086 = scmp.ge.s32.totalorder %s3085, 1
                  %s3090 = sphi %s3033, %s3033
                  %s3091 = sphi %s3049, %s3049
                $region112: #{model_forward.6} parent=108 // loop_header_branch
                  %3088 = sbr.rel (%p3086) target = $region116
                $region113: #{model_forward.6} parent=108 // loop_body
                  %v3092 = vld [vmem:[%s3090] sm:$0xff]
                  %3093 = vst [vmem:[%s3091] sm:$0xff] %v3092
                  %v3094 = vld [vmem:[%s3090 + $0x8] sm:$0xff]
                  %3095 = vst [vmem:[%s3091 + $0x10] sm:$0xff] %v3094
                  %v3096 = vld [vmem:[%s3090 + $0x10] sm:$0xff]
                  %3097 = vst [vmem:[%s3091 + $0x20] sm:$0xff] %v3096
                  %v3098 = vld [vmem:[%s3090 + $0x18] sm:$0xff]
                  %3099 = vst [vmem:[%s3091 + $0x30] sm:$0xff] %v3098
                  %v3100 = vld [vmem:[%s3090 + $0x20] sm:$0xff]
                  %3101 = vst [vmem:[%s3091 + $0x40] sm:$0xff] %v3100
                  %v3102 = vld [vmem:[%s3090 + $0x28] sm:$0xff]
                  %3103 = vst [vmem:[%s3091 + $0x50] sm:$0xff] %v3102
                  %v3104 = vld [vmem:[%s3090 + $0x30] sm:$0xff]
                  %3105 = vst [vmem:[%s3091 + $0x60] sm:$0xff] %v3104
                  %v3106 = vld [vmem:[%s3090 + $0x38] sm:$0xff]
                  %3107 = vst [vmem:[%s3091 + $0x70] sm:$0xff] %v3106
                $region114: #{model_forward.6} parent=108 // loop_footer
                  %s3089 = sadd.s32 1, %s3085
                $region115: #{model_forward.6} parent=108 // loop_footer_branch
                  %3084 = sbr.rel target = $region111
                $region116: #{model_forward.6} parent=108 // loop_exit
                  _
              $region109: #{model_forward.6} parent=93 // pred_fallthru
                _
              // Predicated region
              $region117: #{model_forward.6} parent=93 // pred_check
                _
              $region118: #{model_forward.6} parent=93 // pred_check_branch
                %3109 = sbr.rel target = $region120
              $region119: #{model_forward.6} parent=93 // pred_region
                _
              $region120: #{model_forward.6} parent=93 // pred_fallthru
                _
            $region94: #{model_forward.6} parent=89 // pred_fallthru
              _
            // Predicated region
            $region95: #{model_forward.6} parent=89 // pred_check
              _
            $region96: #{model_forward.6} parent=89 // pred_check_branch
              %3055 = sbr.rel target = $region98
            $region97: #{model_forward.6} parent=89 // pred_region
              %s3057 = ssub.s32 256, 1
              loop: start=0, step=1, limit=1
              $region99: #{model_forward.6} parent=97 // loop_pre_header
                _
              $region100: #{model_forward.6} parent=97 // loop_header
                %s3059 = sphi 0, %s3063
                %p3060 = scmp.ge.s32.totalorder %s3059, 1
                %s3064 = sphi %s3033, %s3033
                %s3065 = sphi %s3049, %s3049
              $region101: #{model_forward.6} parent=97 // loop_header_branch
                %3062 = sbr.rel (%p3060) target = $region105
              $region102: #{model_forward.6} parent=97 // loop_body
                %v3066 = vld [vmem:[%s3064] sm:%s3057]
                %3067 = vst [vmem:[%s3065] sm:%s3057] %v3066
                %v3068 = vld [vmem:[%s3064 + $0x8] sm:%s3057]
                %3069 = vst [vmem:[%s3065 + $0x10] sm:%s3057] %v3068
                %v3070 = vld [vmem:[%s3064 + $0x10] sm:%s3057]
                %3071 = vst [vmem:[%s3065 + $0x20] sm:%s3057] %v3070
                %v3072 = vld [vmem:[%s3064 + $0x18] sm:%s3057]
                %3073 = vst [vmem:[%s3065 + $0x30] sm:%s3057] %v3072
                %v3074 = vld [vmem:[%s3064 + $0x20] sm:%s3057]
                %3075 = vst [vmem:[%s3065 + $0x40] sm:%s3057] %v3074
                %v3076 = vld [vmem:[%s3064 + $0x28] sm:%s3057]
                %3077 = vst [vmem:[%s3065 + $0x50] sm:%s3057] %v3076
                %v3078 = vld [vmem:[%s3064 + $0x30] sm:%s3057]
                %3079 = vst [vmem:[%s3065 + $0x60] sm:%s3057] %v3078
                %v3080 = vld [vmem:[%s3064 + $0x38] sm:%s3057]
                %3081 = vst [vmem:[%s3065 + $0x70] sm:%s3057] %v3080
              $region103: #{model_forward.6} parent=97 // loop_footer
                %s3063 = sadd.s32 1, %s3059
              $region104: #{model_forward.6} parent=97 // loop_footer_branch
                %3058 = sbr.rel target = $region100
              $region105: #{model_forward.6} parent=97 // loop_exit
                _
            $region98: #{model_forward.6} parent=89 // pred_fallthru
              _
          $region90: #{model_forward.6} parent=85 // pred_fallthru
            _
          %3110 = vnop
        $region86: #{model_forward.6} parent=50 // pred_fallthru
          _
        // Predicated region
        $region121: #{model_forward.6} parent=50 // pred_check
          %p3111 = pneg %p156
        $region122: #{model_forward.6} parent=50 // pred_check_branch
          %3113 = sbr.rel (%p3111) target = $region124
        $region123: #{model_forward.6} parent=50 // pred_region
          _
        $region124: #{model_forward.6} parent=50 // pred_fallthru
          _
        // Predicated region
        $region125: #{model_forward.6} parent=50 // pred_check
          %p3114 = pneg %p182
        $region126: #{model_forward.6} parent=50 // pred_check_branch
          %3116 = sbr.rel (%p3114) target = $region128
        $region127: #{model_forward.6} parent=50 // pred_region
          _
        $region128: #{model_forward.6} parent=50 // pred_fallthru
          _
      $region51: #{model_forward.6} parent=5 // pred_fallthru
        _
      %p3117 = scmp.le.s32.totalorder 2, %s13
      // Predicated region
      $region129: #{model_forward.6} parent=5 // pred_check
        %p3118 = pneg %p3117
      $region130: #{model_forward.6} parent=5 // pred_check_branch
        %3120 = sbr.rel (%p3118) target = $region132
      $region131: #{model_forward.6} parent=5 // pred_region
        %s3121 = ssub.s32 %s13, 2
        // Predicated region
        $region133: #{model_forward.6} parent=131 // pred_check
          %p3122 = pneg %p136
        $region134: #{model_forward.6} parent=131 // pred_check_branch
          %3124 = sbr.rel (%p3122) target = $region136
        $region135: #{model_forward.6} parent=131 // pred_region
          %s3125 = sand.u32 %s121, 1
          %s3126 = sand.u32 %s121, 1
          %s3127 = smul.addr %s3126, 64
          %s3128 = scalar_lea.vmem [#allocation7], %s3127
        $region136: #{model_forward.6} parent=131 // pred_fallthru
          _
        // Predicated region
        $region137: #{model_forward.6} parent=131 // pred_check
          %p3129 = pneg %p162
        $region138: #{model_forward.6} parent=131 // pred_check_branch
          %3131 = sbr.rel (%p3129) target = $region140
        $region139: #{model_forward.6} parent=131 // pred_region
          %p3132 = scmp.lt.s32.totalorder %s24, 1
          %s3133 = scalar_select %p3132, %s24, 1
          %s3134 = smul.addr %s3133, 8
          %s3135 = scalar_lea.vmem %s5, %s3134
        $region140: #{model_forward.6} parent=131 // pred_fallthru
          _
        // Predicated region
        $region141: #{model_forward.6} parent=131 // pred_check
          %p3136 = pneg %p188
        $region142: #{model_forward.6} parent=131 // pred_check_branch
          %3138 = sbr.rel (%p3136) target = $region144
        $region143: #{model_forward.6} parent=131 // pred_region
          %p3139 = scmp.lt.s32.totalorder %s24, 1
          %s3140 = scalar_select %p3139, %s24, 1
          %s3141 = smul.addr %s3140, 8
          %s3142 = scalar_lea.vmem %s6, %s3141
        $region144: #{model_forward.6} parent=131 // pred_fallthru
          _
      $region132: #{model_forward.6} parent=5 // pred_fallthru
        _
    $region6: #{model_forward.6} parent=1 // loop_footer
      %s17 = sadd.s32 1, %s13
    $region7: #{model_forward.6} parent=1 // loop_footer_branch
      %12 = sbr.rel target = $region3
    $region8: #{model_forward.6} parent=1 // loop_exit
      _
  %3143 = vsyncmov [#allocation5]
  %s3144 = vpop.sfrf %3143
  %p3145 = scmp.eq.s32.totalorder %s3144, 0
  %p3146 = pneg %p3145
  %3148 = shalt.err (%p3146)

</llo_original>
